<compile_context>
chip_gen: v7x
topology: tpu7x:2x2x1
jax: 0.10.0
libtpu: 0.0.40
codegen_flags: <defaults>
</compile_context>

<pallas_src>
import jax
import jax.numpy as jnp
from jax.experimental import pallas as pl
from jax.experimental.pallas import tpu as pltpu

# ----------------------------- config ---------------------------------------
B = 2          # batch
T = 8          # config.seq_len
C_IN = 4       # config.input_dim (number of FEN planes)
D = 32         # config.n_embd
H = 4          # n_head
DH = D // H    # head dim
N_LAYER = 2    # config.n_layer
OUT = 8        # config.output_dim
EPS = 1e-5
BT = B * T


# ----------------------------- helpers --------------------------------------
def _layernorm(x, w, b):
    mu = jnp.mean(x, axis=-1, keepdims=True)
    var = jnp.mean((x - mu) ** 2, axis=-1, keepdims=True)
    return (x - mu) * jax.lax.rsqrt(var + EPS) * w + b


# ----------------------------- fused kernel ---------------------------------
def fused_seq_model_kernel(x_ref, w_in_ref, posb_ref, vecs_ref,
                           wqkv_ref, wproj_ref, wfc_ref, bfc_ref, wfp_ref,
                           hvecs_ref, poolb_ref, whead_ref, o_ref):
    f32 = jnp.float32

    # ---- FenEncoder + position embedding ----
    # x_ref: (B*T, C_IN); posb_ref: (T, D) holds (pos + input-proj bias)
    x = jnp.dot(x_ref[...], w_in_ref[...], preferred_element_type=f32)      # (BT, D)
    x = x + jnp.concatenate([posb_ref[...]] * B, axis=0)                    # (BT, D)

    scale = 1.0 / (DH ** 0.5)

    # ---- transformer blocks (statically unrolled) ----
    # TODO(synk): Block internals assumed (pre-LN, non-causal attention, 4x GELU MLP).
    for l in range(N_LAYER):
        vec = vecs_ref[l]                                                   # (9, D)
        ln1w, ln1b = vec[0:1], vec[1:2]
        bq, bk, bv, bpr = vec[2:3], vec[3:4], vec[4:5], vec[5:6]
        ln2w, ln2b, bfp = vec[6:7], vec[7:8], vec[8:9]

        # --- multi-head self-attention ---
        xn = _layernorm(x, ln1w, ln1b)                                      # (BT, D)
        qkv = jnp.dot(xn, wqkv_ref[l], preferred_element_type=f32)          # (BT, 3D)
        q = (qkv[:, 0 * D:1 * D] + bq).reshape(B, T, D)
        k = (qkv[:, 1 * D:2 * D] + bk).reshape(B, T, D)
        v = (qkv[:, 2 * D:3 * D] + bv).reshape(B, T, D)

        heads = []
        for h in range(H):                                                  # static unroll
            sl = slice(h * DH, (h + 1) * DH)
            s = jnp.einsum('bqd,bkd->bqk', q[:, :, sl], k[:, :, sl],
                           preferred_element_type=f32) * scale              # (B, T, T)
            s = s - jnp.max(s, axis=-1, keepdims=True)
            p = jnp.exp(s)
            p = p / jnp.sum(p, axis=-1, keepdims=True)
            heads.append(jnp.einsum('bqk,bkd->bqd', p, v[:, :, sl],
                                    preferred_element_type=f32))            # (B, T, DH)
        attn = jnp.concatenate(heads, axis=-1).reshape(BT, D)               # (BT, D)
        x = x + jnp.dot(attn, wproj_ref[l], preferred_element_type=f32) + bpr

        # --- MLP ---
        xn2 = _layernorm(x, ln2w, ln2b)
        hdn = jnp.dot(xn2, wfc_ref[l], preferred_element_type=f32) + bfc_ref[l]   # (BT, 4D)
        hdn = jax.nn.gelu(hdn, approximate=True)  # TODO(synk): PyTorch nn.GELU default is erf; tanh approx used.
        x = x + jnp.dot(hdn, wfp_ref[l], preferred_element_type=f32) + bfp

    # ---- head: ln_f -> attention pooling (VPU) -> Linear -> log_softmax ----
    hvecs = hvecs_ref[...]                                                  # (3, D)
    xn = _layernorm(x, hvecs[0:1], hvecs[1:2])                              # (BT, D)
    xn3 = xn.reshape(B, T, D)
    # pooling scores on the VPU: Linear(D, 1) as elementwise mul + lane reduce
    sc = jnp.sum(xn3 * hvecs[2:3], axis=-1, keepdims=True) + poolb_ref[...]  # (B, T, 1)
    sc = sc - jnp.max(sc, axis=1, keepdims=True)
    w = jnp.exp(sc)
    w = w / jnp.sum(w, axis=1, keepdims=True)
    pooled = jnp.sum(w * xn3, axis=1)                                       # (B, D)

    logits = jnp.dot(pooled, whead_ref[...], preferred_element_type=f32)    # (B, OUT)
    m = jnp.max(logits, axis=-1, keepdims=True)
    lse = jnp.log(jnp.sum(jnp.exp(logits - m), axis=-1, keepdims=True)) + m
    o_ref[...] = logits - lse                                               # single (B, OUT) store


# ----------------------------- wrapper ---------------------------------------
_VMEM_SPEC = pl.BlockSpec(memory_space=pltpu.MemorySpace.VMEM)


@jax.jit
def seq_model_forward(x, p):
    x2 = x.reshape(BT, C_IN)       # layout plumbing only: merge batch and time rows
    return pl.pallas_call(
        fused_seq_model_kernel,
        out_shape=jax.ShapeDtypeStruct((B, OUT), jnp.float32),
        in_specs=[_VMEM_SPEC] * 12,
        out_specs=_VMEM_SPEC,
    )(x2, p["w_in"], p["posb"], p["vecs"], p["wqkv"], p["wproj"],
      p["wfc"], p["bfc"], p["wfp"], p["hvecs"], p["pool_b"], p["w_head"])


# ----------------------------- parameter packing ----------------------------
def pack_params(p):
    """Pack the natural (PyTorch-like) params into the fused kernel's inputs."""
    vecs, wqkv, wproj, wfc, bfc, wfp = [], [], [], [], [], []
    for layer in p["blocks"]:
        (ln1w, ln1b, w_attn, b_attn, w_pr, b_pr,
         ln2w, ln2b, w_fc, b_fc, w_fp, b_fp) = layer
        bq, bk, bv = b_attn[0, :D], b_attn[0, D:2 * D], b_attn[0, 2 * D:]
        vecs.append(jnp.stack([ln1w[0], ln1b[0], bq, bk, bv, b_pr[0],
                               ln2w[0], ln2b[0], b_fp[0]], axis=0))         # (9, D)
        wqkv.append(w_attn)
        wproj.append(w_pr)
        wfc.append(w_fc)
        bfc.append(b_fc)
        wfp.append(w_fp)
    return {
        "w_in": p["w_in"],                                   # (C_IN, D)
        "posb": p["pos"][0] + p["b_in"],                     # (T, D): pos + encoder bias
        "vecs": jnp.stack(vecs),                             # (L, 9, D)
        "wqkv": jnp.stack(wqkv),                             # (L, D, 3D)
        "wproj": jnp.stack(wproj),                           # (L, D, D)
        "wfc": jnp.stack(wfc),                               # (L, D, 4D)
        "bfc": jnp.stack(bfc),                               # (L, 1, 4D)
        "wfp": jnp.stack(wfp),                               # (L, 4D, D)
        "hvecs": jnp.concatenate([p["lnf_w"], p["lnf_b"], p["pool_w"].T], 0),  # (3, D)
        "pool_b": p["pool_b"],                               # (1, 1)
        "w_head": p["w_head"],                               # (D, OUT)
    }


# ----------------------------- parameter init -------------------------------
def init_params(key):
    def normal(k, shape, std=0.02):
        return (std * jax.random.normal(k, shape)).astype(jnp.float32)

    keys = jax.random.split(key, 4 + 4 * N_LAYER)
    ki = iter(keys)

    params = {
        "w_in": normal(next(ki), (C_IN, D)),
        "b_in": jnp.zeros((1, D), jnp.float32),
        "pos": normal(next(ki), (1, T, D)),
        "lnf_w": jnp.ones((1, D), jnp.float32),
        "lnf_b": jnp.zeros((1, D), jnp.float32),
        "pool_w": normal(next(ki), (D, 1)),
        "pool_b": jnp.zeros((1, 1), jnp.float32),
        "w_head": normal(next(ki), (D, OUT)),
        "blocks": [],
    }
    for _ in range(N_LAYER):
        layer = (
            jnp.ones((1, D), jnp.float32),            # ln1 w
            jnp.zeros((1, D), jnp.float32),           # ln1 b
            normal(next(ki), (D, 3 * D)),             # w_attn (qkv)
            jnp.zeros((1, 3 * D), jnp.float32),       # b_attn
            normal(next(ki), (D, D)),                 # w_proj
            jnp.zeros((1, D), jnp.float32),           # b_proj
            jnp.ones((1, D), jnp.float32),            # ln2 w
            jnp.zeros((1, D), jnp.float32),           # ln2 b
            normal(next(ki), (D, 4 * D)),             # w_fc
            jnp.zeros((1, 4 * D), jnp.float32),       # b_fc
            normal(next(ki), (4 * D, D)),             # w_fc_proj
            jnp.zeros((1, D), jnp.float32),           # b_fc_proj
        )
        params["blocks"].append(layer)
    return params


# ----------------------------- main ------------------------------------------
if __name__ == "__main__":
    root = jax.random.PRNGKey(0)
    kx, kp = jax.random.split(root)
    x = jax.random.normal(kx, (B, T, C_IN), dtype=jnp.float32)
    params = init_params(kp)
    packed = jax.tree.map(lambda a: a, pack_params(params))   # pack once, outside jit

    out = seq_model_forward(x, packed)
    jax.block_until_ready(out)

    assert out.shape == (B, OUT), out.shape
    # rows of log_softmax should (approximately) exp-sum to 1
    assert jnp.allclose(jnp.sum(jnp.exp(out), axis=-1), 1.0, atol=1e-4)
    print("KERNEL_OK")
</pallas_src>

<mosaic_0001>
module attributes {stable_mosaic.version = 11 : i64} {
  func.func @fused_seq_model_kernel(%arg0: memref<16x4xf32, #tpu.memory_space<vmem>>, %arg1: memref<4x32xf32, #tpu.memory_space<vmem>>, %arg2: memref<8x32xf32, #tpu.memory_space<vmem>>, %arg3: memref<2x9x32xf32, #tpu.memory_space<vmem>>, %arg4: memref<2x32x96xf32, #tpu.memory_space<vmem>>, %arg5: memref<2x32x32xf32, #tpu.memory_space<vmem>>, %arg6: memref<2x32x128xf32, #tpu.memory_space<vmem>>, %arg7: memref<2x1x128xf32, #tpu.memory_space<vmem>>, %arg8: memref<2x128x32xf32, #tpu.memory_space<vmem>>, %arg9: memref<3x32xf32, #tpu.memory_space<vmem>>, %arg10: memref<1x1xf32, #tpu.memory_space<vmem>>, %arg11: memref<32x8xf32, #tpu.memory_space<vmem>>, %arg12: memref<2x8xf32, #tpu.memory_space<vmem>>) attributes {dimension_semantics = [], scalar_prefetch = 0 : i64, scratch_operands = 0 : i64, tpu.core_type = #tpu.core_type<tc>} {
    %c0 = arith.constant 0 : index
    %c0_0 = arith.constant 0 : index
    %0 = vector.load %arg0[%c0, %c0_0] : memref<16x4xf32, #tpu.memory_space<vmem>>, vector<16x4xf32>
    %c0_1 = arith.constant 0 : index
    %c0_2 = arith.constant 0 : index
    %1 = vector.load %arg1[%c0_1, %c0_2] : memref<4x32xf32, #tpu.memory_space<vmem>>, vector<4x32xf32>
    %cst = arith.constant dense<0.000000e+00> : vector<16x32xf32>
    %2 = tpu.matmul %0, %1, %cst {dimension_numbers = #tpu.dot_dimension_numbers<[1], [0], [0], [1], [0, 0, 1, 1], [], []>} : vector<16x4xf32>, vector<4x32xf32>, vector<16x32xf32> -> vector<16x32xf32>
    %c0_3 = arith.constant 0 : index
    %c0_4 = arith.constant 0 : index
    %3 = vector.load %arg2[%c0_3, %c0_4] : memref<8x32xf32, #tpu.memory_space<vmem>>, vector<8x32xf32>
    %4 = tpu.concatenate %3, %3 in 0 : vector<8x32xf32>, vector<8x32xf32> -> vector<16x32xf32>
    %5 = arith.addf %2, %4 : vector<16x32xf32>
    %c0_5 = arith.constant 0 : index
    %c0_6 = arith.constant 0 : index
    %c0_7 = arith.constant 0 : index
    %6 = vector.load %arg3[%c0_5, %c0_6, %c0_7] : memref<2x9x32xf32, #tpu.memory_space<vmem>>, vector<1x9x32xf32>
    %7 = vector.shape_cast %6 : vector<1x9x32xf32> to vector<9x32xf32>
    %8 = vector.extract_strided_slice %7 {offsets = [0, 0], sizes = [1, 32], strides = [1, 1]} : vector<9x32xf32> to vector<1x32xf32>
    %9 = vector.extract_strided_slice %7 {offsets = [1, 0], sizes = [1, 32], strides = [1, 1]} : vector<9x32xf32> to vector<1x32xf32>
    %10 = vector.extract_strided_slice %7 {offsets = [2, 0], sizes = [1, 32], strides = [1, 1]} : vector<9x32xf32> to vector<1x32xf32>
    %11 = vector.extract_strided_slice %7 {offsets = [3, 0], sizes = [1, 32], strides = [1, 1]} : vector<9x32xf32> to vector<1x32xf32>
    %12 = vector.extract_strided_slice %7 {offsets = [4, 0], sizes = [1, 32], strides = [1, 1]} : vector<9x32xf32> to vector<1x32xf32>
    %13 = vector.extract_strided_slice %7 {offsets = [5, 0], sizes = [1, 32], strides = [1, 1]} : vector<9x32xf32> to vector<1x32xf32>
    %14 = vector.extract_strided_slice %7 {offsets = [6, 0], sizes = [1, 32], strides = [1, 1]} : vector<9x32xf32> to vector<1x32xf32>
    %15 = vector.extract_strided_slice %7 {offsets = [7, 0], sizes = [1, 32], strides = [1, 1]} : vector<9x32xf32> to vector<1x32xf32>
    %16 = vector.extract_strided_slice %7 {offsets = [8, 0], sizes = [1, 32], strides = [1, 1]} : vector<9x32xf32> to vector<1x32xf32>
    %cst_8 = arith.constant dense<0.000000e+00> : vector<16xf32>
    %17 = vector.multi_reduction <add>, %5, %cst_8 [1] : vector<16x32xf32> to vector<16xf32>
    %18 = vector.shape_cast %17 : vector<16xf32> to vector<16x1xf32>
    %cst_9 = arith.constant 3.200000e+01 : f32
    %19 = vector.broadcast %cst_9 : f32 to vector<16x1xf32>
    %20 = arith.divf %18, %19 : vector<16x1xf32>
    %21 = vector.broadcast %20 : vector<16x1xf32> to vector<16x32xf32>
    %22 = arith.subf %5, %21 : vector<16x32xf32>
    %23 = arith.mulf %22, %22 : vector<16x32xf32>
    %cst_10 = arith.constant dense<0.000000e+00> : vector<16xf32>
    %24 = vector.multi_reduction <add>, %23, %cst_10 [1] : vector<16x32xf32> to vector<16xf32>
    %25 = vector.shape_cast %24 : vector<16xf32> to vector<16x1xf32>
    %cst_11 = arith.constant 3.200000e+01 : f32
    %26 = vector.broadcast %cst_11 : f32 to vector<16x1xf32>
    %27 = arith.divf %25, %26 : vector<16x1xf32>
    %28 = vector.broadcast %20 : vector<16x1xf32> to vector<16x32xf32>
    %29 = arith.subf %5, %28 : vector<16x32xf32>
    %cst_12 = arith.constant 9.99999974E-6 : f32
    %30 = vector.broadcast %cst_12 : f32 to vector<16x1xf32>
    %31 = arith.addf %27, %30 : vector<16x1xf32>
    %32 = math.rsqrt %31 : vector<16x1xf32>
    %33 = vector.broadcast %32 : vector<16x1xf32> to vector<16x32xf32>
    %34 = arith.mulf %29, %33 : vector<16x32xf32>
    %35 = vector.broadcast %8 : vector<1x32xf32> to vector<16x32xf32>
    %36 = arith.mulf %34, %35 : vector<16x32xf32>
    %37 = vector.broadcast %9 : vector<1x32xf32> to vector<16x32xf32>
    %38 = arith.addf %36, %37 : vector<16x32xf32>
    %c0_13 = arith.constant 0 : index
    %c0_14 = arith.constant 0 : index
    %c0_15 = arith.constant 0 : index
    %39 = vector.load %arg4[%c0_13, %c0_14, %c0_15] : memref<2x32x96xf32, #tpu.memory_space<vmem>>, vector<1x32x96xf32>
    %40 = vector.shape_cast %39 : vector<1x32x96xf32> to vector<32x96xf32>
    %cst_16 = arith.constant dense<0.000000e+00> : vector<16x96xf32>
    %41 = tpu.matmul %38, %40, %cst_16 {dimension_numbers = #tpu.dot_dimension_numbers<[1], [0], [0], [1], [0, 0, 1, 1], [], []>} : vector<16x32xf32>, vector<32x96xf32>, vector<16x96xf32> -> vector<16x96xf32>
    %42 = vector.extract_strided_slice %41 {offsets = [0, 0], sizes = [16, 32], strides = [1, 1]} : vector<16x96xf32> to vector<16x32xf32>
    %43 = vector.broadcast %10 : vector<1x32xf32> to vector<16x32xf32>
    %44 = arith.addf %42, %43 : vector<16x32xf32>
    %45 = vector.shape_cast %44 : vector<16x32xf32> to vector<2x8x32xf32>
    %46 = vector.extract_strided_slice %41 {offsets = [0, 32], sizes = [16, 32], strides = [1, 1]} : vector<16x96xf32> to vector<16x32xf32>
    %47 = vector.broadcast %11 : vector<1x32xf32> to vector<16x32xf32>
    %48 = arith.addf %46, %47 : vector<16x32xf32>
    %49 = vector.shape_cast %48 : vector<16x32xf32> to vector<2x8x32xf32>
    %50 = vector.extract_strided_slice %41 {offsets = [0, 64], sizes = [16, 32], strides = [1, 1]} : vector<16x96xf32> to vector<16x32xf32>
    %51 = vector.broadcast %12 : vector<1x32xf32> to vector<16x32xf32>
    %52 = arith.addf %50, %51 : vector<16x32xf32>
    %53 = vector.shape_cast %52 : vector<16x32xf32> to vector<2x8x32xf32>
    %54 = vector.extract_strided_slice %45 {offsets = [0, 0, 0], sizes = [2, 8, 8], strides = [1, 1, 1]} : vector<2x8x32xf32> to vector<2x8x8xf32>
    %55 = vector.extract_strided_slice %49 {offsets = [0, 0, 0], sizes = [2, 8, 8], strides = [1, 1, 1]} : vector<2x8x32xf32> to vector<2x8x8xf32>
    "tpu.trace_start"() <{level = 10 : i32, message = "bqd,bkd->bqk"}> : () -> ()
    %cst_17 = arith.constant dense<0.000000e+00> : vector<2x8x8xf32>
    %56 = tpu.matmul %54, %55, %cst_17 {dimension_numbers = #tpu.dot_dimension_numbers<[2], [2], [1], [1], [0, 0, 0, 1, 1, 1], [0], [0]>} : vector<2x8x8xf32>, vector<2x8x8xf32>, vector<2x8x8xf32> -> vector<2x8x8xf32>
    "tpu.trace_stop"() : () -> ()
    %cst_18 = arith.constant 0.353553385 : f32
    %57 = vector.broadcast %cst_18 : f32 to vector<2x8x8xf32>
    %58 = arith.mulf %56, %57 : vector<2x8x8xf32>
    %cst_19 = arith.constant dense<0xFF800000> : vector<2x8xf32>
    %59 = vector.multi_reduction <maximumf>, %58, %cst_19 [2] : vector<2x8x8xf32> to vector<2x8xf32>
    %60 = vector.shape_cast %59 : vector<2x8xf32> to vector<2x8x1xf32>
    %61 = vector.broadcast %60 : vector<2x8x1xf32> to vector<2x8x8xf32>
    %62 = arith.subf %58, %61 : vector<2x8x8xf32>
    %63 = math.exp %62 : vector<2x8x8xf32>
    %cst_20 = arith.constant dense<0.000000e+00> : vector<2x8xf32>
    %64 = vector.multi_reduction <add>, %63, %cst_20 [2] : vector<2x8x8xf32> to vector<2x8xf32>
    %65 = vector.shape_cast %64 : vector<2x8xf32> to vector<2x8x1xf32>
    %66 = vector.broadcast %65 : vector<2x8x1xf32> to vector<2x8x8xf32>
    %67 = arith.divf %63, %66 : vector<2x8x8xf32>
    %68 = vector.extract_strided_slice %53 {offsets = [0, 0, 0], sizes = [2, 8, 8], strides = [1, 1, 1]} : vector<2x8x32xf32> to vector<2x8x8xf32>
    "tpu.trace_start"() <{level = 10 : i32, message = "bqk,bkd->bqd"}> : () -> ()
    %cst_21 = arith.constant dense<0.000000e+00> : vector<2x8x8xf32>
    %69 = tpu.matmul %67, %68, %cst_21 {dimension_numbers = #tpu.dot_dimension_numbers<[2], [1], [1], [2], [0, 0, 0, 1, 1, 2], [0], [0]>} : vector<2x8x8xf32>, vector<2x8x8xf32>, vector<2x8x8xf32> -> vector<2x8x8xf32>
    "tpu.trace_stop"() : () -> ()
    %70 = vector.extract_strided_slice %45 {offsets = [0, 0, 8], sizes = [2, 8, 8], strides = [1, 1, 1]} : vector<2x8x32xf32> to vector<2x8x8xf32>
    %71 = vector.extract_strided_slice %49 {offsets = [0, 0, 8], sizes = [2, 8, 8], strides = [1, 1, 1]} : vector<2x8x32xf32> to vector<2x8x8xf32>
    "tpu.trace_start"() <{level = 10 : i32, message = "bqd,bkd->bqk"}> : () -> ()
    %cst_22 = arith.constant dense<0.000000e+00> : vector<2x8x8xf32>
    %72 = tpu.matmul %70, %71, %cst_22 {dimension_numbers = #tpu.dot_dimension_numbers<[2], [2], [1], [1], [0, 0, 0, 1, 1, 1], [0], [0]>} : vector<2x8x8xf32>, vector<2x8x8xf32>, vector<2x8x8xf32> -> vector<2x8x8xf32>
    "tpu.trace_stop"() : () -> ()
    %cst_23 = arith.constant 0.353553385 : f32
    %73 = vector.broadcast %cst_23 : f32 to vector<2x8x8xf32>
    %74 = arith.mulf %72, %73 : vector<2x8x8xf32>
    %cst_24 = arith.constant dense<0xFF800000> : vector<2x8xf32>
    %75 = vector.multi_reduction <maximumf>, %74, %cst_24 [2] : vector<2x8x8xf32> to vector<2x8xf32>
    %76 = vector.shape_cast %75 : vector<2x8xf32> to vector<2x8x1xf32>
    %77 = vector.broadcast %76 : vector<2x8x1xf32> to vector<2x8x8xf32>
    %78 = arith.subf %74, %77 : vector<2x8x8xf32>
    %79 = math.exp %78 : vector<2x8x8xf32>
    %cst_25 = arith.constant dense<0.000000e+00> : vector<2x8xf32>
    %80 = vector.multi_reduction <add>, %79, %cst_25 [2] : vector<2x8x8xf32> to vector<2x8xf32>
    %81 = vector.shape_cast %80 : vector<2x8xf32> to vector<2x8x1xf32>
    %82 = vector.broadcast %81 : vector<2x8x1xf32> to vector<2x8x8xf32>
    %83 = arith.divf %79, %82 : vector<2x8x8xf32>
    %84 = vector.extract_strided_slice %53 {offsets = [0, 0, 8], sizes = [2, 8, 8], strides = [1, 1, 1]} : vector<2x8x32xf32> to vector<2x8x8xf32>
    "tpu.trace_start"() <{level = 10 : i32, message = "bqk,bkd->bqd"}> : () -> ()
    %cst_26 = arith.constant dense<0.000000e+00> : vector<2x8x8xf32>
    %85 = tpu.matmul %83, %84, %cst_26 {dimension_numbers = #tpu.dot_dimension_numbers<[2], [1], [1], [2], [0, 0, 0, 1, 1, 2], [0], [0]>} : vector<2x8x8xf32>, vector<2x8x8xf32>, vector<2x8x8xf32> -> vector<2x8x8xf32>
    "tpu.trace_stop"() : () -> ()
    %86 = vector.extract_strided_slice %45 {offsets = [0, 0, 16], sizes = [2, 8, 8], strides = [1, 1, 1]} : vector<2x8x32xf32> to vector<2x8x8xf32>
    %87 = vector.extract_strided_slice %49 {offsets = [0, 0, 16], sizes = [2, 8, 8], strides = [1, 1, 1]} : vector<2x8x32xf32> to vector<2x8x8xf32>
    "tpu.trace_start"() <{level = 10 : i32, message = "bqd,bkd->bqk"}> : () -> ()
    %cst_27 = arith.constant dense<0.000000e+00> : vector<2x8x8xf32>
    %88 = tpu.matmul %86, %87, %cst_27 {dimension_numbers = #tpu.dot_dimension_numbers<[2], [2], [1], [1], [0, 0, 0, 1, 1, 1], [0], [0]>} : vector<2x8x8xf32>, vector<2x8x8xf32>, vector<2x8x8xf32> -> vector<2x8x8xf32>
    "tpu.trace_stop"() : () -> ()
    %cst_28 = arith.constant 0.353553385 : f32
    %89 = vector.broadcast %cst_28 : f32 to vector<2x8x8xf32>
    %90 = arith.mulf %88, %89 : vector<2x8x8xf32>
    %cst_29 = arith.constant dense<0xFF800000> : vector<2x8xf32>
    %91 = vector.multi_reduction <maximumf>, %90, %cst_29 [2] : vector<2x8x8xf32> to vector<2x8xf32>
    %92 = vector.shape_cast %91 : vector<2x8xf32> to vector<2x8x1xf32>
    %93 = vector.broadcast %92 : vector<2x8x1xf32> to vector<2x8x8xf32>
    %94 = arith.subf %90, %93 : vector<2x8x8xf32>
    %95 = math.exp %94 : vector<2x8x8xf32>
    %cst_30 = arith.constant dense<0.000000e+00> : vector<2x8xf32>
    %96 = vector.multi_reduction <add>, %95, %cst_30 [2] : vector<2x8x8xf32> to vector<2x8xf32>
    %97 = vector.shape_cast %96 : vector<2x8xf32> to vector<2x8x1xf32>
    %98 = vector.broadcast %97 : vector<2x8x1xf32> to vector<2x8x8xf32>
    %99 = arith.divf %95, %98 : vector<2x8x8xf32>
    %100 = vector.extract_strided_slice %53 {offsets = [0, 0, 16], sizes = [2, 8, 8], strides = [1, 1, 1]} : vector<2x8x32xf32> to vector<2x8x8xf32>
    "tpu.trace_start"() <{level = 10 : i32, message = "bqk,bkd->bqd"}> : () -> ()
    %cst_31 = arith.constant dense<0.000000e+00> : vector<2x8x8xf32>
    %101 = tpu.matmul %99, %100, %cst_31 {dimension_numbers = #tpu.dot_dimension_numbers<[2], [1], [1], [2], [0, 0, 0, 1, 1, 2], [0], [0]>} : vector<2x8x8xf32>, vector<2x8x8xf32>, vector<2x8x8xf32> -> vector<2x8x8xf32>
    "tpu.trace_stop"() : () -> ()
    %102 = vector.extract_strided_slice %45 {offsets = [0, 0, 24], sizes = [2, 8, 8], strides = [1, 1, 1]} : vector<2x8x32xf32> to vector<2x8x8xf32>
    %103 = vector.extract_strided_slice %49 {offsets = [0, 0, 24], sizes = [2, 8, 8], strides = [1, 1, 1]} : vector<2x8x32xf32> to vector<2x8x8xf32>
    "tpu.trace_start"() <{level = 10 : i32, message = "bqd,bkd->bqk"}> : () -> ()
    %cst_32 = arith.constant dense<0.000000e+00> : vector<2x8x8xf32>
    %104 = tpu.matmul %102, %103, %cst_32 {dimension_numbers = #tpu.dot_dimension_numbers<[2], [2], [1], [1], [0, 0, 0, 1, 1, 1], [0], [0]>} : vector<2x8x8xf32>, vector<2x8x8xf32>, vector<2x8x8xf32> -> vector<2x8x8xf32>
    "tpu.trace_stop"() : () -> ()
    %cst_33 = arith.constant 0.353553385 : f32
    %105 = vector.broadcast %cst_33 : f32 to vector<2x8x8xf32>
    %106 = arith.mulf %104, %105 : vector<2x8x8xf32>
    %cst_34 = arith.constant dense<0xFF800000> : vector<2x8xf32>
    %107 = vector.multi_reduction <maximumf>, %106, %cst_34 [2] : vector<2x8x8xf32> to vector<2x8xf32>
    %108 = vector.shape_cast %107 : vector<2x8xf32> to vector<2x8x1xf32>
    %109 = vector.broadcast %108 : vector<2x8x1xf32> to vector<2x8x8xf32>
    %110 = arith.subf %106, %109 : vector<2x8x8xf32>
    %111 = math.exp %110 : vector<2x8x8xf32>
    %cst_35 = arith.constant dense<0.000000e+00> : vector<2x8xf32>
    %112 = vector.multi_reduction <add>, %111, %cst_35 [2] : vector<2x8x8xf32> to vector<2x8xf32>
    %113 = vector.shape_cast %112 : vector<2x8xf32> to vector<2x8x1xf32>
    %114 = vector.broadcast %113 : vector<2x8x1xf32> to vector<2x8x8xf32>
    %115 = arith.divf %111, %114 : vector<2x8x8xf32>
    %116 = vector.extract_strided_slice %53 {offsets = [0, 0, 24], sizes = [2, 8, 8], strides = [1, 1, 1]} : vector<2x8x32xf32> to vector<2x8x8xf32>
    "tpu.trace_start"() <{level = 10 : i32, message = "bqk,bkd->bqd"}> : () -> ()
    %cst_36 = arith.constant dense<0.000000e+00> : vector<2x8x8xf32>
    %117 = tpu.matmul %115, %116, %cst_36 {dimension_numbers = #tpu.dot_dimension_numbers<[2], [1], [1], [2], [0, 0, 0, 1, 1, 2], [0], [0]>} : vector<2x8x8xf32>, vector<2x8x8xf32>, vector<2x8x8xf32> -> vector<2x8x8xf32>
    "tpu.trace_stop"() : () -> ()
    %118 = tpu.concatenate %69, %85, %101, %117 in 2 : vector<2x8x8xf32>, vector<2x8x8xf32>, vector<2x8x8xf32>, vector<2x8x8xf32> -> vector<2x8x32xf32>
    %119 = vector.shape_cast %118 : vector<2x8x32xf32> to vector<16x32xf32>
    %c0_37 = arith.constant 0 : index
    %c0_38 = arith.constant 0 : index
    %c0_39 = arith.constant 0 : index
    %120 = vector.load %arg5[%c0_37, %c0_38, %c0_39] : memref<2x32x32xf32, #tpu.memory_space<vmem>>, vector<1x32x32xf32>
    %121 = vector.shape_cast %120 : vector<1x32x32xf32> to vector<32x32xf32>
    %cst_40 = arith.constant dense<0.000000e+00> : vector<16x32xf32>
    %122 = tpu.matmul %119, %121, %cst_40 {dimension_numbers = #tpu.dot_dimension_numbers<[1], [0], [0], [1], [0, 0, 1, 1], [], []>} : vector<16x32xf32>, vector<32x32xf32>, vector<16x32xf32> -> vector<16x32xf32>
    %123 = arith.addf %5, %122 : vector<16x32xf32>
    %124 = vector.broadcast %13 : vector<1x32xf32> to vector<16x32xf32>
    %125 = arith.addf %123, %124 : vector<16x32xf32>
    %cst_41 = arith.constant dense<0.000000e+00> : vector<16xf32>
    %126 = vector.multi_reduction <add>, %125, %cst_41 [1] : vector<16x32xf32> to vector<16xf32>
    %127 = vector.shape_cast %126 : vector<16xf32> to vector<16x1xf32>
    %cst_42 = arith.constant 3.200000e+01 : f32
    %128 = vector.broadcast %cst_42 : f32 to vector<16x1xf32>
    %129 = arith.divf %127, %128 : vector<16x1xf32>
    %130 = vector.broadcast %129 : vector<16x1xf32> to vector<16x32xf32>
    %131 = arith.subf %125, %130 : vector<16x32xf32>
    %132 = arith.mulf %131, %131 : vector<16x32xf32>
    %cst_43 = arith.constant dense<0.000000e+00> : vector<16xf32>
    %133 = vector.multi_reduction <add>, %132, %cst_43 [1] : vector<16x32xf32> to vector<16xf32>
    %134 = vector.shape_cast %133 : vector<16xf32> to vector<16x1xf32>
    %cst_44 = arith.constant 3.200000e+01 : f32
    %135 = vector.broadcast %cst_44 : f32 to vector<16x1xf32>
    %136 = arith.divf %134, %135 : vector<16x1xf32>
    %137 = vector.broadcast %129 : vector<16x1xf32> to vector<16x32xf32>
    %138 = arith.subf %125, %137 : vector<16x32xf32>
    %cst_45 = arith.constant 9.99999974E-6 : f32
    %139 = vector.broadcast %cst_45 : f32 to vector<16x1xf32>
    %140 = arith.addf %136, %139 : vector<16x1xf32>
    %141 = math.rsqrt %140 : vector<16x1xf32>
    %142 = vector.broadcast %141 : vector<16x1xf32> to vector<16x32xf32>
    %143 = arith.mulf %138, %142 : vector<16x32xf32>
    %144 = vector.broadcast %14 : vector<1x32xf32> to vector<16x32xf32>
    %145 = arith.mulf %143, %144 : vector<16x32xf32>
    %146 = vector.broadcast %15 : vector<1x32xf32> to vector<16x32xf32>
    %147 = arith.addf %145, %146 : vector<16x32xf32>
    %c0_46 = arith.constant 0 : index
    %c0_47 = arith.constant 0 : index
    %c0_48 = arith.constant 0 : index
    %148 = vector.load %arg6[%c0_46, %c0_47, %c0_48] : memref<2x32x128xf32, #tpu.memory_space<vmem>>, vector<1x32x128xf32>
    %149 = vector.shape_cast %148 : vector<1x32x128xf32> to vector<32x128xf32>
    %cst_49 = arith.constant dense<0.000000e+00> : vector<16x128xf32>
    %150 = tpu.matmul %147, %149, %cst_49 {dimension_numbers = #tpu.dot_dimension_numbers<[1], [0], [0], [1], [0, 0, 1, 1], [], []>} : vector<16x32xf32>, vector<32x128xf32>, vector<16x128xf32> -> vector<16x128xf32>
    %c0_50 = arith.constant 0 : index
    %c0_51 = arith.constant 0 : index
    %c0_52 = arith.constant 0 : index
    %151 = vector.load %arg7[%c0_50, %c0_51, %c0_52] : memref<2x1x128xf32, #tpu.memory_space<vmem>>, vector<1x1x128xf32>
    %152 = vector.shape_cast %151 : vector<1x1x128xf32> to vector<1x128xf32>
    %153 = vector.broadcast %152 : vector<1x128xf32> to vector<16x128xf32>
    %154 = arith.addf %150, %153 : vector<16x128xf32>
    %155 = arith.mulf %154, %154 : vector<16x128xf32>
    %156 = arith.mulf %154, %155 : vector<16x128xf32>
    %cst_53 = arith.constant 4.471500e-02 : f32
    %157 = vector.broadcast %cst_53 : f32 to vector<16x128xf32>
    %158 = arith.mulf %157, %156 : vector<16x128xf32>
    %159 = arith.addf %154, %158 : vector<16x128xf32>
    %cst_54 = arith.constant 0.797884583 : f32
    %160 = vector.broadcast %cst_54 : f32 to vector<16x128xf32>
    %161 = arith.mulf %160, %159 : vector<16x128xf32>
    %162 = math.tanh %161 : vector<16x128xf32>
    %cst_55 = arith.constant 1.000000e+00 : f32
    %163 = vector.broadcast %cst_55 : f32 to vector<16x128xf32>
    %164 = arith.addf %163, %162 : vector<16x128xf32>
    %cst_56 = arith.constant 5.000000e-01 : f32
    %165 = vector.broadcast %cst_56 : f32 to vector<16x128xf32>
    %166 = arith.mulf %165, %164 : vector<16x128xf32>
    %167 = arith.mulf %154, %166 : vector<16x128xf32>
    %c0_57 = arith.constant 0 : index
    %c0_58 = arith.constant 0 : index
    %c0_59 = arith.constant 0 : index
    %168 = vector.load %arg8[%c0_57, %c0_58, %c0_59] : memref<2x128x32xf32, #tpu.memory_space<vmem>>, vector<1x128x32xf32>
    %169 = vector.shape_cast %168 : vector<1x128x32xf32> to vector<128x32xf32>
    %cst_60 = arith.constant dense<0.000000e+00> : vector<16x32xf32>
    %170 = tpu.matmul %167, %169, %cst_60 {dimension_numbers = #tpu.dot_dimension_numbers<[1], [0], [0], [1], [0, 0, 1, 1], [], []>} : vector<16x128xf32>, vector<128x32xf32>, vector<16x32xf32> -> vector<16x32xf32>
    %171 = arith.addf %125, %170 : vector<16x32xf32>
    %172 = vector.broadcast %16 : vector<1x32xf32> to vector<16x32xf32>
    %173 = arith.addf %171, %172 : vector<16x32xf32>
    %c1 = arith.constant 1 : index
    %c0_61 = arith.constant 0 : index
    %c0_62 = arith.constant 0 : index
    %174 = vector.load %arg3[%c1, %c0_61, %c0_62] : memref<2x9x32xf32, #tpu.memory_space<vmem>>, vector<1x9x32xf32>
    %175 = vector.shape_cast %174 : vector<1x9x32xf32> to vector<9x32xf32>
    %176 = vector.extract_strided_slice %175 {offsets = [0, 0], sizes = [1, 32], strides = [1, 1]} : vector<9x32xf32> to vector<1x32xf32>
    %177 = vector.extract_strided_slice %175 {offsets = [1, 0], sizes = [1, 32], strides = [1, 1]} : vector<9x32xf32> to vector<1x32xf32>
    %178 = vector.extract_strided_slice %175 {offsets = [2, 0], sizes = [1, 32], strides = [1, 1]} : vector<9x32xf32> to vector<1x32xf32>
    %179 = vector.extract_strided_slice %175 {offsets = [3, 0], sizes = [1, 32], strides = [1, 1]} : vector<9x32xf32> to vector<1x32xf32>
    %180 = vector.extract_strided_slice %175 {offsets = [4, 0], sizes = [1, 32], strides = [1, 1]} : vector<9x32xf32> to vector<1x32xf32>
    %181 = vector.extract_strided_slice %175 {offsets = [5, 0], sizes = [1, 32], strides = [1, 1]} : vector<9x32xf32> to vector<1x32xf32>
    %182 = vector.extract_strided_slice %175 {offsets = [6, 0], sizes = [1, 32], strides = [1, 1]} : vector<9x32xf32> to vector<1x32xf32>
    %183 = vector.extract_strided_slice %175 {offsets = [7, 0], sizes = [1, 32], strides = [1, 1]} : vector<9x32xf32> to vector<1x32xf32>
    %184 = vector.extract_strided_slice %175 {offsets = [8, 0], sizes = [1, 32], strides = [1, 1]} : vector<9x32xf32> to vector<1x32xf32>
    %cst_63 = arith.constant dense<0.000000e+00> : vector<16xf32>
    %185 = vector.multi_reduction <add>, %173, %cst_63 [1] : vector<16x32xf32> to vector<16xf32>
    %186 = vector.shape_cast %185 : vector<16xf32> to vector<16x1xf32>
    %cst_64 = arith.constant 3.200000e+01 : f32
    %187 = vector.broadcast %cst_64 : f32 to vector<16x1xf32>
    %188 = arith.divf %186, %187 : vector<16x1xf32>
    %189 = vector.broadcast %188 : vector<16x1xf32> to vector<16x32xf32>
    %190 = arith.subf %173, %189 : vector<16x32xf32>
    %191 = arith.mulf %190, %190 : vector<16x32xf32>
    %cst_65 = arith.constant dense<0.000000e+00> : vector<16xf32>
    %192 = vector.multi_reduction <add>, %191, %cst_65 [1] : vector<16x32xf32> to vector<16xf32>
    %193 = vector.shape_cast %192 : vector<16xf32> to vector<16x1xf32>
    %cst_66 = arith.constant 3.200000e+01 : f32
    %194 = vector.broadcast %cst_66 : f32 to vector<16x1xf32>
    %195 = arith.divf %193, %194 : vector<16x1xf32>
    %196 = vector.broadcast %188 : vector<16x1xf32> to vector<16x32xf32>
    %197 = arith.subf %173, %196 : vector<16x32xf32>
    %cst_67 = arith.constant 9.99999974E-6 : f32
    %198 = vector.broadcast %cst_67 : f32 to vector<16x1xf32>
    %199 = arith.addf %195, %198 : vector<16x1xf32>
    %200 = math.rsqrt %199 : vector<16x1xf32>
    %201 = vector.broadcast %200 : vector<16x1xf32> to vector<16x32xf32>
    %202 = arith.mulf %197, %201 : vector<16x32xf32>
    %203 = vector.broadcast %176 : vector<1x32xf32> to vector<16x32xf32>
    %204 = arith.mulf %202, %203 : vector<16x32xf32>
    %205 = vector.broadcast %177 : vector<1x32xf32> to vector<16x32xf32>
    %206 = arith.addf %204, %205 : vector<16x32xf32>
    %c1_68 = arith.constant 1 : index
    %c0_69 = arith.constant 0 : index
    %c0_70 = arith.constant 0 : index
    %207 = vector.load %arg4[%c1_68, %c0_69, %c0_70] : memref<2x32x96xf32, #tpu.memory_space<vmem>>, vector<1x32x96xf32>
    %208 = vector.shape_cast %207 : vector<1x32x96xf32> to vector<32x96xf32>
    %cst_71 = arith.constant dense<0.000000e+00> : vector<16x96xf32>
    %209 = tpu.matmul %206, %208, %cst_71 {dimension_numbers = #tpu.dot_dimension_numbers<[1], [0], [0], [1], [0, 0, 1, 1], [], []>} : vector<16x32xf32>, vector<32x96xf32>, vector<16x96xf32> -> vector<16x96xf32>
    %210 = vector.extract_strided_slice %209 {offsets = [0, 0], sizes = [16, 32], strides = [1, 1]} : vector<16x96xf32> to vector<16x32xf32>
    %211 = vector.broadcast %178 : vector<1x32xf32> to vector<16x32xf32>
    %212 = arith.addf %210, %211 : vector<16x32xf32>
    %213 = vector.shape_cast %212 : vector<16x32xf32> to vector<2x8x32xf32>
    %214 = vector.extract_strided_slice %209 {offsets = [0, 32], sizes = [16, 32], strides = [1, 1]} : vector<16x96xf32> to vector<16x32xf32>
    %215 = vector.broadcast %179 : vector<1x32xf32> to vector<16x32xf32>
    %216 = arith.addf %214, %215 : vector<16x32xf32>
    %217 = vector.shape_cast %216 : vector<16x32xf32> to vector<2x8x32xf32>
    %218 = vector.extract_strided_slice %209 {offsets = [0, 64], sizes = [16, 32], strides = [1, 1]} : vector<16x96xf32> to vector<16x32xf32>
    %219 = vector.broadcast %180 : vector<1x32xf32> to vector<16x32xf32>
    %220 = arith.addf %218, %219 : vector<16x32xf32>
    %221 = vector.shape_cast %220 : vector<16x32xf32> to vector<2x8x32xf32>
    %222 = vector.extract_strided_slice %213 {offsets = [0, 0, 0], sizes = [2, 8, 8], strides = [1, 1, 1]} : vector<2x8x32xf32> to vector<2x8x8xf32>
    %223 = vector.extract_strided_slice %217 {offsets = [0, 0, 0], sizes = [2, 8, 8], strides = [1, 1, 1]} : vector<2x8x32xf32> to vector<2x8x8xf32>
    "tpu.trace_start"() <{level = 10 : i32, message = "bqd,bkd->bqk"}> : () -> ()
    %cst_72 = arith.constant dense<0.000000e+00> : vector<2x8x8xf32>
    %224 = tpu.matmul %222, %223, %cst_72 {dimension_numbers = #tpu.dot_dimension_numbers<[2], [2], [1], [1], [0, 0, 0, 1, 1, 1], [0], [0]>} : vector<2x8x8xf32>, vector<2x8x8xf32>, vector<2x8x8xf32> -> vector<2x8x8xf32>
    "tpu.trace_stop"() : () -> ()
    %cst_73 = arith.constant 0.353553385 : f32
    %225 = vector.broadcast %cst_73 : f32 to vector<2x8x8xf32>
    %226 = arith.mulf %224, %225 : vector<2x8x8xf32>
    %cst_74 = arith.constant dense<0xFF800000> : vector<2x8xf32>
    %227 = vector.multi_reduction <maximumf>, %226, %cst_74 [2] : vector<2x8x8xf32> to vector<2x8xf32>
    %228 = vector.shape_cast %227 : vector<2x8xf32> to vector<2x8x1xf32>
    %229 = vector.broadcast %228 : vector<2x8x1xf32> to vector<2x8x8xf32>
    %230 = arith.subf %226, %229 : vector<2x8x8xf32>
    %231 = math.exp %230 : vector<2x8x8xf32>
    %cst_75 = arith.constant dense<0.000000e+00> : vector<2x8xf32>
    %232 = vector.multi_reduction <add>, %231, %cst_75 [2] : vector<2x8x8xf32> to vector<2x8xf32>
    %233 = vector.shape_cast %232 : vector<2x8xf32> to vector<2x8x1xf32>
    %234 = vector.broadcast %233 : vector<2x8x1xf32> to vector<2x8x8xf32>
    %235 = arith.divf %231, %234 : vector<2x8x8xf32>
    %236 = vector.extract_strided_slice %221 {offsets = [0, 0, 0], sizes = [2, 8, 8], strides = [1, 1, 1]} : vector<2x8x32xf32> to vector<2x8x8xf32>
    "tpu.trace_start"() <{level = 10 : i32, message = "bqk,bkd->bqd"}> : () -> ()
    %cst_76 = arith.constant dense<0.000000e+00> : vector<2x8x8xf32>
    %237 = tpu.matmul %235, %236, %cst_76 {dimension_numbers = #tpu.dot_dimension_numbers<[2], [1], [1], [2], [0, 0, 0, 1, 1, 2], [0], [0]>} : vector<2x8x8xf32>, vector<2x8x8xf32>, vector<2x8x8xf32> -> vector<2x8x8xf32>
    "tpu.trace_stop"() : () -> ()
    %238 = vector.extract_strided_slice %213 {offsets = [0, 0, 8], sizes = [2, 8, 8], strides = [1, 1, 1]} : vector<2x8x32xf32> to vector<2x8x8xf32>
    %239 = vector.extract_strided_slice %217 {offsets = [0, 0, 8], sizes = [2, 8, 8], strides = [1, 1, 1]} : vector<2x8x32xf32> to vector<2x8x8xf32>
    "tpu.trace_start"() <{level = 10 : i32, message = "bqd,bkd->bqk"}> : () -> ()
    %cst_77 = arith.constant dense<0.000000e+00> : vector<2x8x8xf32>
    %240 = tpu.matmul %238, %239, %cst_77 {dimension_numbers = #tpu.dot_dimension_numbers<[2], [2], [1], [1], [0, 0, 0, 1, 1, 1], [0], [0]>} : vector<2x8x8xf32>, vector<2x8x8xf32>, vector<2x8x8xf32> -> vector<2x8x8xf32>
    "tpu.trace_stop"() : () -> ()
    %cst_78 = arith.constant 0.353553385 : f32
    %241 = vector.broadcast %cst_78 : f32 to vector<2x8x8xf32>
    %242 = arith.mulf %240, %241 : vector<2x8x8xf32>
    %cst_79 = arith.constant dense<0xFF800000> : vector<2x8xf32>
    %243 = vector.multi_reduction <maximumf>, %242, %cst_79 [2] : vector<2x8x8xf32> to vector<2x8xf32>
    %244 = vector.shape_cast %243 : vector<2x8xf32> to vector<2x8x1xf32>
    %245 = vector.broadcast %244 : vector<2x8x1xf32> to vector<2x8x8xf32>
    %246 = arith.subf %242, %245 : vector<2x8x8xf32>
    %247 = math.exp %246 : vector<2x8x8xf32>
    %cst_80 = arith.constant dense<0.000000e+00> : vector<2x8xf32>
    %248 = vector.multi_reduction <add>, %247, %cst_80 [2] : vector<2x8x8xf32> to vector<2x8xf32>
    %249 = vector.shape_cast %248 : vector<2x8xf32> to vector<2x8x1xf32>
    %250 = vector.broadcast %249 : vector<2x8x1xf32> to vector<2x8x8xf32>
    %251 = arith.divf %247, %250 : vector<2x8x8xf32>
    %252 = vector.extract_strided_slice %221 {offsets = [0, 0, 8], sizes = [2, 8, 8], strides = [1, 1, 1]} : vector<2x8x32xf32> to vector<2x8x8xf32>
    "tpu.trace_start"() <{level = 10 : i32, message = "bqk,bkd->bqd"}> : () -> ()
    %cst_81 = arith.constant dense<0.000000e+00> : vector<2x8x8xf32>
    %253 = tpu.matmul %251, %252, %cst_81 {dimension_numbers = #tpu.dot_dimension_numbers<[2], [1], [1], [2], [0, 0, 0, 1, 1, 2], [0], [0]>} : vector<2x8x8xf32>, vector<2x8x8xf32>, vector<2x8x8xf32> -> vector<2x8x8xf32>
    "tpu.trace_stop"() : () -> ()
    %254 = vector.extract_strided_slice %213 {offsets = [0, 0, 16], sizes = [2, 8, 8], strides = [1, 1, 1]} : vector<2x8x32xf32> to vector<2x8x8xf32>
    %255 = vector.extract_strided_slice %217 {offsets = [0, 0, 16], sizes = [2, 8, 8], strides = [1, 1, 1]} : vector<2x8x32xf32> to vector<2x8x8xf32>
    "tpu.trace_start"() <{level = 10 : i32, message = "bqd,bkd->bqk"}> : () -> ()
    %cst_82 = arith.constant dense<0.000000e+00> : vector<2x8x8xf32>
    %256 = tpu.matmul %254, %255, %cst_82 {dimension_numbers = #tpu.dot_dimension_numbers<[2], [2], [1], [1], [0, 0, 0, 1, 1, 1], [0], [0]>} : vector<2x8x8xf32>, vector<2x8x8xf32>, vector<2x8x8xf32> -> vector<2x8x8xf32>
    "tpu.trace_stop"() : () -> ()
    %cst_83 = arith.constant 0.353553385 : f32
    %257 = vector.broadcast %cst_83 : f32 to vector<2x8x8xf32>
    %258 = arith.mulf %256, %257 : vector<2x8x8xf32>
    %cst_84 = arith.constant dense<0xFF800000> : vector<2x8xf32>
    %259 = vector.multi_reduction <maximumf>, %258, %cst_84 [2] : vector<2x8x8xf32> to vector<2x8xf32>
    %260 = vector.shape_cast %259 : vector<2x8xf32> to vector<2x8x1xf32>
    %261 = vector.broadcast %260 : vector<2x8x1xf32> to vector<2x8x8xf32>
    %262 = arith.subf %258, %261 : vector<2x8x8xf32>
    %263 = math.exp %262 : vector<2x8x8xf32>
    %cst_85 = arith.constant dense<0.000000e+00> : vector<2x8xf32>
    %264 = vector.multi_reduction <add>, %263, %cst_85 [2] : vector<2x8x8xf32> to vector<2x8xf32>
    %265 = vector.shape_cast %264 : vector<2x8xf32> to vector<2x8x1xf32>
    %266 = vector.broadcast %265 : vector<2x8x1xf32> to vector<2x8x8xf32>
    %267 = arith.divf %263, %266 : vector<2x8x8xf32>
    %268 = vector.extract_strided_slice %221 {offsets = [0, 0, 16], sizes = [2, 8, 8], strides = [1, 1, 1]} : vector<2x8x32xf32> to vector<2x8x8xf32>
    "tpu.trace_start"() <{level = 10 : i32, message = "bqk,bkd->bqd"}> : () -> ()
    %cst_86 = arith.constant dense<0.000000e+00> : vector<2x8x8xf32>
    %269 = tpu.matmul %267, %268, %cst_86 {dimension_numbers = #tpu.dot_dimension_numbers<[2], [1], [1], [2], [0, 0, 0, 1, 1, 2], [0], [0]>} : vector<2x8x8xf32>, vector<2x8x8xf32>, vector<2x8x8xf32> -> vector<2x8x8xf32>
    "tpu.trace_stop"() : () -> ()
    %270 = vector.extract_strided_slice %213 {offsets = [0, 0, 24], sizes = [2, 8, 8], strides = [1, 1, 1]} : vector<2x8x32xf32> to vector<2x8x8xf32>
    %271 = vector.extract_strided_slice %217 {offsets = [0, 0, 24], sizes = [2, 8, 8], strides = [1, 1, 1]} : vector<2x8x32xf32> to vector<2x8x8xf32>
    "tpu.trace_start"() <{level = 10 : i32, message = "bqd,bkd->bqk"}> : () -> ()
    %cst_87 = arith.constant dense<0.000000e+00> : vector<2x8x8xf32>
    %272 = tpu.matmul %270, %271, %cst_87 {dimension_numbers = #tpu.dot_dimension_numbers<[2], [2], [1], [1], [0, 0, 0, 1, 1, 1], [0], [0]>} : vector<2x8x8xf32>, vector<2x8x8xf32>, vector<2x8x8xf32> -> vector<2x8x8xf32>
    "tpu.trace_stop"() : () -> ()
    %cst_88 = arith.constant 0.353553385 : f32
    %273 = vector.broadcast %cst_88 : f32 to vector<2x8x8xf32>
    %274 = arith.mulf %272, %273 : vector<2x8x8xf32>
    %cst_89 = arith.constant dense<0xFF800000> : vector<2x8xf32>
    %275 = vector.multi_reduction <maximumf>, %274, %cst_89 [2] : vector<2x8x8xf32> to vector<2x8xf32>
    %276 = vector.shape_cast %275 : vector<2x8xf32> to vector<2x8x1xf32>
    %277 = vector.broadcast %276 : vector<2x8x1xf32> to vector<2x8x8xf32>
    %278 = arith.subf %274, %277 : vector<2x8x8xf32>
    %279 = math.exp %278 : vector<2x8x8xf32>
    %cst_90 = arith.constant dense<0.000000e+00> : vector<2x8xf32>
    %280 = vector.multi_reduction <add>, %279, %cst_90 [2] : vector<2x8x8xf32> to vector<2x8xf32>
    %281 = vector.shape_cast %280 : vector<2x8xf32> to vector<2x8x1xf32>
    %282 = vector.broadcast %281 : vector<2x8x1xf32> to vector<2x8x8xf32>
    %283 = arith.divf %279, %282 : vector<2x8x8xf32>
    %284 = vector.extract_strided_slice %221 {offsets = [0, 0, 24], sizes = [2, 8, 8], strides = [1, 1, 1]} : vector<2x8x32xf32> to vector<2x8x8xf32>
    "tpu.trace_start"() <{level = 10 : i32, message = "bqk,bkd->bqd"}> : () -> ()
    %cst_91 = arith.constant dense<0.000000e+00> : vector<2x8x8xf32>
    %285 = tpu.matmul %283, %284, %cst_91 {dimension_numbers = #tpu.dot_dimension_numbers<[2], [1], [1], [2], [0, 0, 0, 1, 1, 2], [0], [0]>} : vector<2x8x8xf32>, vector<2x8x8xf32>, vector<2x8x8xf32> -> vector<2x8x8xf32>
    "tpu.trace_stop"() : () -> ()
    %286 = tpu.concatenate %237, %253, %269, %285 in 2 : vector<2x8x8xf32>, vector<2x8x8xf32>, vector<2x8x8xf32>, vector<2x8x8xf32> -> vector<2x8x32xf32>
    %287 = vector.shape_cast %286 : vector<2x8x32xf32> to vector<16x32xf32>
    %c1_92 = arith.constant 1 : index
    %c0_93 = arith.constant 0 : index
    %c0_94 = arith.constant 0 : index
    %288 = vector.load %arg5[%c1_92, %c0_93, %c0_94] : memref<2x32x32xf32, #tpu.memory_space<vmem>>, vector<1x32x32xf32>
    %289 = vector.shape_cast %288 : vector<1x32x32xf32> to vector<32x32xf32>
    %cst_95 = arith.constant dense<0.000000e+00> : vector<16x32xf32>
    %290 = tpu.matmul %287, %289, %cst_95 {dimension_numbers = #tpu.dot_dimension_numbers<[1], [0], [0], [1], [0, 0, 1, 1], [], []>} : vector<16x32xf32>, vector<32x32xf32>, vector<16x32xf32> -> vector<16x32xf32>
    %291 = arith.addf %173, %290 : vector<16x32xf32>
    %292 = vector.broadcast %181 : vector<1x32xf32> to vector<16x32xf32>
    %293 = arith.addf %291, %292 : vector<16x32xf32>
    %cst_96 = arith.constant dense<0.000000e+00> : vector<16xf32>
    %294 = vector.multi_reduction <add>, %293, %cst_96 [1] : vector<16x32xf32> to vector<16xf32>
    %295 = vector.shape_cast %294 : vector<16xf32> to vector<16x1xf32>
    %cst_97 = arith.constant 3.200000e+01 : f32
    %296 = vector.broadcast %cst_97 : f32 to vector<16x1xf32>
    %297 = arith.divf %295, %296 : vector<16x1xf32>
    %298 = vector.broadcast %297 : vector<16x1xf32> to vector<16x32xf32>
    %299 = arith.subf %293, %298 : vector<16x32xf32>
    %300 = arith.mulf %299, %299 : vector<16x32xf32>
    %cst_98 = arith.constant dense<0.000000e+00> : vector<16xf32>
    %301 = vector.multi_reduction <add>, %300, %cst_98 [1] : vector<16x32xf32> to vector<16xf32>
    %302 = vector.shape_cast %301 : vector<16xf32> to vector<16x1xf32>
    %cst_99 = arith.constant 3.200000e+01 : f32
    %303 = vector.broadcast %cst_99 : f32 to vector<16x1xf32>
    %304 = arith.divf %302, %303 : vector<16x1xf32>
    %305 = vector.broadcast %297 : vector<16x1xf32> to vector<16x32xf32>
    %306 = arith.subf %293, %305 : vector<16x32xf32>
    %cst_100 = arith.constant 9.99999974E-6 : f32
    %307 = vector.broadcast %cst_100 : f32 to vector<16x1xf32>
    %308 = arith.addf %304, %307 : vector<16x1xf32>
    %309 = math.rsqrt %308 : vector<16x1xf32>
    %310 = vector.broadcast %309 : vector<16x1xf32> to vector<16x32xf32>
    %311 = arith.mulf %306, %310 : vector<16x32xf32>
    %312 = vector.broadcast %182 : vector<1x32xf32> to vector<16x32xf32>
    %313 = arith.mulf %311, %312 : vector<16x32xf32>
    %314 = vector.broadcast %183 : vector<1x32xf32> to vector<16x32xf32>
    %315 = arith.addf %313, %314 : vector<16x32xf32>
    %c1_101 = arith.constant 1 : index
    %c0_102 = arith.constant 0 : index
    %c0_103 = arith.constant 0 : index
    %316 = vector.load %arg6[%c1_101, %c0_102, %c0_103] : memref<2x32x128xf32, #tpu.memory_space<vmem>>, vector<1x32x128xf32>
    %317 = vector.shape_cast %316 : vector<1x32x128xf32> to vector<32x128xf32>
    %cst_104 = arith.constant dense<0.000000e+00> : vector<16x128xf32>
    %318 = tpu.matmul %315, %317, %cst_104 {dimension_numbers = #tpu.dot_dimension_numbers<[1], [0], [0], [1], [0, 0, 1, 1], [], []>} : vector<16x32xf32>, vector<32x128xf32>, vector<16x128xf32> -> vector<16x128xf32>
    %c1_105 = arith.constant 1 : index
    %c0_106 = arith.constant 0 : index
    %c0_107 = arith.constant 0 : index
    %319 = vector.load %arg7[%c1_105, %c0_106, %c0_107] : memref<2x1x128xf32, #tpu.memory_space<vmem>>, vector<1x1x128xf32>
    %320 = vector.shape_cast %319 : vector<1x1x128xf32> to vector<1x128xf32>
    %321 = vector.broadcast %320 : vector<1x128xf32> to vector<16x128xf32>
    %322 = arith.addf %318, %321 : vector<16x128xf32>
    %323 = arith.mulf %322, %322 : vector<16x128xf32>
    %324 = arith.mulf %322, %323 : vector<16x128xf32>
    %cst_108 = arith.constant 4.471500e-02 : f32
    %325 = vector.broadcast %cst_108 : f32 to vector<16x128xf32>
    %326 = arith.mulf %325, %324 : vector<16x128xf32>
    %327 = arith.addf %322, %326 : vector<16x128xf32>
    %cst_109 = arith.constant 0.797884583 : f32
    %328 = vector.broadcast %cst_109 : f32 to vector<16x128xf32>
    %329 = arith.mulf %328, %327 : vector<16x128xf32>
    %330 = math.tanh %329 : vector<16x128xf32>
    %cst_110 = arith.constant 1.000000e+00 : f32
    %331 = vector.broadcast %cst_110 : f32 to vector<16x128xf32>
    %332 = arith.addf %331, %330 : vector<16x128xf32>
    %cst_111 = arith.constant 5.000000e-01 : f32
    %333 = vector.broadcast %cst_111 : f32 to vector<16x128xf32>
    %334 = arith.mulf %333, %332 : vector<16x128xf32>
    %335 = arith.mulf %322, %334 : vector<16x128xf32>
    %c1_112 = arith.constant 1 : index
    %c0_113 = arith.constant 0 : index
    %c0_114 = arith.constant 0 : index
    %336 = vector.load %arg8[%c1_112, %c0_113, %c0_114] : memref<2x128x32xf32, #tpu.memory_space<vmem>>, vector<1x128x32xf32>
    %337 = vector.shape_cast %336 : vector<1x128x32xf32> to vector<128x32xf32>
    %cst_115 = arith.constant dense<0.000000e+00> : vector<16x32xf32>
    %338 = tpu.matmul %335, %337, %cst_115 {dimension_numbers = #tpu.dot_dimension_numbers<[1], [0], [0], [1], [0, 0, 1, 1], [], []>} : vector<16x128xf32>, vector<128x32xf32>, vector<16x32xf32> -> vector<16x32xf32>
    %339 = arith.addf %293, %338 : vector<16x32xf32>
    %340 = vector.broadcast %184 : vector<1x32xf32> to vector<16x32xf32>
    %341 = arith.addf %339, %340 : vector<16x32xf32>
    %c0_116 = arith.constant 0 : index
    %c0_117 = arith.constant 0 : index
    %342 = vector.load %arg9[%c0_116, %c0_117] : memref<3x32xf32, #tpu.memory_space<vmem>>, vector<3x32xf32>
    %343 = vector.extract_strided_slice %342 {offsets = [0, 0], sizes = [1, 32], strides = [1, 1]} : vector<3x32xf32> to vector<1x32xf32>
    %344 = vector.extract_strided_slice %342 {offsets = [1, 0], sizes = [1, 32], strides = [1, 1]} : vector<3x32xf32> to vector<1x32xf32>
    %cst_118 = arith.constant dense<0.000000e+00> : vector<16xf32>
    %345 = vector.multi_reduction <add>, %341, %cst_118 [1] : vector<16x32xf32> to vector<16xf32>
    %346 = vector.shape_cast %345 : vector<16xf32> to vector<16x1xf32>
    %cst_119 = arith.constant 3.200000e+01 : f32
    %347 = vector.broadcast %cst_119 : f32 to vector<16x1xf32>
    %348 = arith.divf %346, %347 : vector<16x1xf32>
    %349 = vector.broadcast %348 : vector<16x1xf32> to vector<16x32xf32>
    %350 = arith.subf %341, %349 : vector<16x32xf32>
    %351 = arith.mulf %350, %350 : vector<16x32xf32>
    %cst_120 = arith.constant dense<0.000000e+00> : vector<16xf32>
    %352 = vector.multi_reduction <add>, %351, %cst_120 [1] : vector<16x32xf32> to vector<16xf32>
    %353 = vector.shape_cast %352 : vector<16xf32> to vector<16x1xf32>
    %cst_121 = arith.constant 3.200000e+01 : f32
    %354 = vector.broadcast %cst_121 : f32 to vector<16x1xf32>
    %355 = arith.divf %353, %354 : vector<16x1xf32>
    %356 = vector.broadcast %348 : vector<16x1xf32> to vector<16x32xf32>
    %357 = arith.subf %341, %356 : vector<16x32xf32>
    %cst_122 = arith.constant 9.99999974E-6 : f32
    %358 = vector.broadcast %cst_122 : f32 to vector<16x1xf32>
    %359 = arith.addf %355, %358 : vector<16x1xf32>
    %360 = math.rsqrt %359 : vector<16x1xf32>
    %361 = vector.broadcast %360 : vector<16x1xf32> to vector<16x32xf32>
    %362 = arith.mulf %357, %361 : vector<16x32xf32>
    %363 = vector.broadcast %343 : vector<1x32xf32> to vector<16x32xf32>
    %364 = arith.mulf %362, %363 : vector<16x32xf32>
    %365 = vector.broadcast %344 : vector<1x32xf32> to vector<16x32xf32>
    %366 = arith.addf %364, %365 : vector<16x32xf32>
    %367 = vector.shape_cast %366 : vector<16x32xf32> to vector<2x8x32xf32>
    %368 = vector.extract_strided_slice %342 {offsets = [2, 0], sizes = [1, 32], strides = [1, 1]} : vector<3x32xf32> to vector<1x32xf32>
    %369 = vector.shape_cast %368 : vector<1x32xf32> to vector<1x1x32xf32>
    %370 = vector.broadcast %369 : vector<1x1x32xf32> to vector<2x8x32xf32>
    %371 = arith.mulf %367, %370 : vector<2x8x32xf32>
    %cst_123 = arith.constant dense<0.000000e+00> : vector<2x8xf32>
    %372 = vector.multi_reduction <add>, %371, %cst_123 [2] : vector<2x8x32xf32> to vector<2x8xf32>
    %373 = vector.shape_cast %372 : vector<2x8xf32> to vector<2x8x1xf32>
    %c0_124 = arith.constant 0 : index
    %c0_125 = arith.constant 0 : index
    %374 = vector.load %arg10[%c0_124, %c0_125] : memref<1x1xf32, #tpu.memory_space<vmem>>, vector<1x1xf32>
    %375 = vector.shape_cast %374 : vector<1x1xf32> to vector<1x1x1xf32>
    %376 = vector.broadcast %375 : vector<1x1x1xf32> to vector<2x8x1xf32>
    %377 = arith.addf %373, %376 : vector<2x8x1xf32>
    %cst_126 = arith.constant dense<0xFF800000> : vector<2x1xf32>
    %378 = vector.multi_reduction <maximumf>, %377, %cst_126 [1] : vector<2x8x1xf32> to vector<2x1xf32>
    %379 = vector.shape_cast %378 : vector<2x1xf32> to vector<2x1x1xf32>
    %380 = vector.broadcast %379 : vector<2x1x1xf32> to vector<2x8x1xf32>
    %381 = arith.subf %377, %380 : vector<2x8x1xf32>
    %382 = math.exp %381 : vector<2x8x1xf32>
    %cst_127 = arith.constant dense<0.000000e+00> : vector<2x1xf32>
    %383 = vector.multi_reduction <add>, %382, %cst_127 [1] : vector<2x8x1xf32> to vector<2x1xf32>
    %384 = vector.shape_cast %383 : vector<2x1xf32> to vector<2x1x1xf32>
    %385 = vector.broadcast %384 : vector<2x1x1xf32> to vector<2x8x1xf32>
    %386 = arith.divf %382, %385 : vector<2x8x1xf32>
    %387 = vector.broadcast %386 : vector<2x8x1xf32> to vector<2x8x32xf32>
    %388 = arith.mulf %387, %367 : vector<2x8x32xf32>
    %cst_128 = arith.constant dense<0.000000e+00> : vector<2x32xf32>
    %389 = vector.multi_reduction <add>, %388, %cst_128 [1] : vector<2x8x32xf32> to vector<2x32xf32>
    %c0_129 = arith.constant 0 : index
    %c0_130 = arith.constant 0 : index
    %390 = vector.load %arg11[%c0_129, %c0_130] : memref<32x8xf32, #tpu.memory_space<vmem>>, vector<32x8xf32>
    %cst_131 = arith.constant dense<0.000000e+00> : vector<2x8xf32>
    %391 = tpu.matmul %389, %390, %cst_131 {dimension_numbers = #tpu.dot_dimension_numbers<[1], [0], [0], [1], [0, 0, 1, 1], [], []>} : vector<2x32xf32>, vector<32x8xf32>, vector<2x8xf32> -> vector<2x8xf32>
    %cst_132 = arith.constant dense<0xFF800000> : vector<2xf32>
    %392 = vector.multi_reduction <maximumf>, %391, %cst_132 [1] : vector<2x8xf32> to vector<2xf32>
    %393 = vector.shape_cast %392 : vector<2xf32> to vector<2x1xf32>
    %394 = vector.broadcast %393 : vector<2x1xf32> to vector<2x8xf32>
    %395 = arith.subf %391, %394 : vector<2x8xf32>
    %396 = math.exp %395 : vector<2x8xf32>
    %cst_133 = arith.constant dense<0.000000e+00> : vector<2xf32>
    %397 = vector.multi_reduction <add>, %396, %cst_133 [1] : vector<2x8xf32> to vector<2xf32>
    %398 = vector.shape_cast %397 : vector<2xf32> to vector<2x1xf32>
    %399 = math.log %398 : vector<2x1xf32>
    %400 = arith.addf %399, %393 : vector<2x1xf32>
    %401 = vector.broadcast %400 : vector<2x1xf32> to vector<2x8xf32>
    %402 = arith.subf %391, %401 : vector<2x8xf32>
    %c0_134 = arith.constant 0 : index
    %c0_135 = arith.constant 0 : index
    %403 = vector.load %arg12[%c0_134, %c0_135] : memref<2x8xf32, #tpu.memory_space<vmem>>, vector<2x8xf32>
    tpu.vector_store %arg12[%c0_134, %c0_135], %402 {strides = array<i32>} : memref<2x8xf32, #tpu.memory_space<vmem>>, vector<2x8xf32>,
    return
  }
}

</mosaic_0001>

<llo_original>
// kernel: seq_model_forward.1
$region0: #{seq_model_forward.1}
  #allocation0 [shape = 'u32[]', space=smem, size = 0x4, offset = 0x4, fixed_abs, tag = 'smem constant byte address 0x4 - core index']
  #allocation1 [shape = 'u32[144,128]{1,0:T(1,128)}', space=vmem, size = 0x12000, scoped, tag = 'internal scratch']
  #allocation2 [shape = 'f32[1,1]{1,0:T(1,128)S(1)}', space=vmem, size = 0x200, scoped, tag = 'scoped memory for seq_model_forward.1']
  %s0 = inlined_call_operand.vmem [shape: f32[16,4], index: 0, kind: input, shape index: {}]
  %s1 = inlined_call_operand.vmem [shape: f32[4,32], index: 1, kind: input, shape index: {}]
  %s2 = inlined_call_operand.vmem [shape: f32[8,32], index: 2, kind: input, shape index: {}]
  %s3 = inlined_call_operand.vmem [shape: f32[2,9,32], index: 3, kind: input, shape index: {}]
  %s4 = inlined_call_operand.vmem [shape: f32[2,32,96], index: 4, kind: input, shape index: {}]
  %s5 = inlined_call_operand.vmem [shape: f32[2,32,32], index: 5, kind: input, shape index: {}]
  %s6 = inlined_call_operand.vmem [shape: f32[2,32,128], index: 6, kind: input, shape index: {}]
  %s7 = inlined_call_operand.vmem [shape: f32[2,1,128], index: 7, kind: input, shape index: {}]
  %s8 = inlined_call_operand.vmem [shape: f32[2,128,32], index: 8, kind: input, shape index: {}]
  %s9 = inlined_call_operand.vmem [shape: f32[3,32], index: 9, kind: input, shape index: {}]
  %s10 = inlined_call_operand.<no memory space> [shape: f32[1,1], index: 10, kind: input, shape index: {}]
  %s11 = inlined_call_operand.vmem [shape: f32[32,8], index: 11, kind: input, shape index: {}]
  %s12 = inlined_call_operand.hbm [shape: f32[2,8], index: 12, kind: output, shape index: {}]
  %s13 = sld [smem:[#allocation0]]
  $region58: #{seq_model_forward.1} parent=0
    _
  %s15 = ssub.s32 1, %s13
  %s16 = scalar_select 0, %s15, %s13
  %v17 = vstv %s10
  %18 = vst [vmem:[#allocation2] sm:$0x1] %v17
  $region1: #{seq_model_forward.1} parent=0
    #allocation3 [shape = 'u8[1024]{0}', space=vmem, size = 0x400, scoped, tag = 'output window, operand 0, single buffered']
    #allocation4 [shape = 's32[1]{0}', space=sflag, size = 0x4, scoped, tag = 'scoped memory for seq_model_forward.1']
    %19 = vsyncpa [#allocation4], 0
    // Predicated region
    $region2: #{seq_model_forward.1} parent=1 // pred_check
      _
    $region3: #{seq_model_forward.1} parent=1 // pred_check_branch
      %21 = sbr.rel (0) target = $region5
    $region4: #{seq_model_forward.1} parent=1 // pred_region
      _
    $region5: #{seq_model_forward.1} parent=1 // pred_fallthru
      _
    // Predicated region
    $region6: #{seq_model_forward.1} parent=1 // pred_check
      _
    $region7: #{seq_model_forward.1} parent=1 // pred_check_branch
      %23 = sbr.rel (0) target = $region9
    $region8: #{seq_model_forward.1} parent=1 // pred_region
      _
    $region9: #{seq_model_forward.1} parent=1 // pred_fallthru
      _
    // Predicated region
    $region10: #{seq_model_forward.1} parent=1 // pred_check
      _
    $region11: #{seq_model_forward.1} parent=1 // pred_check_branch
      %25 = sbr.rel (0) target = $region13
    $region12: #{seq_model_forward.1} parent=1 // pred_region
      _
    $region13: #{seq_model_forward.1} parent=1 // pred_fallthru
      _
    // Predicated region
    $region14: #{seq_model_forward.1} parent=1 // pred_check
      _
    $region15: #{seq_model_forward.1} parent=1 // pred_check_branch
      %27 = sbr.rel (0) target = $region17
    $region16: #{seq_model_forward.1} parent=1 // pred_region
      _
    $region17: #{seq_model_forward.1} parent=1 // pred_fallthru
      _
    // Predicated region
    $region18: #{seq_model_forward.1} parent=1 // pred_check
      _
    $region19: #{seq_model_forward.1} parent=1 // pred_check_branch
      %29 = sbr.rel (0) target = $region21
    $region20: #{seq_model_forward.1} parent=1 // pred_region
      _
    $region21: #{seq_model_forward.1} parent=1 // pred_fallthru
      _
    // Predicated region
    $region22: #{seq_model_forward.1} parent=1 // pred_check
      _
    $region23: #{seq_model_forward.1} parent=1 // pred_check_branch
      %31 = sbr.rel (0) target = $region25
    $region24: #{seq_model_forward.1} parent=1 // pred_region
      _
    $region25: #{seq_model_forward.1} parent=1 // pred_fallthru
      _
    // Predicated region
    $region26: #{seq_model_forward.1} parent=1 // pred_check
      _
    $region27: #{seq_model_forward.1} parent=1 // pred_check_branch
      %33 = sbr.rel (0) target = $region29
    $region28: #{seq_model_forward.1} parent=1 // pred_region
      _
    $region29: #{seq_model_forward.1} parent=1 // pred_fallthru
      _
    // Predicated region
    $region30: #{seq_model_forward.1} parent=1 // pred_check
      _
    $region31: #{seq_model_forward.1} parent=1 // pred_check_branch
      %35 = sbr.rel (0) target = $region33
    $region32: #{seq_model_forward.1} parent=1 // pred_region
      _
    $region33: #{seq_model_forward.1} parent=1 // pred_fallthru
      _
    // Predicated region
    $region34: #{seq_model_forward.1} parent=1 // pred_check
      _
    $region35: #{seq_model_forward.1} parent=1 // pred_check_branch
      %37 = sbr.rel (0) target = $region37
    $region36: #{seq_model_forward.1} parent=1 // pred_region
      _
    $region37: #{seq_model_forward.1} parent=1 // pred_fallthru
      _
    // Predicated region
    $region38: #{seq_model_forward.1} parent=1 // pred_check
      _
    $region39: #{seq_model_forward.1} parent=1 // pred_check_branch
      %39 = sbr.rel (0) target = $region41
    $region40: #{seq_model_forward.1} parent=1 // pred_region
      _
    $region41: #{seq_model_forward.1} parent=1 // pred_fallthru
      _
    // Predicated region
    $region42: #{seq_model_forward.1} parent=1 // pred_check
      _
    $region43: #{seq_model_forward.1} parent=1 // pred_check_branch
      %41 = sbr.rel (0) target = $region45
    $region44: #{seq_model_forward.1} parent=1 // pred_region
      _
    $region45: #{seq_model_forward.1} parent=1 // pred_fallthru
      _
    // Predicated region
    $region46: #{seq_model_forward.1} parent=1 // pred_check
      _
    $region47: #{seq_model_forward.1} parent=1 // pred_check_branch
      %43 = sbr.rel (0) target = $region49
    $region48: #{seq_model_forward.1} parent=1 // pred_region
      _
    $region49: #{seq_model_forward.1} parent=1 // pred_fallthru
      _
    %v44 = vld [vmem:[%s0] sm:$0xff]
    %v45 = vld [vmem:[%s0 + $0x8] sm:$0xff]
    %v46 = vld [vmem:[%s1] sm:$0xf]
    %v47 = vld [vmem:[%s2] sm:$0xff]
    %vm48 = vcmask 31744
    %v50 = vsel %vm48, %v44, 0
    %v53 = vsel %vm48, %v45, 0
    %vm55 = vcmask 1043456
    %v57 = vsel %vm55, %v46, 0
    %59 = vmatprep.subr.mxu0 0.0
    %60 = vmatpush1.msra.mxu0 %v57
    %61 = vmatprep.subr.mxu0 0.0
    %62 = vmatpush1.msra.mxu0 0.0
    %63 = vmatprep.subr.mxu0 0.0
    %64 = vmatpush1.msra.mxu0 0.0
    %65 = vmatprep.subr.mxu0 0.0
    %66 = vmatpush1.msra.mxu0 0.0
    %67 = vmatprep.subr.mxu0 0.0
    %68 = vmatpush1.msra.mxu0 0.0
    %69 = vmatprep.subr.mxu0 0.0
    %70 = vmatpush1.msra.mxu0 0.0
    %71 = vmatprep.subr.mxu0 0.0
    %72 = vmatpush1.msra.mxu0 0.0
    %73 = vmatprep.subr.mxu0 0.0
    %74 = vmatpush1.msra.mxu0 0.0
    %75 = vmatprep.subr.mxu0 0.0
    %76 = vmatpush1.msra.mxu0 0.0
    %77 = vmatprep.subr.mxu0 0.0
    %78 = vmatpush1.msra.mxu0 0.0
    %79 = vmatprep.subr.mxu0 0.0
    %80 = vmatpush1.msra.mxu0 0.0
    %81 = vmatprep.subr.mxu0 0.0
    %82 = vmatpush1.msra.mxu0 0.0
    %83 = vmatprep.subr.mxu0 0.0
    %84 = vmatpush1.msra.mxu0 0.0
    %85 = vmatprep.subr.mxu0 0.0
    %86 = vmatpush1.msra.mxu0 0.0
    %87 = vmatprep.subr.mxu0 0.0
    %88 = vmatpush1.msra.mxu0 0.0
    %89 = vmatprep.subr.mxu0 0.0
    %90 = vmatpush1.msra.mxu0 0.0
    %91 = vmatprep.subr.mxu0 0.0
    %92 = vmatpush1.msra.mxu0 0.0
    %93 = vmatprep.subr.mxu0 0.0
    %94 = vmatpush1.msra.mxu0 0.0
    %95 = vmatprep.subr.mxu0 0.0
    %96 = vmatpush1.msra.mxu0 0.0
    %97 = vmatprep.subr.mxu0 0.0
    %98 = vmatpush1.msra.mxu0 0.0
    %99 = vmatprep.subr.mxu0 0.0
    %100 = vmatpush1.msra.mxu0 0.0
    %101 = vmatprep.subr.mxu0 0.0
    %102 = vmatpush1.msra.mxu0 0.0
    %103 = vmatprep.subr.mxu0 0.0
    %104 = vmatpush1.msra.mxu0 0.0
    %105 = vmatprep.subr.mxu0 0.0
    %106 = vmatpush1.msra.mxu0 0.0
    %107 = vmatprep.subr.mxu0 0.0
    %108 = vmatpush1.msra.mxu0 0.0
    %109 = vmatprep.subr.mxu0 0.0
    %110 = vmatpush1.msra.mxu0 0.0
    %111 = vmatprep.subr.mxu0 0.0
    %112 = vmatpush1.msra.mxu0 0.0
    %113 = vmatprep.subr.mxu0 0.0
    %114 = vmatpush1.msra.mxu0 0.0
    %115 = vmatprep.subr.mxu0 0.0
    %116 = vmatpush1.msra.mxu0 0.0
    %117 = vmatprep.subr.mxu0 0.0
    %118 = vmatpush1.msra.mxu0 0.0
    %119 = vmatprep.subr.mxu0 0.0
    %120 = vmatpush1.msra.mxu0 0.0
    %121 = vmatprep.subr.mxu0 0.0
    %122 = vmatpush1.msra.mxu0 0.0
    %123 = vmatprep.mubr.f32.mxu0 0.0
    %124 = vmatmul.mubr.f32.gmra.mrb[0].mxu0 %v50
    %v125 = vpop.f32.mrb[0].mxu0
    %v126 = vadd.f32 %v47, %v125
    %v127 = vpop.f32.mrb[0].mxu0
    %128 = vmatprep.mubr.f32.mxu0 0.0
    %129 = vmatmul.mubr.f32.gmra.mrb[0].mxu0 %v53
    %v130 = vpop.f32.mrb[0].mxu0
    %v131 = vadd.f32 %v47, %v130
    %v132 = vpop.f32.mrb[0].mxu0
    %133 = vdwg.mxu0
    %v134 = vld [vmem:[%s3] sm:$0xff]
    %v135 = vld [vmem:[%s3 + $0x8] sm:$0x1]
    %vm136 = vcmask 261120
    %v137 = vsel %vm136, %v126, 0.0
    %138 = vadd.xlane.f32.xlu0 %v137
    %v139 = vpop.xlane.xlu0 %138
    %v140 = vsel %vm136, %v131, 0.0
    %141 = vadd.xlane.f32.xlu0 %v140
    %v142 = vpop.xlane.xlu0 %141
    %v143 = vrcp.pop 32.0
    %v144 = vmul.f32 %v139, %v143
    %v145 = vmul.f32 %v142, %v143
    %v146 = vsub.f32 %v126, %v144
    %v147 = vsub.f32 %v131, %v145
    %v148 = vmul.f32 %v146, %v146
    %v149 = vmul.f32 %v147, %v147
    %v150 = vsel %vm136, %v148, 0.0
    %151 = vadd.xlane.f32.xlu0 %v150
    %v152 = vpop.xlane.xlu0 %151
    %v153 = vsel %vm136, %v149, 0.0
    %154 = vadd.xlane.f32.xlu0 %v153
    %v155 = vpop.xlane.xlu0 %154
    %v156 = vmul.f32 %v152, %v143
    %v157 = vmul.f32 %v155, %v143
    %v158 = vadd.f32 %v156, 1e-05
    %v159 = vadd.f32 %v157, 1e-05
    %v160 = vrsqrt.pop %v158
    %v161 = vrsqrt.pop %v159
    %v162 = vmul.f32 %v146, %v160
    %v163 = vmul.f32 %v147, %v161
    %v164 = vlaneseq
    %v165 = vshrl.u32 %v164, 7
    %v166 = vsub.s32 0, %v165
    %v167 = vrot.slane %v134, %v166
    %v168 = vmul.f32 %v162, %v167
    %v169 = vmul.f32 %v163, %v167
    %v170 = vlaneseq
    %v171 = vshrl.u32 %v170, 7
    %v172 = vsub.s32 1, %v171
    %v173 = vrot.slane %v134, %v172
    %v174 = vadd.f32 %v168, %v173
    %v175 = vadd.f32 %v169, %v173
    %v176 = vld [vmem:[%s4] sm:$0xff]
    %v177 = vld [vmem:[%s4 + $0x8] sm:$0xff]
    %v178 = vld [vmem:[%s4 + $0x10] sm:$0xff]
    %v179 = vld [vmem:[%s4 + $0x18] sm:$0xff]
    %v181 = vsel %vm136, %v174, 0
    %v184 = vsel %vm136, %v175, 0
    %186 = vmatprep.subr.mxu0 0.0
    %187 = vmatpush1.msra.mxu0 %v176
    %188 = vmatprep.subr.mxu0 0.0
    %189 = vmatpush1.msra.mxu0 %v177
    %190 = vmatprep.subr.mxu0 0.0
    %191 = vmatpush1.msra.mxu0 %v178
    %192 = vmatprep.subr.mxu0 0.0
    %193 = vmatpush1.msra.mxu0 %v179
    %194 = vmatprep.subr.mxu0 0.0
    %195 = vmatpush1.msra.mxu0 0.0
    %196 = vmatprep.subr.mxu0 0.0
    %197 = vmatpush1.msra.mxu0 0.0
    %198 = vmatprep.subr.mxu0 0.0
    %199 = vmatpush1.msra.mxu0 0.0
    %200 = vmatprep.subr.mxu0 0.0
    %201 = vmatpush1.msra.mxu0 0.0
    %202 = vmatprep.subr.mxu0 0.0
    %203 = vmatpush1.msra.mxu0 0.0
    %204 = vmatprep.subr.mxu0 0.0
    %205 = vmatpush1.msra.mxu0 0.0
    %206 = vmatprep.subr.mxu0 0.0
    %207 = vmatpush1.msra.mxu0 0.0
    %208 = vmatprep.subr.mxu0 0.0
    %209 = vmatpush1.msra.mxu0 0.0
    %210 = vmatprep.subr.mxu0 0.0
    %211 = vmatpush1.msra.mxu0 0.0
    %212 = vmatprep.subr.mxu0 0.0
    %213 = vmatpush1.msra.mxu0 0.0
    %214 = vmatprep.subr.mxu0 0.0
    %215 = vmatpush1.msra.mxu0 0.0
    %216 = vmatprep.subr.mxu0 0.0
    %217 = vmatpush1.msra.mxu0 0.0
    %218 = vmatprep.subr.mxu0 0.0
    %219 = vmatpush1.msra.mxu0 0.0
    %220 = vmatprep.subr.mxu0 0.0
    %221 = vmatpush1.msra.mxu0 0.0
    %222 = vmatprep.subr.mxu0 0.0
    %223 = vmatpush1.msra.mxu0 0.0
    %224 = vmatprep.subr.mxu0 0.0
    %225 = vmatpush1.msra.mxu0 0.0
    %226 = vmatprep.subr.mxu0 0.0
    %227 = vmatpush1.msra.mxu0 0.0
    %228 = vmatprep.subr.mxu0 0.0
    %229 = vmatpush1.msra.mxu0 0.0
    %230 = vmatprep.subr.mxu0 0.0
    %231 = vmatpush1.msra.mxu0 0.0
    %232 = vmatprep.subr.mxu0 0.0
    %233 = vmatpush1.msra.mxu0 0.0
    %234 = vmatprep.subr.mxu0 0.0
    %235 = vmatpush1.msra.mxu0 0.0
    %236 = vmatprep.subr.mxu0 0.0
    %237 = vmatpush1.msra.mxu0 0.0
    %238 = vmatprep.subr.mxu0 0.0
    %239 = vmatpush1.msra.mxu0 0.0
    %240 = vmatprep.subr.mxu0 0.0
    %241 = vmatpush1.msra.mxu0 0.0
    %242 = vmatprep.subr.mxu0 0.0
    %243 = vmatpush1.msra.mxu0 0.0
    %244 = vmatprep.subr.mxu0 0.0
    %245 = vmatpush1.msra.mxu0 0.0
    %246 = vmatprep.subr.mxu0 0.0
    %247 = vmatpush1.msra.mxu0 0.0
    %248 = vmatprep.subr.mxu0 0.0
    %249 = vmatpush1.msra.mxu0 0.0
    %250 = vmatprep.mubr.f32.mxu0 0.0
    %251 = vmatmul.mubr.f32.gmra.mrb[0].mxu0 %v181
    %v252 = vpop.f32.mrb[0].mxu0
    %v253 = vadd.f32 0.0, %v252
    %v254 = vpop.f32.mrb[0].mxu0
    %255 = vmatprep.mubr.f32.mxu0 0.0
    %256 = vmatmul.mubr.f32.gmra.mrb[0].mxu0 %v184
    %v257 = vpop.f32.mrb[0].mxu0
    %v258 = vadd.f32 0.0, %v257
    %v259 = vpop.f32.mrb[0].mxu0
    %260 = vdwg.mxu0
    %v261 = vlaneseq
    %v262 = vshrl.u32 %v261, 7
    %v263 = vsub.s32 2, %v262
    %v264 = vrot.slane %v134, %v263
    %v265 = vadd.f32 %v253, %v264
    %v266 = vadd.f32 %v258, %v264
    %v267 = vlaneseq
    %v268 = vshrl.u32 %v267, 7
    %v269 = vsub.s32 3, %v268
    %v270 = vrot.slane %v134, %v269
    %272 = vrot.lane.b32.xlu0 %v270, 32
    %v273 = vpop.permute.xlu0 %272
    %v275 = vadd.f32 %v253, %v273
    %v276 = vadd.f32 %v258, %v273
    %v277 = vlaneseq
    %v278 = vshrl.u32 %v277, 7
    %v279 = vsub.s32 4, %v278
    %v280 = vrot.slane %v134, %v279
    %282 = vrot.lane.b32.xlu0 %v280, 64
    %v283 = vpop.permute.xlu0 %282
    %v285 = vadd.f32 %v253, %v283
    %v286 = vadd.f32 %v258, %v283
    %288 = vrot.lane.b32.xlu0 %v275, 96
    %v289 = vpop.permute.xlu0 %288
    %vm290 = vcmask 64512
    %v292 = vsel %vm290, %v265, 0
    %v294 = vsel %vm290, %v289, 0
    %296 = vmatprep.subr.mxu0 0.0
    %297 = vmatpush1.xpose.msra.mxu0 %v294
    %298 = vmatprep.subr.mxu0 0.0
    %299 = vmatpush1.xpose.msra.mxu0 0.0
    %300 = vmatprep.subr.mxu0 0.0
    %301 = vmatpush1.xpose.msra.mxu0 0.0
    %302 = vmatprep.subr.mxu0 0.0
    %303 = vmatpush1.xpose.msra.mxu0 0.0
    %304 = vmatprep.subr.mxu0 0.0
    %305 = vmatpush1.xpose.msra.mxu0 0.0
    %306 = vmatprep.subr.mxu0 0.0
    %307 = vmatpush1.xpose.msra.mxu0 0.0
    %308 = vmatprep.subr.mxu0 0.0
    %309 = vmatpush1.xpose.msra.mxu0 0.0
    %310 = vmatprep.subr.mxu0 0.0
    %311 = vmatpush1.xpose.msra.mxu0 0.0
    %312 = vmatprep.subr.mxu0 0.0
    %313 = vmatpush1.xpose.msra.mxu0 0.0
    %314 = vmatprep.subr.mxu0 0.0
    %315 = vmatpush1.xpose.msra.mxu0 0.0
    %316 = vmatprep.subr.mxu0 0.0
    %317 = vmatpush1.xpose.msra.mxu0 0.0
    %318 = vmatprep.subr.mxu0 0.0
    %319 = vmatpush1.xpose.msra.mxu0 0.0
    %320 = vmatprep.subr.mxu0 0.0
    %321 = vmatpush1.xpose.msra.mxu0 0.0
    %322 = vmatprep.subr.mxu0 0.0
    %323 = vmatpush1.xpose.msra.mxu0 0.0
    %324 = vmatprep.subr.mxu0 0.0
    %325 = vmatpush1.xpose.msra.mxu0 0.0
    %326 = vmatprep.subr.mxu0 0.0
    %327 = vmatpush1.xpose.msra.mxu0 0.0
    %328 = vmatprep.subr.mxu0 0.0
    %329 = vmatpush1.xpose.msra.mxu0 0.0
    %330 = vmatprep.subr.mxu0 0.0
    %331 = vmatpush1.xpose.msra.mxu0 0.0
    %332 = vmatprep.subr.mxu0 0.0
    %333 = vmatpush1.xpose.msra.mxu0 0.0
    %334 = vmatprep.subr.mxu0 0.0
    %335 = vmatpush1.xpose.msra.mxu0 0.0
    %336 = vmatprep.subr.mxu0 0.0
    %337 = vmatpush1.xpose.msra.mxu0 0.0
    %338 = vmatprep.subr.mxu0 0.0
    %339 = vmatpush1.xpose.msra.mxu0 0.0
    %340 = vmatprep.subr.mxu0 0.0
    %341 = vmatpush1.xpose.msra.mxu0 0.0
    %342 = vmatprep.subr.mxu0 0.0
    %343 = vmatpush1.xpose.msra.mxu0 0.0
    %344 = vmatprep.subr.mxu0 0.0
    %345 = vmatpush1.xpose.msra.mxu0 0.0
    %346 = vmatprep.subr.mxu0 0.0
    %347 = vmatpush1.xpose.msra.mxu0 0.0
    %348 = vmatprep.subr.mxu0 0.0
    %349 = vmatpush1.xpose.msra.mxu0 0.0
    %350 = vmatprep.subr.mxu0 0.0
    %351 = vmatpush1.xpose.msra.mxu0 0.0
    %352 = vmatprep.subr.mxu0 0.0
    %353 = vmatpush1.xpose.msra.mxu0 0.0
    %354 = vmatprep.subr.mxu0 0.0
    %355 = vmatpush1.xpose.msra.mxu0 0.0
    %356 = vmatprep.subr.mxu0 0.0
    %357 = vmatpush1.xpose.msra.mxu0 0.0
    %358 = vmatprep.subr.mxu0 0.0
    %359 = vmatpush1.xpose.msra.mxu0 0.0
    %360 = vmatprep.mubr.f32.mxu0 0.0
    %361 = vmatmul.mubr.f32.gmra.mrb[0].mxu0 %v292
    %v362 = vpop.f32.mrb[0].mxu0
    %v363 = vadd.f32 0.0, %v362
    %v364 = vpop.f32.mrb[0].mxu0
    %365 = vdwg.mxu0
    %367 = vrot.lane.b32.xlu0 %v276, 96
    %v368 = vpop.permute.xlu0 %367
    %v370 = vsel %vm290, %v266, 0
    %v372 = vsel %vm290, %v368, 0
    %374 = vmatprep.subr.mxu0 0.0
    %375 = vmatpush1.xpose.msra.mxu0 %v372
    %376 = vmatprep.subr.mxu0 0.0
    %377 = vmatpush1.xpose.msra.mxu0 0.0
    %378 = vmatprep.subr.mxu0 0.0
    %379 = vmatpush1.xpose.msra.mxu0 0.0
    %380 = vmatprep.subr.mxu0 0.0
    %381 = vmatpush1.xpose.msra.mxu0 0.0
    %382 = vmatprep.subr.mxu0 0.0
    %383 = vmatpush1.xpose.msra.mxu0 0.0
    %384 = vmatprep.subr.mxu0 0.0
    %385 = vmatpush1.xpose.msra.mxu0 0.0
    %386 = vmatprep.subr.mxu0 0.0
    %387 = vmatpush1.xpose.msra.mxu0 0.0
    %388 = vmatprep.subr.mxu0 0.0
    %389 = vmatpush1.xpose.msra.mxu0 0.0
    %390 = vmatprep.subr.mxu0 0.0
    %391 = vmatpush1.xpose.msra.mxu0 0.0
    %392 = vmatprep.subr.mxu0 0.0
    %393 = vmatpush1.xpose.msra.mxu0 0.0
    %394 = vmatprep.subr.mxu0 0.0
    %395 = vmatpush1.xpose.msra.mxu0 0.0
    %396 = vmatprep.subr.mxu0 0.0
    %397 = vmatpush1.xpose.msra.mxu0 0.0
    %398 = vmatprep.subr.mxu0 0.0
    %399 = vmatpush1.xpose.msra.mxu0 0.0
    %400 = vmatprep.subr.mxu0 0.0
    %401 = vmatpush1.xpose.msra.mxu0 0.0
    %402 = vmatprep.subr.mxu0 0.0
    %403 = vmatpush1.xpose.msra.mxu0 0.0
    %404 = vmatprep.subr.mxu0 0.0
    %405 = vmatpush1.xpose.msra.mxu0 0.0
    %406 = vmatprep.subr.mxu0 0.0
    %407 = vmatpush1.xpose.msra.mxu0 0.0
    %408 = vmatprep.subr.mxu0 0.0
    %409 = vmatpush1.xpose.msra.mxu0 0.0
    %410 = vmatprep.subr.mxu0 0.0
    %411 = vmatpush1.xpose.msra.mxu0 0.0
    %412 = vmatprep.subr.mxu0 0.0
    %413 = vmatpush1.xpose.msra.mxu0 0.0
    %414 = vmatprep.subr.mxu0 0.0
    %415 = vmatpush1.xpose.msra.mxu0 0.0
    %416 = vmatprep.subr.mxu0 0.0
    %417 = vmatpush1.xpose.msra.mxu0 0.0
    %418 = vmatprep.subr.mxu0 0.0
    %419 = vmatpush1.xpose.msra.mxu0 0.0
    %420 = vmatprep.subr.mxu0 0.0
    %421 = vmatpush1.xpose.msra.mxu0 0.0
    %422 = vmatprep.subr.mxu0 0.0
    %423 = vmatpush1.xpose.msra.mxu0 0.0
    %424 = vmatprep.subr.mxu0 0.0
    %425 = vmatpush1.xpose.msra.mxu0 0.0
    %426 = vmatprep.subr.mxu0 0.0
    %427 = vmatpush1.xpose.msra.mxu0 0.0
    %428 = vmatprep.subr.mxu0 0.0
    %429 = vmatpush1.xpose.msra.mxu0 0.0
    %430 = vmatprep.subr.mxu0 0.0
    %431 = vmatpush1.xpose.msra.mxu0 0.0
    %432 = vmatprep.subr.mxu0 0.0
    %433 = vmatpush1.xpose.msra.mxu0 0.0
    %434 = vmatprep.subr.mxu0 0.0
    %435 = vmatpush1.xpose.msra.mxu0 0.0
    %436 = vmatprep.subr.mxu0 0.0
    %437 = vmatpush1.xpose.msra.mxu0 0.0
    %438 = vmatprep.mubr.f32.mxu0 0.0
    %439 = vmatmul.mubr.f32.gmra.mrb[0].mxu0 %v370
    %v440 = vpop.f32.mrb[0].mxu0
    %v441 = vadd.f32 0.0, %v440
    %v442 = vpop.f32.mrb[0].mxu0
    %443 = vdwg.mxu0
    %v444 = vmul.f32 %v363, 0.35355338
    %v445 = vmul.f32 %v441, 0.35355338
    %v446 = vsel %vm290, %v444, -inf
    %447 = vmax.xlane.f32.xlu0 %v446
    %v448 = vpop.xlane.xlu0 %447
    %v449 = vsel %vm290, %v445, -inf
    %450 = vmax.xlane.f32.xlu0 %v449
    %v451 = vpop.xlane.xlu0 %450
    %v452 = vsub.f32 %v444, %v448
    %v453 = vsub.f32 %v445, %v451
    %v454 = vmul.f32 %v452, 1.442695
    %v455 = vpow.pop %v454
    %v456 = vmul.f32 %v453, 1.442695
    %v457 = vpow.pop %v456
    %v458 = vsel %vm290, %v455, 0.0
    %459 = vadd.xlane.f32.xlu0 %v458
    %v460 = vpop.xlane.xlu0 %459
    %v461 = vsel %vm290, %v457, 0.0
    %462 = vadd.xlane.f32.xlu0 %v461
    %v463 = vpop.xlane.xlu0 %462
    %v464 = vrcp.pop %v460
    %v465 = vmul.f32 %v455, %v464
    %v466 = vrcp.pop %v463
    %v467 = vmul.f32 %v457, %v466
    %469 = vrot.lane.b32.xlu0 %v285, 64
    %v470 = vpop.permute.xlu0 %469
    %v473 = vsel %vm290, %v465, 0
    %475 = vmatprep.subr.mxu0 0.0
    %476 = vmatpush1.msra.mxu0 %v470
    %477 = vmatprep.subr.mxu0 0.0
    %478 = vmatpush1.msra.mxu0 0.0
    %479 = vmatprep.subr.mxu0 0.0
    %480 = vmatpush1.msra.mxu0 0.0
    %481 = vmatprep.subr.mxu0 0.0
    %482 = vmatpush1.msra.mxu0 0.0
    %483 = vmatprep.subr.mxu0 0.0
    %484 = vmatpush1.msra.mxu0 0.0
    %485 = vmatprep.subr.mxu0 0.0
    %486 = vmatpush1.msra.mxu0 0.0
    %487 = vmatprep.subr.mxu0 0.0
    %488 = vmatpush1.msra.mxu0 0.0
    %489 = vmatprep.subr.mxu0 0.0
    %490 = vmatpush1.msra.mxu0 0.0
    %491 = vmatprep.subr.mxu0 0.0
    %492 = vmatpush1.msra.mxu0 0.0
    %493 = vmatprep.subr.mxu0 0.0
    %494 = vmatpush1.msra.mxu0 0.0
    %495 = vmatprep.subr.mxu0 0.0
    %496 = vmatpush1.msra.mxu0 0.0
    %497 = vmatprep.subr.mxu0 0.0
    %498 = vmatpush1.msra.mxu0 0.0
    %499 = vmatprep.subr.mxu0 0.0
    %500 = vmatpush1.msra.mxu0 0.0
    %501 = vmatprep.subr.mxu0 0.0
    %502 = vmatpush1.msra.mxu0 0.0
    %503 = vmatprep.subr.mxu0 0.0
    %504 = vmatpush1.msra.mxu0 0.0
    %505 = vmatprep.subr.mxu0 0.0
    %506 = vmatpush1.msra.mxu0 0.0
    %507 = vmatprep.subr.mxu0 0.0
    %508 = vmatpush1.msra.mxu0 0.0
    %509 = vmatprep.subr.mxu0 0.0
    %510 = vmatpush1.msra.mxu0 0.0
    %511 = vmatprep.subr.mxu0 0.0
    %512 = vmatpush1.msra.mxu0 0.0
    %513 = vmatprep.subr.mxu0 0.0
    %514 = vmatpush1.msra.mxu0 0.0
    %515 = vmatprep.subr.mxu0 0.0
    %516 = vmatpush1.msra.mxu0 0.0
    %517 = vmatprep.subr.mxu0 0.0
    %518 = vmatpush1.msra.mxu0 0.0
    %519 = vmatprep.subr.mxu0 0.0
    %520 = vmatpush1.msra.mxu0 0.0
    %521 = vmatprep.subr.mxu0 0.0
    %522 = vmatpush1.msra.mxu0 0.0
    %523 = vmatprep.subr.mxu0 0.0
    %524 = vmatpush1.msra.mxu0 0.0
    %525 = vmatprep.subr.mxu0 0.0
    %526 = vmatpush1.msra.mxu0 0.0
    %527 = vmatprep.subr.mxu0 0.0
    %528 = vmatpush1.msra.mxu0 0.0
    %529 = vmatprep.subr.mxu0 0.0
    %530 = vmatpush1.msra.mxu0 0.0
    %531 = vmatprep.subr.mxu0 0.0
    %532 = vmatpush1.msra.mxu0 0.0
    %533 = vmatprep.subr.mxu0 0.0
    %534 = vmatpush1.msra.mxu0 0.0
    %535 = vmatprep.subr.mxu0 0.0
    %536 = vmatpush1.msra.mxu0 0.0
    %537 = vmatprep.subr.mxu0 0.0
    %538 = vmatpush1.msra.mxu0 0.0
    %539 = vmatprep.mubr.f32.mxu0 0.0
    %540 = vmatmul.mubr.f32.gmra.mrb[0].mxu0 %v473
    %v541 = vpop.f32.mrb[0].mxu0
    %v542 = vadd.f32 0.0, %v541
    %v543 = vpop.f32.mrb[0].mxu0
    %544 = vdwg.mxu0
    %546 = vrot.lane.b32.xlu0 %v286, 64
    %v547 = vpop.permute.xlu0 %546
    %v550 = vsel %vm290, %v467, 0
    %552 = vmatprep.subr.mxu0 0.0
    %553 = vmatpush1.msra.mxu0 %v547
    %554 = vmatprep.subr.mxu0 0.0
    %555 = vmatpush1.msra.mxu0 0.0
    %556 = vmatprep.subr.mxu0 0.0
    %557 = vmatpush1.msra.mxu0 0.0
    %558 = vmatprep.subr.mxu0 0.0
    %559 = vmatpush1.msra.mxu0 0.0
    %560 = vmatprep.subr.mxu0 0.0
    %561 = vmatpush1.msra.mxu0 0.0
    %562 = vmatprep.subr.mxu0 0.0
    %563 = vmatpush1.msra.mxu0 0.0
    %564 = vmatprep.subr.mxu0 0.0
    %565 = vmatpush1.msra.mxu0 0.0
    %566 = vmatprep.subr.mxu0 0.0
    %567 = vmatpush1.msra.mxu0 0.0
    %568 = vmatprep.subr.mxu0 0.0
    %569 = vmatpush1.msra.mxu0 0.0
    %570 = vmatprep.subr.mxu0 0.0
    %571 = vmatpush1.msra.mxu0 0.0
    %572 = vmatprep.subr.mxu0 0.0
    %573 = vmatpush1.msra.mxu0 0.0
    %574 = vmatprep.subr.mxu0 0.0
    %575 = vmatpush1.msra.mxu0 0.0
    %576 = vmatprep.subr.mxu0 0.0
    %577 = vmatpush1.msra.mxu0 0.0
    %578 = vmatprep.subr.mxu0 0.0
    %579 = vmatpush1.msra.mxu0 0.0
    %580 = vmatprep.subr.mxu0 0.0
    %581 = vmatpush1.msra.mxu0 0.0
    %582 = vmatprep.subr.mxu0 0.0
    %583 = vmatpush1.msra.mxu0 0.0
    %584 = vmatprep.subr.mxu0 0.0
    %585 = vmatpush1.msra.mxu0 0.0
    %586 = vmatprep.subr.mxu0 0.0
    %587 = vmatpush1.msra.mxu0 0.0
    %588 = vmatprep.subr.mxu0 0.0
    %589 = vmatpush1.msra.mxu0 0.0
    %590 = vmatprep.subr.mxu0 0.0
    %591 = vmatpush1.msra.mxu0 0.0
    %592 = vmatprep.subr.mxu0 0.0
    %593 = vmatpush1.msra.mxu0 0.0
    %594 = vmatprep.subr.mxu0 0.0
    %595 = vmatpush1.msra.mxu0 0.0
    %596 = vmatprep.subr.mxu0 0.0
    %597 = vmatpush1.msra.mxu0 0.0
    %598 = vmatprep.subr.mxu0 0.0
    %599 = vmatpush1.msra.mxu0 0.0
    %600 = vmatprep.subr.mxu0 0.0
    %601 = vmatpush1.msra.mxu0 0.0
    %602 = vmatprep.subr.mxu0 0.0
    %603 = vmatpush1.msra.mxu0 0.0
    %604 = vmatprep.subr.mxu0 0.0
    %605 = vmatpush1.msra.mxu0 0.0
    %606 = vmatprep.subr.mxu0 0.0
    %607 = vmatpush1.msra.mxu0 0.0
    %608 = vmatprep.subr.mxu0 0.0
    %609 = vmatpush1.msra.mxu0 0.0
    %610 = vmatprep.subr.mxu0 0.0
    %611 = vmatpush1.msra.mxu0 0.0
    %612 = vmatprep.subr.mxu0 0.0
    %613 = vmatpush1.msra.mxu0 0.0
    %614 = vmatprep.subr.mxu0 0.0
    %615 = vmatpush1.msra.mxu0 0.0
    %616 = vmatprep.mubr.f32.mxu0 0.0
    %617 = vmatmul.mubr.f32.gmra.mrb[0].mxu0 %v550
    %v618 = vpop.f32.mrb[0].mxu0
    %v619 = vadd.f32 0.0, %v618
    %v620 = vpop.f32.mrb[0].mxu0
    %621 = vdwg.mxu0
    %622 = vrot.lane.b32.xlu0 %v265, 120
    %v623 = vpop.permute.xlu0 %622
    %624 = vrot.lane.b32.xlu0 %v275, 88
    %v625 = vpop.permute.xlu0 %624
    %v626 = vsel %vm290, %v623, 0
    %v628 = vsel %vm290, %v625, 0
    %630 = vmatprep.subr.mxu0 0.0
    %631 = vmatpush1.xpose.msra.mxu0 %v628
    %632 = vmatprep.subr.mxu0 0.0
    %633 = vmatpush1.xpose.msra.mxu0 0.0
    %634 = vmatprep.subr.mxu0 0.0
    %635 = vmatpush1.xpose.msra.mxu0 0.0
    %636 = vmatprep.subr.mxu0 0.0
    %637 = vmatpush1.xpose.msra.mxu0 0.0
    %638 = vmatprep.subr.mxu0 0.0
    %639 = vmatpush1.xpose.msra.mxu0 0.0
    %640 = vmatprep.subr.mxu0 0.0
    %641 = vmatpush1.xpose.msra.mxu0 0.0
    %642 = vmatprep.subr.mxu0 0.0
    %643 = vmatpush1.xpose.msra.mxu0 0.0
    %644 = vmatprep.subr.mxu0 0.0
    %645 = vmatpush1.xpose.msra.mxu0 0.0
    %646 = vmatprep.subr.mxu0 0.0
    %647 = vmatpush1.xpose.msra.mxu0 0.0
    %648 = vmatprep.subr.mxu0 0.0
    %649 = vmatpush1.xpose.msra.mxu0 0.0
    %650 = vmatprep.subr.mxu0 0.0
    %651 = vmatpush1.xpose.msra.mxu0 0.0
    %652 = vmatprep.subr.mxu0 0.0
    %653 = vmatpush1.xpose.msra.mxu0 0.0
    %654 = vmatprep.subr.mxu0 0.0
    %655 = vmatpush1.xpose.msra.mxu0 0.0
    %656 = vmatprep.subr.mxu0 0.0
    %657 = vmatpush1.xpose.msra.mxu0 0.0
    %658 = vmatprep.subr.mxu0 0.0
    %659 = vmatpush1.xpose.msra.mxu0 0.0
    %660 = vmatprep.subr.mxu0 0.0
    %661 = vmatpush1.xpose.msra.mxu0 0.0
    %662 = vmatprep.subr.mxu0 0.0
    %663 = vmatpush1.xpose.msra.mxu0 0.0
    %664 = vmatprep.subr.mxu0 0.0
    %665 = vmatpush1.xpose.msra.mxu0 0.0
    %666 = vmatprep.subr.mxu0 0.0
    %667 = vmatpush1.xpose.msra.mxu0 0.0
    %668 = vmatprep.subr.mxu0 0.0
    %669 = vmatpush1.xpose.msra.mxu0 0.0
    %670 = vmatprep.subr.mxu0 0.0
    %671 = vmatpush1.xpose.msra.mxu0 0.0
    %672 = vmatprep.subr.mxu0 0.0
    %673 = vmatpush1.xpose.msra.mxu0 0.0
    %674 = vmatprep.subr.mxu0 0.0
    %675 = vmatpush1.xpose.msra.mxu0 0.0
    %676 = vmatprep.subr.mxu0 0.0
    %677 = vmatpush1.xpose.msra.mxu0 0.0
    %678 = vmatprep.subr.mxu0 0.0
    %679 = vmatpush1.xpose.msra.mxu0 0.0
    %680 = vmatprep.subr.mxu0 0.0
    %681 = vmatpush1.xpose.msra.mxu0 0.0
    %682 = vmatprep.subr.mxu0 0.0
    %683 = vmatpush1.xpose.msra.mxu0 0.0
    %684 = vmatprep.subr.mxu0 0.0
    %685 = vmatpush1.xpose.msra.mxu0 0.0
    %686 = vmatprep.subr.mxu0 0.0
    %687 = vmatpush1.xpose.msra.mxu0 0.0
    %688 = vmatprep.subr.mxu0 0.0
    %689 = vmatpush1.xpose.msra.mxu0 0.0
    %690 = vmatprep.subr.mxu0 0.0
    %691 = vmatpush1.xpose.msra.mxu0 0.0
    %692 = vmatprep.subr.mxu0 0.0
    %693 = vmatpush1.xpose.msra.mxu0 0.0
    %694 = vmatprep.mubr.f32.mxu0 0.0
    %695 = vmatmul.mubr.f32.gmra.mrb[0].mxu0 %v626
    %v696 = vpop.f32.mrb[0].mxu0
    %v697 = vadd.f32 0.0, %v696
    %v698 = vpop.f32.mrb[0].mxu0
    %699 = vdwg.mxu0
    %700 = vrot.lane.b32.xlu0 %v266, 120
    %v701 = vpop.permute.xlu0 %700
    %702 = vrot.lane.b32.xlu0 %v276, 88
    %v703 = vpop.permute.xlu0 %702
    %v704 = vsel %vm290, %v701, 0
    %v706 = vsel %vm290, %v703, 0
    %708 = vmatprep.subr.mxu0 0.0
    %709 = vmatpush1.xpose.msra.mxu0 %v706
    %710 = vmatprep.subr.mxu0 0.0
    %711 = vmatpush1.xpose.msra.mxu0 0.0
    %712 = vmatprep.subr.mxu0 0.0
    %713 = vmatpush1.xpose.msra.mxu0 0.0
    %714 = vmatprep.subr.mxu0 0.0
    %715 = vmatpush1.xpose.msra.mxu0 0.0
    %716 = vmatprep.subr.mxu0 0.0
    %717 = vmatpush1.xpose.msra.mxu0 0.0
    %718 = vmatprep.subr.mxu0 0.0
    %719 = vmatpush1.xpose.msra.mxu0 0.0
    %720 = vmatprep.subr.mxu0 0.0
    %721 = vmatpush1.xpose.msra.mxu0 0.0
    %722 = vmatprep.subr.mxu0 0.0
    %723 = vmatpush1.xpose.msra.mxu0 0.0
    %724 = vmatprep.subr.mxu0 0.0
    %725 = vmatpush1.xpose.msra.mxu0 0.0
    %726 = vmatprep.subr.mxu0 0.0
    %727 = vmatpush1.xpose.msra.mxu0 0.0
    %728 = vmatprep.subr.mxu0 0.0
    %729 = vmatpush1.xpose.msra.mxu0 0.0
    %730 = vmatprep.subr.mxu0 0.0
    %731 = vmatpush1.xpose.msra.mxu0 0.0
    %732 = vmatprep.subr.mxu0 0.0
    %733 = vmatpush1.xpose.msra.mxu0 0.0
    %734 = vmatprep.subr.mxu0 0.0
    %735 = vmatpush1.xpose.msra.mxu0 0.0
    %736 = vmatprep.subr.mxu0 0.0
    %737 = vmatpush1.xpose.msra.mxu0 0.0
    %738 = vmatprep.subr.mxu0 0.0
    %739 = vmatpush1.xpose.msra.mxu0 0.0
    %740 = vmatprep.subr.mxu0 0.0
    %741 = vmatpush1.xpose.msra.mxu0 0.0
    %742 = vmatprep.subr.mxu0 0.0
    %743 = vmatpush1.xpose.msra.mxu0 0.0
    %744 = vmatprep.subr.mxu0 0.0
    %745 = vmatpush1.xpose.msra.mxu0 0.0
    %746 = vmatprep.subr.mxu0 0.0
    %747 = vmatpush1.xpose.msra.mxu0 0.0
    %748 = vmatprep.subr.mxu0 0.0
    %749 = vmatpush1.xpose.msra.mxu0 0.0
    %750 = vmatprep.subr.mxu0 0.0
    %751 = vmatpush1.xpose.msra.mxu0 0.0
    %752 = vmatprep.subr.mxu0 0.0
    %753 = vmatpush1.xpose.msra.mxu0 0.0
    %754 = vmatprep.subr.mxu0 0.0
    %755 = vmatpush1.xpose.msra.mxu0 0.0
    %756 = vmatprep.subr.mxu0 0.0
    %757 = vmatpush1.xpose.msra.mxu0 0.0
    %758 = vmatprep.subr.mxu0 0.0
    %759 = vmatpush1.xpose.msra.mxu0 0.0
    %760 = vmatprep.subr.mxu0 0.0
    %761 = vmatpush1.xpose.msra.mxu0 0.0
    %762 = vmatprep.subr.mxu0 0.0
    %763 = vmatpush1.xpose.msra.mxu0 0.0
    %764 = vmatprep.subr.mxu0 0.0
    %765 = vmatpush1.xpose.msra.mxu0 0.0
    %766 = vmatprep.subr.mxu0 0.0
    %767 = vmatpush1.xpose.msra.mxu0 0.0
    %768 = vmatprep.subr.mxu0 0.0
    %769 = vmatpush1.xpose.msra.mxu0 0.0
    %770 = vmatprep.subr.mxu0 0.0
    %771 = vmatpush1.xpose.msra.mxu0 0.0
    %772 = vmatprep.mubr.f32.mxu0 0.0
    %773 = vmatmul.mubr.f32.gmra.mrb[0].mxu0 %v704
    %v774 = vpop.f32.mrb[0].mxu0
    %v775 = vadd.f32 0.0, %v774
    %v776 = vpop.f32.mrb[0].mxu0
    %777 = vdwg.mxu0
    %v778 = vmul.f32 %v697, 0.35355338
    %v779 = vmul.f32 %v775, 0.35355338
    %v780 = vsel %vm290, %v778, -inf
    %781 = vmax.xlane.f32.xlu0 %v780
    %v782 = vpop.xlane.xlu0 %781
    %v783 = vsel %vm290, %v779, -inf
    %784 = vmax.xlane.f32.xlu0 %v783
    %v785 = vpop.xlane.xlu0 %784
    %v786 = vsub.f32 %v778, %v782
    %v787 = vsub.f32 %v779, %v785
    %v788 = vmul.f32 %v786, 1.442695
    %v789 = vpow.pop %v788
    %v790 = vmul.f32 %v787, 1.442695
    %v791 = vpow.pop %v790
    %v792 = vsel %vm290, %v789, 0.0
    %793 = vadd.xlane.f32.xlu0 %v792
    %v794 = vpop.xlane.xlu0 %793
    %v795 = vsel %vm290, %v791, 0.0
    %796 = vadd.xlane.f32.xlu0 %v795
    %v797 = vpop.xlane.xlu0 %796
    %v798 = vrcp.pop %v794
    %v799 = vmul.f32 %v789, %v798
    %v800 = vrcp.pop %v797
    %v801 = vmul.f32 %v791, %v800
    %802 = vrot.lane.b32.xlu0 %v285, 56
    %v803 = vpop.permute.xlu0 %802
    %v806 = vsel %vm290, %v799, 0
    %808 = vmatprep.subr.mxu0 0.0
    %809 = vmatpush1.msra.mxu0 %v803
    %810 = vmatprep.subr.mxu0 0.0
    %811 = vmatpush1.msra.mxu0 0.0
    %812 = vmatprep.subr.mxu0 0.0
    %813 = vmatpush1.msra.mxu0 0.0
    %814 = vmatprep.subr.mxu0 0.0
    %815 = vmatpush1.msra.mxu0 0.0
    %816 = vmatprep.subr.mxu0 0.0
    %817 = vmatpush1.msra.mxu0 0.0
    %818 = vmatprep.subr.mxu0 0.0
    %819 = vmatpush1.msra.mxu0 0.0
    %820 = vmatprep.subr.mxu0 0.0
    %821 = vmatpush1.msra.mxu0 0.0
    %822 = vmatprep.subr.mxu0 0.0
    %823 = vmatpush1.msra.mxu0 0.0
    %824 = vmatprep.subr.mxu0 0.0
    %825 = vmatpush1.msra.mxu0 0.0
    %826 = vmatprep.subr.mxu0 0.0
    %827 = vmatpush1.msra.mxu0 0.0
    %828 = vmatprep.subr.mxu0 0.0
    %829 = vmatpush1.msra.mxu0 0.0
    %830 = vmatprep.subr.mxu0 0.0
    %831 = vmatpush1.msra.mxu0 0.0
    %832 = vmatprep.subr.mxu0 0.0
    %833 = vmatpush1.msra.mxu0 0.0
    %834 = vmatprep.subr.mxu0 0.0
    %835 = vmatpush1.msra.mxu0 0.0
    %836 = vmatprep.subr.mxu0 0.0
    %837 = vmatpush1.msra.mxu0 0.0
    %838 = vmatprep.subr.mxu0 0.0
    %839 = vmatpush1.msra.mxu0 0.0
    %840 = vmatprep.subr.mxu0 0.0
    %841 = vmatpush1.msra.mxu0 0.0
    %842 = vmatprep.subr.mxu0 0.0
    %843 = vmatpush1.msra.mxu0 0.0
    %844 = vmatprep.subr.mxu0 0.0
    %845 = vmatpush1.msra.mxu0 0.0
    %846 = vmatprep.subr.mxu0 0.0
    %847 = vmatpush1.msra.mxu0 0.0
    %848 = vmatprep.subr.mxu0 0.0
    %849 = vmatpush1.msra.mxu0 0.0
    %850 = vmatprep.subr.mxu0 0.0
    %851 = vmatpush1.msra.mxu0 0.0
    %852 = vmatprep.subr.mxu0 0.0
    %853 = vmatpush1.msra.mxu0 0.0
    %854 = vmatprep.subr.mxu0 0.0
    %855 = vmatpush1.msra.mxu0 0.0
    %856 = vmatprep.subr.mxu0 0.0
    %857 = vmatpush1.msra.mxu0 0.0
    %858 = vmatprep.subr.mxu0 0.0
    %859 = vmatpush1.msra.mxu0 0.0
    %860 = vmatprep.subr.mxu0 0.0
    %861 = vmatpush1.msra.mxu0 0.0
    %862 = vmatprep.subr.mxu0 0.0
    %863 = vmatpush1.msra.mxu0 0.0
    %864 = vmatprep.subr.mxu0 0.0
    %865 = vmatpush1.msra.mxu0 0.0
    %866 = vmatprep.subr.mxu0 0.0
    %867 = vmatpush1.msra.mxu0 0.0
    %868 = vmatprep.subr.mxu0 0.0
    %869 = vmatpush1.msra.mxu0 0.0
    %870 = vmatprep.subr.mxu0 0.0
    %871 = vmatpush1.msra.mxu0 0.0
    %872 = vmatprep.mubr.f32.mxu0 0.0
    %873 = vmatmul.mubr.f32.gmra.mrb[0].mxu0 %v806
    %v874 = vpop.f32.mrb[0].mxu0
    %v875 = vadd.f32 0.0, %v874
    %v876 = vpop.f32.mrb[0].mxu0
    %877 = vdwg.mxu0
    %878 = vrot.lane.b32.xlu0 %v286, 56
    %v879 = vpop.permute.xlu0 %878
    %v882 = vsel %vm290, %v801, 0
    %884 = vmatprep.subr.mxu0 0.0
    %885 = vmatpush1.msra.mxu0 %v879
    %886 = vmatprep.subr.mxu0 0.0
    %887 = vmatpush1.msra.mxu0 0.0
    %888 = vmatprep.subr.mxu0 0.0
    %889 = vmatpush1.msra.mxu0 0.0
    %890 = vmatprep.subr.mxu0 0.0
    %891 = vmatpush1.msra.mxu0 0.0
    %892 = vmatprep.subr.mxu0 0.0
    %893 = vmatpush1.msra.mxu0 0.0
    %894 = vmatprep.subr.mxu0 0.0
    %895 = vmatpush1.msra.mxu0 0.0
    %896 = vmatprep.subr.mxu0 0.0
    %897 = vmatpush1.msra.mxu0 0.0
    %898 = vmatprep.subr.mxu0 0.0
    %899 = vmatpush1.msra.mxu0 0.0
    %900 = vmatprep.subr.mxu0 0.0
    %901 = vmatpush1.msra.mxu0 0.0
    %902 = vmatprep.subr.mxu0 0.0
    %903 = vmatpush1.msra.mxu0 0.0
    %904 = vmatprep.subr.mxu0 0.0
    %905 = vmatpush1.msra.mxu0 0.0
    %906 = vmatprep.subr.mxu0 0.0
    %907 = vmatpush1.msra.mxu0 0.0
    %908 = vmatprep.subr.mxu0 0.0
    %909 = vmatpush1.msra.mxu0 0.0
    %910 = vmatprep.subr.mxu0 0.0
    %911 = vmatpush1.msra.mxu0 0.0
    %912 = vmatprep.subr.mxu0 0.0
    %913 = vmatpush1.msra.mxu0 0.0
    %914 = vmatprep.subr.mxu0 0.0
    %915 = vmatpush1.msra.mxu0 0.0
    %916 = vmatprep.subr.mxu0 0.0
    %917 = vmatpush1.msra.mxu0 0.0
    %918 = vmatprep.subr.mxu0 0.0
    %919 = vmatpush1.msra.mxu0 0.0
    %920 = vmatprep.subr.mxu0 0.0
    %921 = vmatpush1.msra.mxu0 0.0
    %922 = vmatprep.subr.mxu0 0.0
    %923 = vmatpush1.msra.mxu0 0.0
    %924 = vmatprep.subr.mxu0 0.0
    %925 = vmatpush1.msra.mxu0 0.0
    %926 = vmatprep.subr.mxu0 0.0
    %927 = vmatpush1.msra.mxu0 0.0
    %928 = vmatprep.subr.mxu0 0.0
    %929 = vmatpush1.msra.mxu0 0.0
    %930 = vmatprep.subr.mxu0 0.0
    %931 = vmatpush1.msra.mxu0 0.0
    %932 = vmatprep.subr.mxu0 0.0
    %933 = vmatpush1.msra.mxu0 0.0
    %934 = vmatprep.subr.mxu0 0.0
    %935 = vmatpush1.msra.mxu0 0.0
    %936 = vmatprep.subr.mxu0 0.0
    %937 = vmatpush1.msra.mxu0 0.0
    %938 = vmatprep.subr.mxu0 0.0
    %939 = vmatpush1.msra.mxu0 0.0
    %940 = vmatprep.subr.mxu0 0.0
    %941 = vmatpush1.msra.mxu0 0.0
    %942 = vmatprep.subr.mxu0 0.0
    %943 = vmatpush1.msra.mxu0 0.0
    %944 = vmatprep.subr.mxu0 0.0
    %945 = vmatpush1.msra.mxu0 0.0
    %946 = vmatprep.subr.mxu0 0.0
    %947 = vmatpush1.msra.mxu0 0.0
    %948 = vmatprep.mubr.f32.mxu0 0.0
    %949 = vmatmul.mubr.f32.gmra.mrb[0].mxu0 %v882
    %v950 = vpop.f32.mrb[0].mxu0
    %v951 = vadd.f32 0.0, %v950
    %v952 = vpop.f32.mrb[0].mxu0
    %953 = vdwg.mxu0
    %954 = vrot.lane.b32.xlu0 %v265, 112
    %v955 = vpop.permute.xlu0 %954
    %956 = vrot.lane.b32.xlu0 %v275, 80
    %v957 = vpop.permute.xlu0 %956
    %v958 = vsel %vm290, %v955, 0
    %v960 = vsel %vm290, %v957, 0
    %962 = vmatprep.subr.mxu0 0.0
    %963 = vmatpush1.xpose.msra.mxu0 %v960
    %964 = vmatprep.subr.mxu0 0.0
    %965 = vmatpush1.xpose.msra.mxu0 0.0
    %966 = vmatprep.subr.mxu0 0.0
    %967 = vmatpush1.xpose.msra.mxu0 0.0
    %968 = vmatprep.subr.mxu0 0.0
    %969 = vmatpush1.xpose.msra.mxu0 0.0
    %970 = vmatprep.subr.mxu0 0.0
    %971 = vmatpush1.xpose.msra.mxu0 0.0
    %972 = vmatprep.subr.mxu0 0.0
    %973 = vmatpush1.xpose.msra.mxu0 0.0
    %974 = vmatprep.subr.mxu0 0.0
    %975 = vmatpush1.xpose.msra.mxu0 0.0
    %976 = vmatprep.subr.mxu0 0.0
    %977 = vmatpush1.xpose.msra.mxu0 0.0
    %978 = vmatprep.subr.mxu0 0.0
    %979 = vmatpush1.xpose.msra.mxu0 0.0
    %980 = vmatprep.subr.mxu0 0.0
    %981 = vmatpush1.xpose.msra.mxu0 0.0
    %982 = vmatprep.subr.mxu0 0.0
    %983 = vmatpush1.xpose.msra.mxu0 0.0
    %984 = vmatprep.subr.mxu0 0.0
    %985 = vmatpush1.xpose.msra.mxu0 0.0
    %986 = vmatprep.subr.mxu0 0.0
    %987 = vmatpush1.xpose.msra.mxu0 0.0
    %988 = vmatprep.subr.mxu0 0.0
    %989 = vmatpush1.xpose.msra.mxu0 0.0
    %990 = vmatprep.subr.mxu0 0.0
    %991 = vmatpush1.xpose.msra.mxu0 0.0
    %992 = vmatprep.subr.mxu0 0.0
    %993 = vmatpush1.xpose.msra.mxu0 0.0
    %994 = vmatprep.subr.mxu0 0.0
    %995 = vmatpush1.xpose.msra.mxu0 0.0
    %996 = vmatprep.subr.mxu0 0.0
    %997 = vmatpush1.xpose.msra.mxu0 0.0
    %998 = vmatprep.subr.mxu0 0.0
    %999 = vmatpush1.xpose.msra.mxu0 0.0
    %1000 = vmatprep.subr.mxu0 0.0
    %1001 = vmatpush1.xpose.msra.mxu0 0.0
    %1002 = vmatprep.subr.mxu0 0.0
    %1003 = vmatpush1.xpose.msra.mxu0 0.0
    %1004 = vmatprep.subr.mxu0 0.0
    %1005 = vmatpush1.xpose.msra.mxu0 0.0
    %1006 = vmatprep.subr.mxu0 0.0
    %1007 = vmatpush1.xpose.msra.mxu0 0.0
    %1008 = vmatprep.subr.mxu0 0.0
    %1009 = vmatpush1.xpose.msra.mxu0 0.0
    %1010 = vmatprep.subr.mxu0 0.0
    %1011 = vmatpush1.xpose.msra.mxu0 0.0
    %1012 = vmatprep.subr.mxu0 0.0
    %1013 = vmatpush1.xpose.msra.mxu0 0.0
    %1014 = vmatprep.subr.mxu0 0.0
    %1015 = vmatpush1.xpose.msra.mxu0 0.0
    %1016 = vmatprep.subr.mxu0 0.0
    %1017 = vmatpush1.xpose.msra.mxu0 0.0
    %1018 = vmatprep.subr.mxu0 0.0
    %1019 = vmatpush1.xpose.msra.mxu0 0.0
    %1020 = vmatprep.subr.mxu0 0.0
    %1021 = vmatpush1.xpose.msra.mxu0 0.0
    %1022 = vmatprep.subr.mxu0 0.0
    %1023 = vmatpush1.xpose.msra.mxu0 0.0
    %1024 = vmatprep.subr.mxu0 0.0
    %1025 = vmatpush1.xpose.msra.mxu0 0.0
    %1026 = vmatprep.mubr.f32.mxu0 0.0
    %1027 = vmatmul.mubr.f32.gmra.mrb[0].mxu0 %v958
    %v1028 = vpop.f32.mrb[0].mxu0
    %v1029 = vadd.f32 0.0, %v1028
    %v1030 = vpop.f32.mrb[0].mxu0
    %1031 = vdwg.mxu0
    %1032 = vrot.lane.b32.xlu0 %v266, 112
    %v1033 = vpop.permute.xlu0 %1032
    %1034 = vrot.lane.b32.xlu0 %v276, 80
    %v1035 = vpop.permute.xlu0 %1034
    %v1036 = vsel %vm290, %v1033, 0
    %v1038 = vsel %vm290, %v1035, 0
    %1040 = vmatprep.subr.mxu0 0.0
    %1041 = vmatpush1.xpose.msra.mxu0 %v1038
    %1042 = vmatprep.subr.mxu0 0.0
    %1043 = vmatpush1.xpose.msra.mxu0 0.0
    %1044 = vmatprep.subr.mxu0 0.0
    %1045 = vmatpush1.xpose.msra.mxu0 0.0
    %1046 = vmatprep.subr.mxu0 0.0
    %1047 = vmatpush1.xpose.msra.mxu0 0.0
    %1048 = vmatprep.subr.mxu0 0.0
    %1049 = vmatpush1.xpose.msra.mxu0 0.0
    %1050 = vmatprep.subr.mxu0 0.0
    %1051 = vmatpush1.xpose.msra.mxu0 0.0
    %1052 = vmatprep.subr.mxu0 0.0
    %1053 = vmatpush1.xpose.msra.mxu0 0.0
    %1054 = vmatprep.subr.mxu0 0.0
    %1055 = vmatpush1.xpose.msra.mxu0 0.0
    %1056 = vmatprep.subr.mxu0 0.0
    %1057 = vmatpush1.xpose.msra.mxu0 0.0
    %1058 = vmatprep.subr.mxu0 0.0
    %1059 = vmatpush1.xpose.msra.mxu0 0.0
    %1060 = vmatprep.subr.mxu0 0.0
    %1061 = vmatpush1.xpose.msra.mxu0 0.0
    %1062 = vmatprep.subr.mxu0 0.0
    %1063 = vmatpush1.xpose.msra.mxu0 0.0
    %1064 = vmatprep.subr.mxu0 0.0
    %1065 = vmatpush1.xpose.msra.mxu0 0.0
    %1066 = vmatprep.subr.mxu0 0.0
    %1067 = vmatpush1.xpose.msra.mxu0 0.0
    %1068 = vmatprep.subr.mxu0 0.0
    %1069 = vmatpush1.xpose.msra.mxu0 0.0
    %1070 = vmatprep.subr.mxu0 0.0
    %1071 = vmatpush1.xpose.msra.mxu0 0.0
    %1072 = vmatprep.subr.mxu0 0.0
    %1073 = vmatpush1.xpose.msra.mxu0 0.0
    %1074 = vmatprep.subr.mxu0 0.0
    %1075 = vmatpush1.xpose.msra.mxu0 0.0
    %1076 = vmatprep.subr.mxu0 0.0
    %1077 = vmatpush1.xpose.msra.mxu0 0.0
    %1078 = vmatprep.subr.mxu0 0.0
    %1079 = vmatpush1.xpose.msra.mxu0 0.0
    %1080 = vmatprep.subr.mxu0 0.0
    %1081 = vmatpush1.xpose.msra.mxu0 0.0
    %1082 = vmatprep.subr.mxu0 0.0
    %1083 = vmatpush1.xpose.msra.mxu0 0.0
    %1084 = vmatprep.subr.mxu0 0.0
    %1085 = vmatpush1.xpose.msra.mxu0 0.0
    %1086 = vmatprep.subr.mxu0 0.0
    %1087 = vmatpush1.xpose.msra.mxu0 0.0
    %1088 = vmatprep.subr.mxu0 0.0
    %1089 = vmatpush1.xpose.msra.mxu0 0.0
    %1090 = vmatprep.subr.mxu0 0.0
    %1091 = vmatpush1.xpose.msra.mxu0 0.0
    %1092 = vmatprep.subr.mxu0 0.0
    %1093 = vmatpush1.xpose.msra.mxu0 0.0
    %1094 = vmatprep.subr.mxu0 0.0
    %1095 = vmatpush1.xpose.msra.mxu0 0.0
    %1096 = vmatprep.subr.mxu0 0.0
    %1097 = vmatpush1.xpose.msra.mxu0 0.0
    %1098 = vmatprep.subr.mxu0 0.0
    %1099 = vmatpush1.xpose.msra.mxu0 0.0
    %1100 = vmatprep.subr.mxu0 0.0
    %1101 = vmatpush1.xpose.msra.mxu0 0.0
    %1102 = vmatprep.subr.mxu0 0.0
    %1103 = vmatpush1.xpose.msra.mxu0 0.0
    %1104 = vmatprep.mubr.f32.mxu0 0.0
    %1105 = vmatmul.mubr.f32.gmra.mrb[0].mxu0 %v1036
    %v1106 = vpop.f32.mrb[0].mxu0
    %v1107 = vadd.f32 0.0, %v1106
    %v1108 = vpop.f32.mrb[0].mxu0
    %1109 = vdwg.mxu0
    %v1110 = vmul.f32 %v1029, 0.35355338
    %v1111 = vmul.f32 %v1107, 0.35355338
    %v1112 = vsel %vm290, %v1110, -inf
    %1113 = vmax.xlane.f32.xlu0 %v1112
    %v1114 = vpop.xlane.xlu0 %1113
    %v1115 = vsel %vm290, %v1111, -inf
    %1116 = vmax.xlane.f32.xlu0 %v1115
    %v1117 = vpop.xlane.xlu0 %1116
    %v1118 = vsub.f32 %v1110, %v1114
    %v1119 = vsub.f32 %v1111, %v1117
    %v1120 = vmul.f32 %v1118, 1.442695
    %v1121 = vpow.pop %v1120
    %v1122 = vmul.f32 %v1119, 1.442695
    %v1123 = vpow.pop %v1122
    %v1124 = vsel %vm290, %v1121, 0.0
    %1125 = vadd.xlane.f32.xlu0 %v1124
    %v1126 = vpop.xlane.xlu0 %1125
    %v1127 = vsel %vm290, %v1123, 0.0
    %1128 = vadd.xlane.f32.xlu0 %v1127
    %v1129 = vpop.xlane.xlu0 %1128
    %v1130 = vrcp.pop %v1126
    %v1131 = vmul.f32 %v1121, %v1130
    %v1132 = vrcp.pop %v1129
    %v1133 = vmul.f32 %v1123, %v1132
    %1134 = vrot.lane.b32.xlu0 %v285, 48
    %v1135 = vpop.permute.xlu0 %1134
    %v1138 = vsel %vm290, %v1131, 0
    %1140 = vmatprep.subr.mxu0 0.0
    %1141 = vmatpush1.msra.mxu0 %v1135
    %1142 = vmatprep.subr.mxu0 0.0
    %1143 = vmatpush1.msra.mxu0 0.0
    %1144 = vmatprep.subr.mxu0 0.0
    %1145 = vmatpush1.msra.mxu0 0.0
    %1146 = vmatprep.subr.mxu0 0.0
    %1147 = vmatpush1.msra.mxu0 0.0
    %1148 = vmatprep.subr.mxu0 0.0
    %1149 = vmatpush1.msra.mxu0 0.0
    %1150 = vmatprep.subr.mxu0 0.0
    %1151 = vmatpush1.msra.mxu0 0.0
    %1152 = vmatprep.subr.mxu0 0.0
    %1153 = vmatpush1.msra.mxu0 0.0
    %1154 = vmatprep.subr.mxu0 0.0
    %1155 = vmatpush1.msra.mxu0 0.0
    %1156 = vmatprep.subr.mxu0 0.0
    %1157 = vmatpush1.msra.mxu0 0.0
    %1158 = vmatprep.subr.mxu0 0.0
    %1159 = vmatpush1.msra.mxu0 0.0
    %1160 = vmatprep.subr.mxu0 0.0
    %1161 = vmatpush1.msra.mxu0 0.0
    %1162 = vmatprep.subr.mxu0 0.0
    %1163 = vmatpush1.msra.mxu0 0.0
    %1164 = vmatprep.subr.mxu0 0.0
    %1165 = vmatpush1.msra.mxu0 0.0
    %1166 = vmatprep.subr.mxu0 0.0
    %1167 = vmatpush1.msra.mxu0 0.0
    %1168 = vmatprep.subr.mxu0 0.0
    %1169 = vmatpush1.msra.mxu0 0.0
    %1170 = vmatprep.subr.mxu0 0.0
    %1171 = vmatpush1.msra.mxu0 0.0
    %1172 = vmatprep.subr.mxu0 0.0
    %1173 = vmatpush1.msra.mxu0 0.0
    %1174 = vmatprep.subr.mxu0 0.0
    %1175 = vmatpush1.msra.mxu0 0.0
    %1176 = vmatprep.subr.mxu0 0.0
    %1177 = vmatpush1.msra.mxu0 0.0
    %1178 = vmatprep.subr.mxu0 0.0
    %1179 = vmatpush1.msra.mxu0 0.0
    %1180 = vmatprep.subr.mxu0 0.0
    %1181 = vmatpush1.msra.mxu0 0.0
    %1182 = vmatprep.subr.mxu0 0.0
    %1183 = vmatpush1.msra.mxu0 0.0
    %1184 = vmatprep.subr.mxu0 0.0
    %1185 = vmatpush1.msra.mxu0 0.0
    %1186 = vmatprep.subr.mxu0 0.0
    %1187 = vmatpush1.msra.mxu0 0.0
    %1188 = vmatprep.subr.mxu0 0.0
    %1189 = vmatpush1.msra.mxu0 0.0
    %1190 = vmatprep.subr.mxu0 0.0
    %1191 = vmatpush1.msra.mxu0 0.0
    %1192 = vmatprep.subr.mxu0 0.0
    %1193 = vmatpush1.msra.mxu0 0.0
    %1194 = vmatprep.subr.mxu0 0.0
    %1195 = vmatpush1.msra.mxu0 0.0
    %1196 = vmatprep.subr.mxu0 0.0
    %1197 = vmatpush1.msra.mxu0 0.0
    %1198 = vmatprep.subr.mxu0 0.0
    %1199 = vmatpush1.msra.mxu0 0.0
    %1200 = vmatprep.subr.mxu0 0.0
    %1201 = vmatpush1.msra.mxu0 0.0
    %1202 = vmatprep.subr.mxu0 0.0
    %1203 = vmatpush1.msra.mxu0 0.0
    %1204 = vmatprep.mubr.f32.mxu0 0.0
    %1205 = vmatmul.mubr.f32.gmra.mrb[0].mxu0 %v1138
    %v1206 = vpop.f32.mrb[0].mxu0
    %v1207 = vadd.f32 0.0, %v1206
    %v1208 = vpop.f32.mrb[0].mxu0
    %1209 = vdwg.mxu0
    %1210 = vrot.lane.b32.xlu0 %v286, 48
    %v1211 = vpop.permute.xlu0 %1210
    %v1214 = vsel %vm290, %v1133, 0
    %1216 = vmatprep.subr.mxu0 0.0
    %1217 = vmatpush1.msra.mxu0 %v1211
    %1218 = vmatprep.subr.mxu0 0.0
    %1219 = vmatpush1.msra.mxu0 0.0
    %1220 = vmatprep.subr.mxu0 0.0
    %1221 = vmatpush1.msra.mxu0 0.0
    %1222 = vmatprep.subr.mxu0 0.0
    %1223 = vmatpush1.msra.mxu0 0.0
    %1224 = vmatprep.subr.mxu0 0.0
    %1225 = vmatpush1.msra.mxu0 0.0
    %1226 = vmatprep.subr.mxu0 0.0
    %1227 = vmatpush1.msra.mxu0 0.0
    %1228 = vmatprep.subr.mxu0 0.0
    %1229 = vmatpush1.msra.mxu0 0.0
    %1230 = vmatprep.subr.mxu0 0.0
    %1231 = vmatpush1.msra.mxu0 0.0
    %1232 = vmatprep.subr.mxu0 0.0
    %1233 = vmatpush1.msra.mxu0 0.0
    %1234 = vmatprep.subr.mxu0 0.0
    %1235 = vmatpush1.msra.mxu0 0.0
    %1236 = vmatprep.subr.mxu0 0.0
    %1237 = vmatpush1.msra.mxu0 0.0
    %1238 = vmatprep.subr.mxu0 0.0
    %1239 = vmatpush1.msra.mxu0 0.0
    %1240 = vmatprep.subr.mxu0 0.0
    %1241 = vmatpush1.msra.mxu0 0.0
    %1242 = vmatprep.subr.mxu0 0.0
    %1243 = vmatpush1.msra.mxu0 0.0
    %1244 = vmatprep.subr.mxu0 0.0
    %1245 = vmatpush1.msra.mxu0 0.0
    %1246 = vmatprep.subr.mxu0 0.0
    %1247 = vmatpush1.msra.mxu0 0.0
    %1248 = vmatprep.subr.mxu0 0.0
    %1249 = vmatpush1.msra.mxu0 0.0
    %1250 = vmatprep.subr.mxu0 0.0
    %1251 = vmatpush1.msra.mxu0 0.0
    %1252 = vmatprep.subr.mxu0 0.0
    %1253 = vmatpush1.msra.mxu0 0.0
    %1254 = vmatprep.subr.mxu0 0.0
    %1255 = vmatpush1.msra.mxu0 0.0
    %1256 = vmatprep.subr.mxu0 0.0
    %1257 = vmatpush1.msra.mxu0 0.0
    %1258 = vmatprep.subr.mxu0 0.0
    %1259 = vmatpush1.msra.mxu0 0.0
    %1260 = vmatprep.subr.mxu0 0.0
    %1261 = vmatpush1.msra.mxu0 0.0
    %1262 = vmatprep.subr.mxu0 0.0
    %1263 = vmatpush1.msra.mxu0 0.0
    %1264 = vmatprep.subr.mxu0 0.0
    %1265 = vmatpush1.msra.mxu0 0.0
    %1266 = vmatprep.subr.mxu0 0.0
    %1267 = vmatpush1.msra.mxu0 0.0
    %1268 = vmatprep.subr.mxu0 0.0
    %1269 = vmatpush1.msra.mxu0 0.0
    %1270 = vmatprep.subr.mxu0 0.0
    %1271 = vmatpush1.msra.mxu0 0.0
    %1272 = vmatprep.subr.mxu0 0.0
    %1273 = vmatpush1.msra.mxu0 0.0
    %1274 = vmatprep.subr.mxu0 0.0
    %1275 = vmatpush1.msra.mxu0 0.0
    %1276 = vmatprep.subr.mxu0 0.0
    %1277 = vmatpush1.msra.mxu0 0.0
    %1278 = vmatprep.subr.mxu0 0.0
    %1279 = vmatpush1.msra.mxu0 0.0
    %1280 = vmatprep.mubr.f32.mxu0 0.0
    %1281 = vmatmul.mubr.f32.gmra.mrb[0].mxu0 %v1214
    %v1282 = vpop.f32.mrb[0].mxu0
    %v1283 = vadd.f32 0.0, %v1282
    %v1284 = vpop.f32.mrb[0].mxu0
    %1285 = vdwg.mxu0
    %1286 = vrot.lane.b32.xlu0 %v265, 104
    %v1287 = vpop.permute.xlu0 %1286
    %1288 = vrot.lane.b32.xlu0 %v275, 72
    %v1289 = vpop.permute.xlu0 %1288
    %v1290 = vsel %vm290, %v1287, 0
    %v1292 = vsel %vm290, %v1289, 0
    %1294 = vmatprep.subr.mxu0 0.0
    %1295 = vmatpush1.xpose.msra.mxu0 %v1292
    %1296 = vmatprep.subr.mxu0 0.0
    %1297 = vmatpush1.xpose.msra.mxu0 0.0
    %1298 = vmatprep.subr.mxu0 0.0
    %1299 = vmatpush1.xpose.msra.mxu0 0.0
    %1300 = vmatprep.subr.mxu0 0.0
    %1301 = vmatpush1.xpose.msra.mxu0 0.0
    %1302 = vmatprep.subr.mxu0 0.0
    %1303 = vmatpush1.xpose.msra.mxu0 0.0
    %1304 = vmatprep.subr.mxu0 0.0
    %1305 = vmatpush1.xpose.msra.mxu0 0.0
    %1306 = vmatprep.subr.mxu0 0.0
    %1307 = vmatpush1.xpose.msra.mxu0 0.0
    %1308 = vmatprep.subr.mxu0 0.0
    %1309 = vmatpush1.xpose.msra.mxu0 0.0
    %1310 = vmatprep.subr.mxu0 0.0
    %1311 = vmatpush1.xpose.msra.mxu0 0.0
    %1312 = vmatprep.subr.mxu0 0.0
    %1313 = vmatpush1.xpose.msra.mxu0 0.0
    %1314 = vmatprep.subr.mxu0 0.0
    %1315 = vmatpush1.xpose.msra.mxu0 0.0
    %1316 = vmatprep.subr.mxu0 0.0
    %1317 = vmatpush1.xpose.msra.mxu0 0.0
    %1318 = vmatprep.subr.mxu0 0.0
    %1319 = vmatpush1.xpose.msra.mxu0 0.0
    %1320 = vmatprep.subr.mxu0 0.0
    %1321 = vmatpush1.xpose.msra.mxu0 0.0
    %1322 = vmatprep.subr.mxu0 0.0
    %1323 = vmatpush1.xpose.msra.mxu0 0.0
    %1324 = vmatprep.subr.mxu0 0.0
    %1325 = vmatpush1.xpose.msra.mxu0 0.0
    %1326 = vmatprep.subr.mxu0 0.0
    %1327 = vmatpush1.xpose.msra.mxu0 0.0
    %1328 = vmatprep.subr.mxu0 0.0
    %1329 = vmatpush1.xpose.msra.mxu0 0.0
    %1330 = vmatprep.subr.mxu0 0.0
    %1331 = vmatpush1.xpose.msra.mxu0 0.0
    %1332 = vmatprep.subr.mxu0 0.0
    %1333 = vmatpush1.xpose.msra.mxu0 0.0
    %1334 = vmatprep.subr.mxu0 0.0
    %1335 = vmatpush1.xpose.msra.mxu0 0.0
    %1336 = vmatprep.subr.mxu0 0.0
    %1337 = vmatpush1.xpose.msra.mxu0 0.0
    %1338 = vmatprep.subr.mxu0 0.0
    %1339 = vmatpush1.xpose.msra.mxu0 0.0
    %1340 = vmatprep.subr.mxu0 0.0
    %1341 = vmatpush1.xpose.msra.mxu0 0.0
    %1342 = vmatprep.subr.mxu0 0.0
    %1343 = vmatpush1.xpose.msra.mxu0 0.0
    %1344 = vmatprep.subr.mxu0 0.0
    %1345 = vmatpush1.xpose.msra.mxu0 0.0
    %1346 = vmatprep.subr.mxu0 0.0
    %1347 = vmatpush1.xpose.msra.mxu0 0.0
    %1348 = vmatprep.subr.mxu0 0.0
    %1349 = vmatpush1.xpose.msra.mxu0 0.0
    %1350 = vmatprep.subr.mxu0 0.0
    %1351 = vmatpush1.xpose.msra.mxu0 0.0
    %1352 = vmatprep.subr.mxu0 0.0
    %1353 = vmatpush1.xpose.msra.mxu0 0.0
    %1354 = vmatprep.subr.mxu0 0.0
    %1355 = vmatpush1.xpose.msra.mxu0 0.0
    %1356 = vmatprep.subr.mxu0 0.0
    %1357 = vmatpush1.xpose.msra.mxu0 0.0
    %1358 = vmatprep.mubr.f32.mxu0 0.0
    %1359 = vmatmul.mubr.f32.gmra.mrb[0].mxu0 %v1290
    %v1360 = vpop.f32.mrb[0].mxu0
    %v1361 = vadd.f32 0.0, %v1360
    %v1362 = vpop.f32.mrb[0].mxu0
    %1363 = vdwg.mxu0
    %1364 = vrot.lane.b32.xlu0 %v266, 104
    %v1365 = vpop.permute.xlu0 %1364
    %1366 = vrot.lane.b32.xlu0 %v276, 72
    %v1367 = vpop.permute.xlu0 %1366
    %v1368 = vsel %vm290, %v1365, 0
    %v1370 = vsel %vm290, %v1367, 0
    %1372 = vmatprep.subr.mxu0 0.0
    %1373 = vmatpush1.xpose.msra.mxu0 %v1370
    %1374 = vmatprep.subr.mxu0 0.0
    %1375 = vmatpush1.xpose.msra.mxu0 0.0
    %1376 = vmatprep.subr.mxu0 0.0
    %1377 = vmatpush1.xpose.msra.mxu0 0.0
    %1378 = vmatprep.subr.mxu0 0.0
    %1379 = vmatpush1.xpose.msra.mxu0 0.0
    %1380 = vmatprep.subr.mxu0 0.0
    %1381 = vmatpush1.xpose.msra.mxu0 0.0
    %1382 = vmatprep.subr.mxu0 0.0
    %1383 = vmatpush1.xpose.msra.mxu0 0.0
    %1384 = vmatprep.subr.mxu0 0.0
    %1385 = vmatpush1.xpose.msra.mxu0 0.0
    %1386 = vmatprep.subr.mxu0 0.0
    %1387 = vmatpush1.xpose.msra.mxu0 0.0
    %1388 = vmatprep.subr.mxu0 0.0
    %1389 = vmatpush1.xpose.msra.mxu0 0.0
    %1390 = vmatprep.subr.mxu0 0.0
    %1391 = vmatpush1.xpose.msra.mxu0 0.0
    %1392 = vmatprep.subr.mxu0 0.0
    %1393 = vmatpush1.xpose.msra.mxu0 0.0
    %1394 = vmatprep.subr.mxu0 0.0
    %1395 = vmatpush1.xpose.msra.mxu0 0.0
    %1396 = vmatprep.subr.mxu0 0.0
    %1397 = vmatpush1.xpose.msra.mxu0 0.0
    %1398 = vmatprep.subr.mxu0 0.0
    %1399 = vmatpush1.xpose.msra.mxu0 0.0
    %1400 = vmatprep.subr.mxu0 0.0
    %1401 = vmatpush1.xpose.msra.mxu0 0.0
    %1402 = vmatprep.subr.mxu0 0.0
    %1403 = vmatpush1.xpose.msra.mxu0 0.0
    %1404 = vmatprep.subr.mxu0 0.0
    %1405 = vmatpush1.xpose.msra.mxu0 0.0
    %1406 = vmatprep.subr.mxu0 0.0
    %1407 = vmatpush1.xpose.msra.mxu0 0.0
    %1408 = vmatprep.subr.mxu0 0.0
    %1409 = vmatpush1.xpose.msra.mxu0 0.0
    %1410 = vmatprep.subr.mxu0 0.0
    %1411 = vmatpush1.xpose.msra.mxu0 0.0
    %1412 = vmatprep.subr.mxu0 0.0
    %1413 = vmatpush1.xpose.msra.mxu0 0.0
    %1414 = vmatprep.subr.mxu0 0.0
    %1415 = vmatpush1.xpose.msra.mxu0 0.0
    %1416 = vmatprep.subr.mxu0 0.0
    %1417 = vmatpush1.xpose.msra.mxu0 0.0
    %1418 = vmatprep.subr.mxu0 0.0
    %1419 = vmatpush1.xpose.msra.mxu0 0.0
    %1420 = vmatprep.subr.mxu0 0.0
    %1421 = vmatpush1.xpose.msra.mxu0 0.0
    %1422 = vmatprep.subr.mxu0 0.0
    %1423 = vmatpush1.xpose.msra.mxu0 0.0
    %1424 = vmatprep.subr.mxu0 0.0
    %1425 = vmatpush1.xpose.msra.mxu0 0.0
    %1426 = vmatprep.subr.mxu0 0.0
    %1427 = vmatpush1.xpose.msra.mxu0 0.0
    %1428 = vmatprep.subr.mxu0 0.0
    %1429 = vmatpush1.xpose.msra.mxu0 0.0
    %1430 = vmatprep.subr.mxu0 0.0
    %1431 = vmatpush1.xpose.msra.mxu0 0.0
    %1432 = vmatprep.subr.mxu0 0.0
    %1433 = vmatpush1.xpose.msra.mxu0 0.0
    %1434 = vmatprep.subr.mxu0 0.0
    %1435 = vmatpush1.xpose.msra.mxu0 0.0
    %1436 = vmatprep.mubr.f32.mxu0 0.0
    %1437 = vmatmul.mubr.f32.gmra.mrb[0].mxu0 %v1368
    %v1438 = vpop.f32.mrb[0].mxu0
    %v1439 = vadd.f32 0.0, %v1438
    %v1440 = vpop.f32.mrb[0].mxu0
    %1441 = vdwg.mxu0
    %v1442 = vmul.f32 %v1361, 0.35355338
    %v1443 = vmul.f32 %v1439, 0.35355338
    %v1444 = vsel %vm290, %v1442, -inf
    %1445 = vmax.xlane.f32.xlu0 %v1444
    %v1446 = vpop.xlane.xlu0 %1445
    %v1447 = vsel %vm290, %v1443, -inf
    %1448 = vmax.xlane.f32.xlu0 %v1447
    %v1449 = vpop.xlane.xlu0 %1448
    %v1450 = vsub.f32 %v1442, %v1446
    %v1451 = vsub.f32 %v1443, %v1449
    %v1452 = vmul.f32 %v1450, 1.442695
    %v1453 = vpow.pop %v1452
    %v1454 = vmul.f32 %v1451, 1.442695
    %v1455 = vpow.pop %v1454
    %v1456 = vsel %vm290, %v1453, 0.0
    %1457 = vadd.xlane.f32.xlu0 %v1456
    %v1458 = vpop.xlane.xlu0 %1457
    %v1459 = vsel %vm290, %v1455, 0.0
    %1460 = vadd.xlane.f32.xlu0 %v1459
    %v1461 = vpop.xlane.xlu0 %1460
    %v1462 = vrcp.pop %v1458
    %v1463 = vmul.f32 %v1453, %v1462
    %v1464 = vrcp.pop %v1461
    %v1465 = vmul.f32 %v1455, %v1464
    %1466 = vrot.lane.b32.xlu0 %v285, 40
    %v1467 = vpop.permute.xlu0 %1466
    %v1470 = vsel %vm290, %v1463, 0
    %1472 = vmatprep.subr.mxu0 0.0
    %1473 = vmatpush1.msra.mxu0 %v1467
    %1474 = vmatprep.subr.mxu0 0.0
    %1475 = vmatpush1.msra.mxu0 0.0
    %1476 = vmatprep.subr.mxu0 0.0
    %1477 = vmatpush1.msra.mxu0 0.0
    %1478 = vmatprep.subr.mxu0 0.0
    %1479 = vmatpush1.msra.mxu0 0.0
    %1480 = vmatprep.subr.mxu0 0.0
    %1481 = vmatpush1.msra.mxu0 0.0
    %1482 = vmatprep.subr.mxu0 0.0
    %1483 = vmatpush1.msra.mxu0 0.0
    %1484 = vmatprep.subr.mxu0 0.0
    %1485 = vmatpush1.msra.mxu0 0.0
    %1486 = vmatprep.subr.mxu0 0.0
    %1487 = vmatpush1.msra.mxu0 0.0
    %1488 = vmatprep.subr.mxu0 0.0
    %1489 = vmatpush1.msra.mxu0 0.0
    %1490 = vmatprep.subr.mxu0 0.0
    %1491 = vmatpush1.msra.mxu0 0.0
    %1492 = vmatprep.subr.mxu0 0.0
    %1493 = vmatpush1.msra.mxu0 0.0
    %1494 = vmatprep.subr.mxu0 0.0
    %1495 = vmatpush1.msra.mxu0 0.0
    %1496 = vmatprep.subr.mxu0 0.0
    %1497 = vmatpush1.msra.mxu0 0.0
    %1498 = vmatprep.subr.mxu0 0.0
    %1499 = vmatpush1.msra.mxu0 0.0
    %1500 = vmatprep.subr.mxu0 0.0
    %1501 = vmatpush1.msra.mxu0 0.0
    %1502 = vmatprep.subr.mxu0 0.0
    %1503 = vmatpush1.msra.mxu0 0.0
    %1504 = vmatprep.subr.mxu0 0.0
    %1505 = vmatpush1.msra.mxu0 0.0
    %1506 = vmatprep.subr.mxu0 0.0
    %1507 = vmatpush1.msra.mxu0 0.0
    %1508 = vmatprep.subr.mxu0 0.0
    %1509 = vmatpush1.msra.mxu0 0.0
    %1510 = vmatprep.subr.mxu0 0.0
    %1511 = vmatpush1.msra.mxu0 0.0
    %1512 = vmatprep.subr.mxu0 0.0
    %1513 = vmatpush1.msra.mxu0 0.0
    %1514 = vmatprep.subr.mxu0 0.0
    %1515 = vmatpush1.msra.mxu0 0.0
    %1516 = vmatprep.subr.mxu0 0.0
    %1517 = vmatpush1.msra.mxu0 0.0
    %1518 = vmatprep.subr.mxu0 0.0
    %1519 = vmatpush1.msra.mxu0 0.0
    %1520 = vmatprep.subr.mxu0 0.0
    %1521 = vmatpush1.msra.mxu0 0.0
    %1522 = vmatprep.subr.mxu0 0.0
    %1523 = vmatpush1.msra.mxu0 0.0
    %1524 = vmatprep.subr.mxu0 0.0
    %1525 = vmatpush1.msra.mxu0 0.0
    %1526 = vmatprep.subr.mxu0 0.0
    %1527 = vmatpush1.msra.mxu0 0.0
    %1528 = vmatprep.subr.mxu0 0.0
    %1529 = vmatpush1.msra.mxu0 0.0
    %1530 = vmatprep.subr.mxu0 0.0
    %1531 = vmatpush1.msra.mxu0 0.0
    %1532 = vmatprep.subr.mxu0 0.0
    %1533 = vmatpush1.msra.mxu0 0.0
    %1534 = vmatprep.subr.mxu0 0.0
    %1535 = vmatpush1.msra.mxu0 0.0
    %1536 = vmatprep.mubr.f32.mxu0 0.0
    %1537 = vmatmul.mubr.f32.gmra.mrb[0].mxu0 %v1470
    %v1538 = vpop.f32.mrb[0].mxu0
    %v1539 = vadd.f32 0.0, %v1538
    %v1540 = vpop.f32.mrb[0].mxu0
    %1541 = vdwg.mxu0
    %1542 = vrot.lane.b32.xlu0 %v286, 40
    %v1543 = vpop.permute.xlu0 %1542
    %v1546 = vsel %vm290, %v1465, 0
    %1548 = vmatprep.subr.mxu0 0.0
    %1549 = vmatpush1.msra.mxu0 %v1543
    %1550 = vmatprep.subr.mxu0 0.0
    %1551 = vmatpush1.msra.mxu0 0.0
    %1552 = vmatprep.subr.mxu0 0.0
    %1553 = vmatpush1.msra.mxu0 0.0
    %1554 = vmatprep.subr.mxu0 0.0
    %1555 = vmatpush1.msra.mxu0 0.0
    %1556 = vmatprep.subr.mxu0 0.0
    %1557 = vmatpush1.msra.mxu0 0.0
    %1558 = vmatprep.subr.mxu0 0.0
    %1559 = vmatpush1.msra.mxu0 0.0
    %1560 = vmatprep.subr.mxu0 0.0
    %1561 = vmatpush1.msra.mxu0 0.0
    %1562 = vmatprep.subr.mxu0 0.0
    %1563 = vmatpush1.msra.mxu0 0.0
    %1564 = vmatprep.subr.mxu0 0.0
    %1565 = vmatpush1.msra.mxu0 0.0
    %1566 = vmatprep.subr.mxu0 0.0
    %1567 = vmatpush1.msra.mxu0 0.0
    %1568 = vmatprep.subr.mxu0 0.0
    %1569 = vmatpush1.msra.mxu0 0.0
    %1570 = vmatprep.subr.mxu0 0.0
    %1571 = vmatpush1.msra.mxu0 0.0
    %1572 = vmatprep.subr.mxu0 0.0
    %1573 = vmatpush1.msra.mxu0 0.0
    %1574 = vmatprep.subr.mxu0 0.0
    %1575 = vmatpush1.msra.mxu0 0.0
    %1576 = vmatprep.subr.mxu0 0.0
    %1577 = vmatpush1.msra.mxu0 0.0
    %1578 = vmatprep.subr.mxu0 0.0
    %1579 = vmatpush1.msra.mxu0 0.0
    %1580 = vmatprep.subr.mxu0 0.0
    %1581 = vmatpush1.msra.mxu0 0.0
    %1582 = vmatprep.subr.mxu0 0.0
    %1583 = vmatpush1.msra.mxu0 0.0
    %1584 = vmatprep.subr.mxu0 0.0
    %1585 = vmatpush1.msra.mxu0 0.0
    %1586 = vmatprep.subr.mxu0 0.0
    %1587 = vmatpush1.msra.mxu0 0.0
    %1588 = vmatprep.subr.mxu0 0.0
    %1589 = vmatpush1.msra.mxu0 0.0
    %1590 = vmatprep.subr.mxu0 0.0
    %1591 = vmatpush1.msra.mxu0 0.0
    %1592 = vmatprep.subr.mxu0 0.0
    %1593 = vmatpush1.msra.mxu0 0.0
    %1594 = vmatprep.subr.mxu0 0.0
    %1595 = vmatpush1.msra.mxu0 0.0
    %1596 = vmatprep.subr.mxu0 0.0
    %1597 = vmatpush1.msra.mxu0 0.0
    %1598 = vmatprep.subr.mxu0 0.0
    %1599 = vmatpush1.msra.mxu0 0.0
    %1600 = vmatprep.subr.mxu0 0.0
    %1601 = vmatpush1.msra.mxu0 0.0
    %1602 = vmatprep.subr.mxu0 0.0
    %1603 = vmatpush1.msra.mxu0 0.0
    %1604 = vmatprep.subr.mxu0 0.0
    %1605 = vmatpush1.msra.mxu0 0.0
    %1606 = vmatprep.subr.mxu0 0.0
    %1607 = vmatpush1.msra.mxu0 0.0
    %1608 = vmatprep.subr.mxu0 0.0
    %1609 = vmatpush1.msra.mxu0 0.0
    %1610 = vmatprep.subr.mxu0 0.0
    %1611 = vmatpush1.msra.mxu0 0.0
    %1612 = vmatprep.mubr.f32.mxu0 0.0
    %1613 = vmatmul.mubr.f32.gmra.mrb[0].mxu0 %v1546
    %v1614 = vpop.f32.mrb[0].mxu0
    %v1615 = vadd.f32 0.0, %v1614
    %v1616 = vpop.f32.mrb[0].mxu0
    %1617 = vdwg.mxu0
    %1620 = vrot.lane.b32.xlu0 %v875, 8
    %v1621 = vpop.permute.xlu0 %1620
    %1622 = vrot.lane.b32.xlu0 %v951, 8
    %v1623 = vpop.permute.xlu0 %1622
    %1628 = vrot.lane.b32.xlu0 %v1207, 16
    %v1629 = vpop.permute.xlu0 %1628
    %1630 = vrot.lane.b32.xlu0 %v1283, 16
    %v1631 = vpop.permute.xlu0 %1630
    %1636 = vrot.lane.b32.xlu0 %v1539, 24
    %v1637 = vpop.permute.xlu0 %1636
    %1638 = vrot.lane.b32.xlu0 %v1615, 24
    %v1639 = vpop.permute.xlu0 %1638
    %v1642 = vsel %vm290, %v542, %v1621
    %v1643 = vsel %vm290, %v619, %v1623
    %vm1644 = vcmask 130048
    %v1645 = vsel %vm1644, %v1642, %v1629
    %v1646 = vsel %vm1644, %v1643, %v1631
    %vm1647 = vcmask 195584
    %v1648 = vsel %vm1647, %v1645, %v1637
    %v1649 = vsel %vm1647, %v1646, %v1639
    %v1650 = vld [vmem:[%s5] sm:$0xff]
    %v1651 = vld [vmem:[%s5 + $0x8] sm:$0xff]
    %v1652 = vld [vmem:[%s5 + $0x10] sm:$0xff]
    %v1653 = vld [vmem:[%s5 + $0x18] sm:$0xff]
    %v1655 = vsel %vm136, %v1648, 0
    %v1658 = vsel %vm136, %v1649, 0
    %1660 = vmatprep.subr.mxu0 0.0
    %1661 = vmatpush1.msra.mxu0 %v1650
    %1662 = vmatprep.subr.mxu0 0.0
    %1663 = vmatpush1.msra.mxu0 %v1651
    %1664 = vmatprep.subr.mxu0 0.0
    %1665 = vmatpush1.msra.mxu0 %v1652
    %1666 = vmatprep.subr.mxu0 0.0
    %1667 = vmatpush1.msra.mxu0 %v1653
    %1668 = vmatprep.subr.mxu0 0.0
    %1669 = vmatpush1.msra.mxu0 0.0
    %1670 = vmatprep.subr.mxu0 0.0
    %1671 = vmatpush1.msra.mxu0 0.0
    %1672 = vmatprep.subr.mxu0 0.0
    %1673 = vmatpush1.msra.mxu0 0.0
    %1674 = vmatprep.subr.mxu0 0.0
    %1675 = vmatpush1.msra.mxu0 0.0
    %1676 = vmatprep.subr.mxu0 0.0
    %1677 = vmatpush1.msra.mxu0 0.0
    %1678 = vmatprep.subr.mxu0 0.0
    %1679 = vmatpush1.msra.mxu0 0.0
    %1680 = vmatprep.subr.mxu0 0.0
    %1681 = vmatpush1.msra.mxu0 0.0
    %1682 = vmatprep.subr.mxu0 0.0
    %1683 = vmatpush1.msra.mxu0 0.0
    %1684 = vmatprep.subr.mxu0 0.0
    %1685 = vmatpush1.msra.mxu0 0.0
    %1686 = vmatprep.subr.mxu0 0.0
    %1687 = vmatpush1.msra.mxu0 0.0
    %1688 = vmatprep.subr.mxu0 0.0
    %1689 = vmatpush1.msra.mxu0 0.0
    %1690 = vmatprep.subr.mxu0 0.0
    %1691 = vmatpush1.msra.mxu0 0.0
    %1692 = vmatprep.subr.mxu0 0.0
    %1693 = vmatpush1.msra.mxu0 0.0
    %1694 = vmatprep.subr.mxu0 0.0
    %1695 = vmatpush1.msra.mxu0 0.0
    %1696 = vmatprep.subr.mxu0 0.0
    %1697 = vmatpush1.msra.mxu0 0.0
    %1698 = vmatprep.subr.mxu0 0.0
    %1699 = vmatpush1.msra.mxu0 0.0
    %1700 = vmatprep.subr.mxu0 0.0
    %1701 = vmatpush1.msra.mxu0 0.0
    %1702 = vmatprep.subr.mxu0 0.0
    %1703 = vmatpush1.msra.mxu0 0.0
    %1704 = vmatprep.subr.mxu0 0.0
    %1705 = vmatpush1.msra.mxu0 0.0
    %1706 = vmatprep.subr.mxu0 0.0
    %1707 = vmatpush1.msra.mxu0 0.0
    %1708 = vmatprep.subr.mxu0 0.0
    %1709 = vmatpush1.msra.mxu0 0.0
    %1710 = vmatprep.subr.mxu0 0.0
    %1711 = vmatpush1.msra.mxu0 0.0
    %1712 = vmatprep.subr.mxu0 0.0
    %1713 = vmatpush1.msra.mxu0 0.0
    %1714 = vmatprep.subr.mxu0 0.0
    %1715 = vmatpush1.msra.mxu0 0.0
    %1716 = vmatprep.subr.mxu0 0.0
    %1717 = vmatpush1.msra.mxu0 0.0
    %1718 = vmatprep.subr.mxu0 0.0
    %1719 = vmatpush1.msra.mxu0 0.0
    %1720 = vmatprep.subr.mxu0 0.0
    %1721 = vmatpush1.msra.mxu0 0.0
    %1722 = vmatprep.subr.mxu0 0.0
    %1723 = vmatpush1.msra.mxu0 0.0
    %1724 = vmatprep.mubr.f32.mxu0 0.0
    %1725 = vmatmul.mubr.f32.gmra.mrb[0].mxu0 %v1655
    %v1726 = vpop.f32.mrb[0].mxu0
    %v1727 = vadd.f32 0.0, %v1726
    %v1728 = vpop.f32.mrb[0].mxu0
    %1729 = vmatprep.mubr.f32.mxu0 0.0
    %1730 = vmatmul.mubr.f32.gmra.mrb[0].mxu0 %v1658
    %v1731 = vpop.f32.mrb[0].mxu0
    %v1732 = vadd.f32 0.0, %v1731
    %v1733 = vpop.f32.mrb[0].mxu0
    %1734 = vdwg.mxu0
    %v1735 = vadd.f32 %v126, %v1727
    %v1736 = vadd.f32 %v131, %v1732
    %v1737 = vlaneseq
    %v1738 = vshrl.u32 %v1737, 7
    %v1739 = vsub.s32 5, %v1738
    %v1740 = vrot.slane %v134, %v1739
    %v1741 = vadd.f32 %v1735, %v1740
    %v1742 = vadd.f32 %v1736, %v1740
    %v1743 = vsel %vm136, %v1741, 0.0
    %1744 = vadd.xlane.f32.xlu0 %v1743
    %v1745 = vpop.xlane.xlu0 %1744
    %v1746 = vsel %vm136, %v1742, 0.0
    %1747 = vadd.xlane.f32.xlu0 %v1746
    %v1748 = vpop.xlane.xlu0 %1747
    %v1749 = vmul.f32 %v1745, %v143
    %v1750 = vmul.f32 %v1748, %v143
    %v1751 = vsub.f32 %v1741, %v1749
    %v1752 = vsub.f32 %v1742, %v1750
    %v1753 = vmul.f32 %v1751, %v1751
    %v1754 = vmul.f32 %v1752, %v1752
    %v1755 = vsel %vm136, %v1753, 0.0
    %1756 = vadd.xlane.f32.xlu0 %v1755
    %v1757 = vpop.xlane.xlu0 %1756
    %v1758 = vsel %vm136, %v1754, 0.0
    %1759 = vadd.xlane.f32.xlu0 %v1758
    %v1760 = vpop.xlane.xlu0 %1759
    %v1761 = vmul.f32 %v1757, %v143
    %v1762 = vmul.f32 %v1760, %v143
    %v1763 = vadd.f32 %v1761, 1e-05
    %v1764 = vadd.f32 %v1762, 1e-05
    %v1765 = vrsqrt.pop %v1763
    %v1766 = vrsqrt.pop %v1764
    %v1767 = vmul.f32 %v1751, %v1765
    %v1768 = vmul.f32 %v1752, %v1766
    %v1769 = vlaneseq
    %v1770 = vshrl.u32 %v1769, 7
    %v1771 = vsub.s32 6, %v1770
    %v1772 = vrot.slane %v134, %v1771
    %v1773 = vmul.f32 %v1767, %v1772
    %v1774 = vmul.f32 %v1768, %v1772
    %v1775 = vlaneseq
    %v1776 = vshrl.u32 %v1775, 7
    %v1777 = vsub.s32 7, %v1776
    %v1778 = vrot.slane %v134, %v1777
    %v1779 = vadd.f32 %v1773, %v1778
    %v1780 = vadd.f32 %v1774, %v1778
    %v1781 = vld [vmem:[%s6] sm:$0xff]
    %v1782 = vld [vmem:[%s6 + $0x8] sm:$0xff]
    %v1783 = vld [vmem:[%s6 + $0x10] sm:$0xff]
    %v1784 = vld [vmem:[%s6 + $0x18] sm:$0xff]
    %v1785 = vld [vmem:[%s7] sm:$0x1]
    %v1787 = vlaneseq
    %v1788 = vshrl.u32 %v1787, 7
    %v1789 = vsub.s32 0, %v1788
    %v1790 = vrot.slane %v1785, %v1789
    %v1793 = vsel %vm136, %v1779, 0
    %v1796 = vsel %vm136, %v1780, 0
    %1798 = vmatprep.subr.mxu0 0.0
    %1799 = vmatpush1.msra.mxu0 %v1781
    %1800 = vmatprep.subr.mxu0 0.0
    %1801 = vmatpush1.msra.mxu0 %v1782
    %1802 = vmatprep.subr.mxu0 0.0
    %1803 = vmatpush1.msra.mxu0 %v1783
    %1804 = vmatprep.subr.mxu0 0.0
    %1805 = vmatpush1.msra.mxu0 %v1784
    %1806 = vmatprep.subr.mxu0 0.0
    %1807 = vmatpush1.msra.mxu0 0.0
    %1808 = vmatprep.subr.mxu0 0.0
    %1809 = vmatpush1.msra.mxu0 0.0
    %1810 = vmatprep.subr.mxu0 0.0
    %1811 = vmatpush1.msra.mxu0 0.0
    %1812 = vmatprep.subr.mxu0 0.0
    %1813 = vmatpush1.msra.mxu0 0.0
    %1814 = vmatprep.subr.mxu0 0.0
    %1815 = vmatpush1.msra.mxu0 0.0
    %1816 = vmatprep.subr.mxu0 0.0
    %1817 = vmatpush1.msra.mxu0 0.0
    %1818 = vmatprep.subr.mxu0 0.0
    %1819 = vmatpush1.msra.mxu0 0.0
    %1820 = vmatprep.subr.mxu0 0.0
    %1821 = vmatpush1.msra.mxu0 0.0
    %1822 = vmatprep.subr.mxu0 0.0
    %1823 = vmatpush1.msra.mxu0 0.0
    %1824 = vmatprep.subr.mxu0 0.0
    %1825 = vmatpush1.msra.mxu0 0.0
    %1826 = vmatprep.subr.mxu0 0.0
    %1827 = vmatpush1.msra.mxu0 0.0
    %1828 = vmatprep.subr.mxu0 0.0
    %1829 = vmatpush1.msra.mxu0 0.0
    %1830 = vmatprep.subr.mxu0 0.0
    %1831 = vmatpush1.msra.mxu0 0.0
    %1832 = vmatprep.subr.mxu0 0.0
    %1833 = vmatpush1.msra.mxu0 0.0
    %1834 = vmatprep.subr.mxu0 0.0
    %1835 = vmatpush1.msra.mxu0 0.0
    %1836 = vmatprep.subr.mxu0 0.0
    %1837 = vmatpush1.msra.mxu0 0.0
    %1838 = vmatprep.subr.mxu0 0.0
    %1839 = vmatpush1.msra.mxu0 0.0
    %1840 = vmatprep.subr.mxu0 0.0
    %1841 = vmatpush1.msra.mxu0 0.0
    %1842 = vmatprep.subr.mxu0 0.0
    %1843 = vmatpush1.msra.mxu0 0.0
    %1844 = vmatprep.subr.mxu0 0.0
    %1845 = vmatpush1.msra.mxu0 0.0
    %1846 = vmatprep.subr.mxu0 0.0
    %1847 = vmatpush1.msra.mxu0 0.0
    %1848 = vmatprep.subr.mxu0 0.0
    %1849 = vmatpush1.msra.mxu0 0.0
    %1850 = vmatprep.subr.mxu0 0.0
    %1851 = vmatpush1.msra.mxu0 0.0
    %1852 = vmatprep.subr.mxu0 0.0
    %1853 = vmatpush1.msra.mxu0 0.0
    %1854 = vmatprep.subr.mxu0 0.0
    %1855 = vmatpush1.msra.mxu0 0.0
    %1856 = vmatprep.subr.mxu0 0.0
    %1857 = vmatpush1.msra.mxu0 0.0
    %1858 = vmatprep.subr.mxu0 0.0
    %1859 = vmatpush1.msra.mxu0 0.0
    %1860 = vmatprep.subr.mxu0 0.0
    %1861 = vmatpush1.msra.mxu0 0.0
    %1862 = vmatprep.mubr.f32.mxu0 0.0
    %1863 = vmatmul.mubr.f32.gmra.mrb[0].mxu0 %v1793
    %v1864 = vpop.f32.mrb[0].mxu0
    %v1865 = vadd.f32 %v1790, %v1864
    %v1866 = vpop.f32.mrb[0].mxu0
    %1867 = vmatprep.mubr.f32.mxu0 0.0
    %1868 = vmatmul.mubr.f32.gmra.mrb[0].mxu0 %v1796
    %v1869 = vpop.f32.mrb[0].mxu0
    %v1870 = vadd.f32 %v1790, %v1869
    %v1871 = vpop.f32.mrb[0].mxu0
    %1872 = vdwg.mxu0
    %v1873 = vmul.f32 %v1865, %v1865
    %v1874 = vmul.f32 %v1870, %v1870
    %v1875 = vmul.f32 %v1865, %v1873
    %v1876 = vmul.f32 %v1870, %v1874
    %v1877 = vmul.f32 %v1875, 0.044715
    %v1878 = vmul.f32 %v1876, 0.044715
    %v1879 = vadd.f32 %v1865, %v1877
    %v1880 = vadd.f32 %v1870, %v1878
    %v1881 = vmul.f32 %v1879, 0.7978846
    %v1882 = vmul.f32 %v1880, 0.7978846
    %v1883 = vtanh.pop %v1881
    %v1884 = vtanh.pop %v1882
    %v1885 = vadd.f32 %v1883, 1.0
    %v1886 = vadd.f32 %v1884, 1.0
    %v1887 = vmul.f32 %v1885, 0.5
    %v1888 = vmul.f32 %v1886, 0.5
    %v1889 = vmul.f32 %v1865, %v1887
    %v1890 = vmul.f32 %v1870, %v1888
    %v1891 = vld [vmem:[%s8] sm:$0xff]
    %v1892 = vld [vmem:[%s8 + $0x8] sm:$0xff]
    %v1893 = vld [vmem:[%s8 + $0x10] sm:$0xff]
    %v1894 = vld [vmem:[%s8 + $0x18] sm:$0xff]
    %v1895 = vld [vmem:[%s8 + $0x20] sm:$0xff]
    %v1896 = vld [vmem:[%s8 + $0x28] sm:$0xff]
    %v1897 = vld [vmem:[%s8 + $0x30] sm:$0xff]
    %v1898 = vld [vmem:[%s8 + $0x38] sm:$0xff]
    %v1899 = vld [vmem:[%s8 + $0x40] sm:$0xff]
    %v1900 = vld [vmem:[%s8 + $0x48] sm:$0xff]
    %v1901 = vld [vmem:[%s8 + $0x50] sm:$0xff]
    %v1902 = vld [vmem:[%s8 + $0x58] sm:$0xff]
    %v1903 = vld [vmem:[%s8 + $0x60] sm:$0xff]
    %v1904 = vld [vmem:[%s8 + $0x68] sm:$0xff]
    %v1905 = vld [vmem:[%s8 + $0x70] sm:$0xff]
    %v1906 = vld [vmem:[%s8 + $0x78] sm:$0xff]
    %1907 = vmatprep.subr.mxu0 0.0
    %1908 = vmatpush1.msra.mxu0 %v1891
    %1909 = vmatprep.subr.mxu0 0.0
    %1910 = vmatpush1.msra.mxu0 %v1892
    %1911 = vmatprep.subr.mxu0 0.0
    %1912 = vmatpush1.msra.mxu0 %v1893
    %1913 = vmatprep.subr.mxu0 0.0
    %1914 = vmatpush1.msra.mxu0 %v1894
    %1915 = vmatprep.subr.mxu0 0.0
    %1916 = vmatpush1.msra.mxu0 %v1895
    %1917 = vmatprep.subr.mxu0 0.0
    %1918 = vmatpush1.msra.mxu0 %v1896
    %1919 = vmatprep.subr.mxu0 0.0
    %1920 = vmatpush1.msra.mxu0 %v1897
    %1921 = vmatprep.subr.mxu0 0.0
    %1922 = vmatpush1.msra.mxu0 %v1898
    %1923 = vmatprep.subr.mxu0 0.0
    %1924 = vmatpush1.msra.mxu0 %v1899
    %1925 = vmatprep.subr.mxu0 0.0
    %1926 = vmatpush1.msra.mxu0 %v1900
    %1927 = vmatprep.subr.mxu0 0.0
    %1928 = vmatpush1.msra.mxu0 %v1901
    %1929 = vmatprep.subr.mxu0 0.0
    %1930 = vmatpush1.msra.mxu0 %v1902
    %1931 = vmatprep.subr.mxu0 0.0
    %1932 = vmatpush1.msra.mxu0 %v1903
    %1933 = vmatprep.subr.mxu0 0.0
    %1934 = vmatpush1.msra.mxu0 %v1904
    %1935 = vmatprep.subr.mxu0 0.0
    %1936 = vmatpush1.msra.mxu0 %v1905
    %1937 = vmatprep.subr.mxu0 0.0
    %1938 = vmatpush1.msra.mxu0 %v1906
    %1939 = vmatprep.subr.mxu0 0.0
    %1940 = vmatpush1.msra.mxu0 0.0
    %1941 = vmatprep.subr.mxu0 0.0
    %1942 = vmatpush1.msra.mxu0 0.0
    %1943 = vmatprep.subr.mxu0 0.0
    %1944 = vmatpush1.msra.mxu0 0.0
    %1945 = vmatprep.subr.mxu0 0.0
    %1946 = vmatpush1.msra.mxu0 0.0
    %1947 = vmatprep.subr.mxu0 0.0
    %1948 = vmatpush1.msra.mxu0 0.0
    %1949 = vmatprep.subr.mxu0 0.0
    %1950 = vmatpush1.msra.mxu0 0.0
    %1951 = vmatprep.subr.mxu0 0.0
    %1952 = vmatpush1.msra.mxu0 0.0
    %1953 = vmatprep.subr.mxu0 0.0
    %1954 = vmatpush1.msra.mxu0 0.0
    %1955 = vmatprep.subr.mxu0 0.0
    %1956 = vmatpush1.msra.mxu0 0.0
    %1957 = vmatprep.subr.mxu0 0.0
    %1958 = vmatpush1.msra.mxu0 0.0
    %1959 = vmatprep.subr.mxu0 0.0
    %1960 = vmatpush1.msra.mxu0 0.0
    %1961 = vmatprep.subr.mxu0 0.0
    %1962 = vmatpush1.msra.mxu0 0.0
    %1963 = vmatprep.subr.mxu0 0.0
    %1964 = vmatpush1.msra.mxu0 0.0
    %1965 = vmatprep.subr.mxu0 0.0
    %1966 = vmatpush1.msra.mxu0 0.0
    %1967 = vmatprep.subr.mxu0 0.0
    %1968 = vmatpush1.msra.mxu0 0.0
    %1969 = vmatprep.subr.mxu0 0.0
    %1970 = vmatpush1.msra.mxu0 0.0
    %1971 = vmatprep.mubr.f32.mxu0 0.0
    %1972 = vmatmul.mubr.f32.gmra.mrb[0].mxu0 %v1889
    %v1973 = vpop.f32.mrb[0].mxu0
    %v1974 = vadd.f32 0.0, %v1973
    %v1975 = vpop.f32.mrb[0].mxu0
    %1976 = vmatprep.mubr.f32.mxu0 0.0
    %1977 = vmatmul.mubr.f32.gmra.mrb[0].mxu0 %v1890
    %v1978 = vpop.f32.mrb[0].mxu0
    %v1979 = vadd.f32 0.0, %v1978
    %v1980 = vpop.f32.mrb[0].mxu0
    %1981 = vdwg.mxu0
    %v1982 = vadd.f32 %v1741, %v1974
    %v1983 = vadd.f32 %v1742, %v1979
    %v1984 = vlaneseq
    %v1985 = vshrl.u32 %v1984, 7
    %v1986 = vsub.s32 0, %v1985
    %v1987 = vrot.slane %v135, %v1986
    %v1988 = vadd.f32 %v1982, %v1987
    %v1989 = vadd.f32 %v1983, %v1987
    %s1990 = scalar_lea.vmem %s3, 16
    %v1991 = vld [vmem:[%s1990] sm:$0xff]
    %v1992 = vld [vmem:[%s1990 + $0x8] sm:$0x1]
    %v1993 = vsel %vm136, %v1988, 0.0
    %1994 = vadd.xlane.f32.xlu0 %v1993
    %v1995 = vpop.xlane.xlu0 %1994
    %v1996 = vsel %vm136, %v1989, 0.0
    %1997 = vadd.xlane.f32.xlu0 %v1996
    %v1998 = vpop.xlane.xlu0 %1997
    %v1999 = vmul.f32 %v1995, %v143
    %v2000 = vmul.f32 %v1998, %v143
    %v2001 = vsub.f32 %v1988, %v1999
    %v2002 = vsub.f32 %v1989, %v2000
    %v2003 = vmul.f32 %v2001, %v2001
    %v2004 = vmul.f32 %v2002, %v2002
    %v2005 = vsel %vm136, %v2003, 0.0
    %2006 = vadd.xlane.f32.xlu0 %v2005
    %v2007 = vpop.xlane.xlu0 %2006
    %v2008 = vsel %vm136, %v2004, 0.0
    %2009 = vadd.xlane.f32.xlu0 %v2008
    %v2010 = vpop.xlane.xlu0 %2009
    %v2011 = vmul.f32 %v2007, %v143
    %v2012 = vmul.f32 %v2010, %v143
    %v2013 = vadd.f32 %v2011, 1e-05
    %v2014 = vadd.f32 %v2012, 1e-05
    %v2015 = vrsqrt.pop %v2013
    %v2016 = vrsqrt.pop %v2014
    %v2017 = vmul.f32 %v2001, %v2015
    %v2018 = vmul.f32 %v2002, %v2016
    %v2019 = vlaneseq
    %v2020 = vshrl.u32 %v2019, 7
    %v2021 = vsub.s32 0, %v2020
    %v2022 = vrot.slane %v1991, %v2021
    %v2023 = vmul.f32 %v2017, %v2022
    %v2024 = vmul.f32 %v2018, %v2022
    %v2025 = vlaneseq
    %v2026 = vshrl.u32 %v2025, 7
    %v2027 = vsub.s32 1, %v2026
    %v2028 = vrot.slane %v1991, %v2027
    %v2029 = vadd.f32 %v2023, %v2028
    %v2030 = vadd.f32 %v2024, %v2028
    %s2031 = scalar_lea.vmem %s4, 32
    %v2032 = vld [vmem:[%s2031] sm:$0xff]
    %v2033 = vld [vmem:[%s2031 + $0x8] sm:$0xff]
    %v2034 = vld [vmem:[%s2031 + $0x10] sm:$0xff]
    %v2035 = vld [vmem:[%s2031 + $0x18] sm:$0xff]
    %v2037 = vsel %vm136, %v2029, 0
    %v2040 = vsel %vm136, %v2030, 0
    %2042 = vmatprep.subr.mxu0 0.0
    %2043 = vmatpush1.msra.mxu0 %v2032
    %2044 = vmatprep.subr.mxu0 0.0
    %2045 = vmatpush1.msra.mxu0 %v2033
    %2046 = vmatprep.subr.mxu0 0.0
    %2047 = vmatpush1.msra.mxu0 %v2034
    %2048 = vmatprep.subr.mxu0 0.0
    %2049 = vmatpush1.msra.mxu0 %v2035
    %2050 = vmatprep.subr.mxu0 0.0
    %2051 = vmatpush1.msra.mxu0 0.0
    %2052 = vmatprep.subr.mxu0 0.0
    %2053 = vmatpush1.msra.mxu0 0.0
    %2054 = vmatprep.subr.mxu0 0.0
    %2055 = vmatpush1.msra.mxu0 0.0
    %2056 = vmatprep.subr.mxu0 0.0
    %2057 = vmatpush1.msra.mxu0 0.0
    %2058 = vmatprep.subr.mxu0 0.0
    %2059 = vmatpush1.msra.mxu0 0.0
    %2060 = vmatprep.subr.mxu0 0.0
    %2061 = vmatpush1.msra.mxu0 0.0
    %2062 = vmatprep.subr.mxu0 0.0
    %2063 = vmatpush1.msra.mxu0 0.0
    %2064 = vmatprep.subr.mxu0 0.0
    %2065 = vmatpush1.msra.mxu0 0.0
    %2066 = vmatprep.subr.mxu0 0.0
    %2067 = vmatpush1.msra.mxu0 0.0
    %2068 = vmatprep.subr.mxu0 0.0
    %2069 = vmatpush1.msra.mxu0 0.0
    %2070 = vmatprep.subr.mxu0 0.0
    %2071 = vmatpush1.msra.mxu0 0.0
    %2072 = vmatprep.subr.mxu0 0.0
    %2073 = vmatpush1.msra.mxu0 0.0
    %2074 = vmatprep.subr.mxu0 0.0
    %2075 = vmatpush1.msra.mxu0 0.0
    %2076 = vmatprep.subr.mxu0 0.0
    %2077 = vmatpush1.msra.mxu0 0.0
    %2078 = vmatprep.subr.mxu0 0.0
    %2079 = vmatpush1.msra.mxu0 0.0
    %2080 = vmatprep.subr.mxu0 0.0
    %2081 = vmatpush1.msra.mxu0 0.0
    %2082 = vmatprep.subr.mxu0 0.0
    %2083 = vmatpush1.msra.mxu0 0.0
    %2084 = vmatprep.subr.mxu0 0.0
    %2085 = vmatpush1.msra.mxu0 0.0
    %2086 = vmatprep.subr.mxu0 0.0
    %2087 = vmatpush1.msra.mxu0 0.0
    %2088 = vmatprep.subr.mxu0 0.0
    %2089 = vmatpush1.msra.mxu0 0.0
    %2090 = vmatprep.subr.mxu0 0.0
    %2091 = vmatpush1.msra.mxu0 0.0
    %2092 = vmatprep.subr.mxu0 0.0
    %2093 = vmatpush1.msra.mxu0 0.0
    %2094 = vmatprep.subr.mxu0 0.0
    %2095 = vmatpush1.msra.mxu0 0.0
    %2096 = vmatprep.subr.mxu0 0.0
    %2097 = vmatpush1.msra.mxu0 0.0
    %2098 = vmatprep.subr.mxu0 0.0
    %2099 = vmatpush1.msra.mxu0 0.0
    %2100 = vmatprep.subr.mxu0 0.0
    %2101 = vmatpush1.msra.mxu0 0.0
    %2102 = vmatprep.subr.mxu0 0.0
    %2103 = vmatpush1.msra.mxu0 0.0
    %2104 = vmatprep.subr.mxu0 0.0
    %2105 = vmatpush1.msra.mxu0 0.0
    %2106 = vmatprep.mubr.f32.mxu0 0.0
    %2107 = vmatmul.mubr.f32.gmra.mrb[0].mxu0 %v2037
    %v2108 = vpop.f32.mrb[0].mxu0
    %v2109 = vadd.f32 0.0, %v2108
    %v2110 = vpop.f32.mrb[0].mxu0
    %2111 = vmatprep.mubr.f32.mxu0 0.0
    %2112 = vmatmul.mubr.f32.gmra.mrb[0].mxu0 %v2040
    %v2113 = vpop.f32.mrb[0].mxu0
    %v2114 = vadd.f32 0.0, %v2113
    %v2115 = vpop.f32.mrb[0].mxu0
    %2116 = vdwg.mxu0
    %v2117 = vlaneseq
    %v2118 = vshrl.u32 %v2117, 7
    %v2119 = vsub.s32 2, %v2118
    %v2120 = vrot.slane %v1991, %v2119
    %v2121 = vadd.f32 %v2109, %v2120
    %v2122 = vadd.f32 %v2114, %v2120
    %v2123 = vlaneseq
    %v2124 = vshrl.u32 %v2123, 7
    %v2125 = vsub.s32 3, %v2124
    %v2126 = vrot.slane %v1991, %v2125
    %2128 = vrot.lane.b32.xlu0 %v2126, 32
    %v2129 = vpop.permute.xlu0 %2128
    %v2131 = vadd.f32 %v2109, %v2129
    %v2132 = vadd.f32 %v2114, %v2129
    %v2133 = vlaneseq
    %v2134 = vshrl.u32 %v2133, 7
    %v2135 = vsub.s32 4, %v2134
    %v2136 = vrot.slane %v1991, %v2135
    %2138 = vrot.lane.b32.xlu0 %v2136, 64
    %v2139 = vpop.permute.xlu0 %2138
    %v2141 = vadd.f32 %v2109, %v2139
    %v2142 = vadd.f32 %v2114, %v2139
    %2144 = vrot.lane.b32.xlu0 %v2131, 96
    %v2145 = vpop.permute.xlu0 %2144
    %v2147 = vsel %vm290, %v2121, 0
    %v2149 = vsel %vm290, %v2145, 0
    %2151 = vmatprep.subr.mxu0 0.0
    %2152 = vmatpush1.xpose.msra.mxu0 %v2149
    %2153 = vmatprep.subr.mxu0 0.0
    %2154 = vmatpush1.xpose.msra.mxu0 0.0
    %2155 = vmatprep.subr.mxu0 0.0
    %2156 = vmatpush1.xpose.msra.mxu0 0.0
    %2157 = vmatprep.subr.mxu0 0.0
    %2158 = vmatpush1.xpose.msra.mxu0 0.0
    %2159 = vmatprep.subr.mxu0 0.0
    %2160 = vmatpush1.xpose.msra.mxu0 0.0
    %2161 = vmatprep.subr.mxu0 0.0
    %2162 = vmatpush1.xpose.msra.mxu0 0.0
    %2163 = vmatprep.subr.mxu0 0.0
    %2164 = vmatpush1.xpose.msra.mxu0 0.0
    %2165 = vmatprep.subr.mxu0 0.0
    %2166 = vmatpush1.xpose.msra.mxu0 0.0
    %2167 = vmatprep.subr.mxu0 0.0
    %2168 = vmatpush1.xpose.msra.mxu0 0.0
    %2169 = vmatprep.subr.mxu0 0.0
    %2170 = vmatpush1.xpose.msra.mxu0 0.0
    %2171 = vmatprep.subr.mxu0 0.0
    %2172 = vmatpush1.xpose.msra.mxu0 0.0
    %2173 = vmatprep.subr.mxu0 0.0
    %2174 = vmatpush1.xpose.msra.mxu0 0.0
    %2175 = vmatprep.subr.mxu0 0.0
    %2176 = vmatpush1.xpose.msra.mxu0 0.0
    %2177 = vmatprep.subr.mxu0 0.0
    %2178 = vmatpush1.xpose.msra.mxu0 0.0
    %2179 = vmatprep.subr.mxu0 0.0
    %2180 = vmatpush1.xpose.msra.mxu0 0.0
    %2181 = vmatprep.subr.mxu0 0.0
    %2182 = vmatpush1.xpose.msra.mxu0 0.0
    %2183 = vmatprep.subr.mxu0 0.0
    %2184 = vmatpush1.xpose.msra.mxu0 0.0
    %2185 = vmatprep.subr.mxu0 0.0
    %2186 = vmatpush1.xpose.msra.mxu0 0.0
    %2187 = vmatprep.subr.mxu0 0.0
    %2188 = vmatpush1.xpose.msra.mxu0 0.0
    %2189 = vmatprep.subr.mxu0 0.0
    %2190 = vmatpush1.xpose.msra.mxu0 0.0
    %2191 = vmatprep.subr.mxu0 0.0
    %2192 = vmatpush1.xpose.msra.mxu0 0.0
    %2193 = vmatprep.subr.mxu0 0.0
    %2194 = vmatpush1.xpose.msra.mxu0 0.0
    %2195 = vmatprep.subr.mxu0 0.0
    %2196 = vmatpush1.xpose.msra.mxu0 0.0
    %2197 = vmatprep.subr.mxu0 0.0
    %2198 = vmatpush1.xpose.msra.mxu0 0.0
    %2199 = vmatprep.subr.mxu0 0.0
    %2200 = vmatpush1.xpose.msra.mxu0 0.0
    %2201 = vmatprep.subr.mxu0 0.0
    %2202 = vmatpush1.xpose.msra.mxu0 0.0
    %2203 = vmatprep.subr.mxu0 0.0
    %2204 = vmatpush1.xpose.msra.mxu0 0.0
    %2205 = vmatprep.subr.mxu0 0.0
    %2206 = vmatpush1.xpose.msra.mxu0 0.0
    %2207 = vmatprep.subr.mxu0 0.0
    %2208 = vmatpush1.xpose.msra.mxu0 0.0
    %2209 = vmatprep.subr.mxu0 0.0
    %2210 = vmatpush1.xpose.msra.mxu0 0.0
    %2211 = vmatprep.subr.mxu0 0.0
    %2212 = vmatpush1.xpose.msra.mxu0 0.0
    %2213 = vmatprep.subr.mxu0 0.0
    %2214 = vmatpush1.xpose.msra.mxu0 0.0
    %2215 = vmatprep.mubr.f32.mxu0 0.0
    %2216 = vmatmul.mubr.f32.gmra.mrb[0].mxu0 %v2147
    %v2217 = vpop.f32.mrb[0].mxu0
    %v2218 = vadd.f32 0.0, %v2217
    %v2219 = vpop.f32.mrb[0].mxu0
    %2220 = vdwg.mxu0
    %2222 = vrot.lane.b32.xlu0 %v2132, 96
    %v2223 = vpop.permute.xlu0 %2222
    %v2225 = vsel %vm290, %v2122, 0
    %v2227 = vsel %vm290, %v2223, 0
    %2229 = vmatprep.subr.mxu0 0.0
    %2230 = vmatpush1.xpose.msra.mxu0 %v2227
    %2231 = vmatprep.subr.mxu0 0.0
    %2232 = vmatpush1.xpose.msra.mxu0 0.0
    %2233 = vmatprep.subr.mxu0 0.0
    %2234 = vmatpush1.xpose.msra.mxu0 0.0
    %2235 = vmatprep.subr.mxu0 0.0
    %2236 = vmatpush1.xpose.msra.mxu0 0.0
    %2237 = vmatprep.subr.mxu0 0.0
    %2238 = vmatpush1.xpose.msra.mxu0 0.0
    %2239 = vmatprep.subr.mxu0 0.0
    %2240 = vmatpush1.xpose.msra.mxu0 0.0
    %2241 = vmatprep.subr.mxu0 0.0
    %2242 = vmatpush1.xpose.msra.mxu0 0.0
    %2243 = vmatprep.subr.mxu0 0.0
    %2244 = vmatpush1.xpose.msra.mxu0 0.0
    %2245 = vmatprep.subr.mxu0 0.0
    %2246 = vmatpush1.xpose.msra.mxu0 0.0
    %2247 = vmatprep.subr.mxu0 0.0
    %2248 = vmatpush1.xpose.msra.mxu0 0.0
    %2249 = vmatprep.subr.mxu0 0.0
    %2250 = vmatpush1.xpose.msra.mxu0 0.0
    %2251 = vmatprep.subr.mxu0 0.0
    %2252 = vmatpush1.xpose.msra.mxu0 0.0
    %2253 = vmatprep.subr.mxu0 0.0
    %2254 = vmatpush1.xpose.msra.mxu0 0.0
    %2255 = vmatprep.subr.mxu0 0.0
    %2256 = vmatpush1.xpose.msra.mxu0 0.0
    %2257 = vmatprep.subr.mxu0 0.0
    %2258 = vmatpush1.xpose.msra.mxu0 0.0
    %2259 = vmatprep.subr.mxu0 0.0
    %2260 = vmatpush1.xpose.msra.mxu0 0.0
    %2261 = vmatprep.subr.mxu0 0.0
    %2262 = vmatpush1.xpose.msra.mxu0 0.0
    %2263 = vmatprep.subr.mxu0 0.0
    %2264 = vmatpush1.xpose.msra.mxu0 0.0
    %2265 = vmatprep.subr.mxu0 0.0
    %2266 = vmatpush1.xpose.msra.mxu0 0.0
    %2267 = vmatprep.subr.mxu0 0.0
    %2268 = vmatpush1.xpose.msra.mxu0 0.0
    %2269 = vmatprep.subr.mxu0 0.0
    %2270 = vmatpush1.xpose.msra.mxu0 0.0
    %2271 = vmatprep.subr.mxu0 0.0
    %2272 = vmatpush1.xpose.msra.mxu0 0.0
    %2273 = vmatprep.subr.mxu0 0.0
    %2274 = vmatpush1.xpose.msra.mxu0 0.0
    %2275 = vmatprep.subr.mxu0 0.0
    %2276 = vmatpush1.xpose.msra.mxu0 0.0
    %2277 = vmatprep.subr.mxu0 0.0
    %2278 = vmatpush1.xpose.msra.mxu0 0.0
    %2279 = vmatprep.subr.mxu0 0.0
    %2280 = vmatpush1.xpose.msra.mxu0 0.0
    %2281 = vmatprep.subr.mxu0 0.0
    %2282 = vmatpush1.xpose.msra.mxu0 0.0
    %2283 = vmatprep.subr.mxu0 0.0
    %2284 = vmatpush1.xpose.msra.mxu0 0.0
    %2285 = vmatprep.subr.mxu0 0.0
    %2286 = vmatpush1.xpose.msra.mxu0 0.0
    %2287 = vmatprep.subr.mxu0 0.0
    %2288 = vmatpush1.xpose.msra.mxu0 0.0
    %2289 = vmatprep.subr.mxu0 0.0
    %2290 = vmatpush1.xpose.msra.mxu0 0.0
    %2291 = vmatprep.subr.mxu0 0.0
    %2292 = vmatpush1.xpose.msra.mxu0 0.0
    %2293 = vmatprep.mubr.f32.mxu0 0.0
    %2294 = vmatmul.mubr.f32.gmra.mrb[0].mxu0 %v2225
    %v2295 = vpop.f32.mrb[0].mxu0
    %v2296 = vadd.f32 0.0, %v2295
    %v2297 = vpop.f32.mrb[0].mxu0
    %2298 = vdwg.mxu0
    %v2299 = vmul.f32 %v2218, 0.35355338
    %v2300 = vmul.f32 %v2296, 0.35355338
    %v2301 = vsel %vm290, %v2299, -inf
    %2302 = vmax.xlane.f32.xlu0 %v2301
    %v2303 = vpop.xlane.xlu0 %2302
    %v2304 = vsel %vm290, %v2300, -inf
    %2305 = vmax.xlane.f32.xlu0 %v2304
    %v2306 = vpop.xlane.xlu0 %2305
    %v2307 = vsub.f32 %v2299, %v2303
    %v2308 = vsub.f32 %v2300, %v2306
    %v2309 = vmul.f32 %v2307, 1.442695
    %v2310 = vpow.pop %v2309
    %v2311 = vmul.f32 %v2308, 1.442695
    %v2312 = vpow.pop %v2311
    %v2313 = vsel %vm290, %v2310, 0.0
    %2314 = vadd.xlane.f32.xlu0 %v2313
    %v2315 = vpop.xlane.xlu0 %2314
    %v2316 = vsel %vm290, %v2312, 0.0
    %2317 = vadd.xlane.f32.xlu0 %v2316
    %v2318 = vpop.xlane.xlu0 %2317
    %v2319 = vrcp.pop %v2315
    %v2320 = vmul.f32 %v2310, %v2319
    %v2321 = vrcp.pop %v2318
    %v2322 = vmul.f32 %v2312, %v2321
    %2324 = vrot.lane.b32.xlu0 %v2141, 64
    %v2325 = vpop.permute.xlu0 %2324
    %v2328 = vsel %vm290, %v2320, 0
    %2330 = vmatprep.subr.mxu0 0.0
    %2331 = vmatpush1.msra.mxu0 %v2325
    %2332 = vmatprep.subr.mxu0 0.0
    %2333 = vmatpush1.msra.mxu0 0.0
    %2334 = vmatprep.subr.mxu0 0.0
    %2335 = vmatpush1.msra.mxu0 0.0
    %2336 = vmatprep.subr.mxu0 0.0
    %2337 = vmatpush1.msra.mxu0 0.0
    %2338 = vmatprep.subr.mxu0 0.0
    %2339 = vmatpush1.msra.mxu0 0.0
    %2340 = vmatprep.subr.mxu0 0.0
    %2341 = vmatpush1.msra.mxu0 0.0
    %2342 = vmatprep.subr.mxu0 0.0
    %2343 = vmatpush1.msra.mxu0 0.0
    %2344 = vmatprep.subr.mxu0 0.0
    %2345 = vmatpush1.msra.mxu0 0.0
    %2346 = vmatprep.subr.mxu0 0.0
    %2347 = vmatpush1.msra.mxu0 0.0
    %2348 = vmatprep.subr.mxu0 0.0
    %2349 = vmatpush1.msra.mxu0 0.0
    %2350 = vmatprep.subr.mxu0 0.0
    %2351 = vmatpush1.msra.mxu0 0.0
    %2352 = vmatprep.subr.mxu0 0.0
    %2353 = vmatpush1.msra.mxu0 0.0
    %2354 = vmatprep.subr.mxu0 0.0
    %2355 = vmatpush1.msra.mxu0 0.0
    %2356 = vmatprep.subr.mxu0 0.0
    %2357 = vmatpush1.msra.mxu0 0.0
    %2358 = vmatprep.subr.mxu0 0.0
    %2359 = vmatpush1.msra.mxu0 0.0
    %2360 = vmatprep.subr.mxu0 0.0
    %2361 = vmatpush1.msra.mxu0 0.0
    %2362 = vmatprep.subr.mxu0 0.0
    %2363 = vmatpush1.msra.mxu0 0.0
    %2364 = vmatprep.subr.mxu0 0.0
    %2365 = vmatpush1.msra.mxu0 0.0
    %2366 = vmatprep.subr.mxu0 0.0
    %2367 = vmatpush1.msra.mxu0 0.0
    %2368 = vmatprep.subr.mxu0 0.0
    %2369 = vmatpush1.msra.mxu0 0.0
    %2370 = vmatprep.subr.mxu0 0.0
    %2371 = vmatpush1.msra.mxu0 0.0
    %2372 = vmatprep.subr.mxu0 0.0
    %2373 = vmatpush1.msra.mxu0 0.0
    %2374 = vmatprep.subr.mxu0 0.0
    %2375 = vmatpush1.msra.mxu0 0.0
    %2376 = vmatprep.subr.mxu0 0.0
    %2377 = vmatpush1.msra.mxu0 0.0
    %2378 = vmatprep.subr.mxu0 0.0
    %2379 = vmatpush1.msra.mxu0 0.0
    %2380 = vmatprep.subr.mxu0 0.0
    %2381 = vmatpush1.msra.mxu0 0.0
    %2382 = vmatprep.subr.mxu0 0.0
    %2383 = vmatpush1.msra.mxu0 0.0
    %2384 = vmatprep.subr.mxu0 0.0
    %2385 = vmatpush1.msra.mxu0 0.0
    %2386 = vmatprep.subr.mxu0 0.0
    %2387 = vmatpush1.msra.mxu0 0.0
    %2388 = vmatprep.subr.mxu0 0.0
    %2389 = vmatpush1.msra.mxu0 0.0
    %2390 = vmatprep.subr.mxu0 0.0
    %2391 = vmatpush1.msra.mxu0 0.0
    %2392 = vmatprep.subr.mxu0 0.0
    %2393 = vmatpush1.msra.mxu0 0.0
    %2394 = vmatprep.mubr.f32.mxu0 0.0
    %2395 = vmatmul.mubr.f32.gmra.mrb[0].mxu0 %v2328
    %v2396 = vpop.f32.mrb[0].mxu0
    %v2397 = vadd.f32 0.0, %v2396
    %v2398 = vpop.f32.mrb[0].mxu0
    %2399 = vdwg.mxu0
    %2401 = vrot.lane.b32.xlu0 %v2142, 64
    %v2402 = vpop.permute.xlu0 %2401
    %v2405 = vsel %vm290, %v2322, 0
    %2407 = vmatprep.subr.mxu0 0.0
    %2408 = vmatpush1.msra.mxu0 %v2402
    %2409 = vmatprep.subr.mxu0 0.0
    %2410 = vmatpush1.msra.mxu0 0.0
    %2411 = vmatprep.subr.mxu0 0.0
    %2412 = vmatpush1.msra.mxu0 0.0
    %2413 = vmatprep.subr.mxu0 0.0
    %2414 = vmatpush1.msra.mxu0 0.0
    %2415 = vmatprep.subr.mxu0 0.0
    %2416 = vmatpush1.msra.mxu0 0.0
    %2417 = vmatprep.subr.mxu0 0.0
    %2418 = vmatpush1.msra.mxu0 0.0
    %2419 = vmatprep.subr.mxu0 0.0
    %2420 = vmatpush1.msra.mxu0 0.0
    %2421 = vmatprep.subr.mxu0 0.0
    %2422 = vmatpush1.msra.mxu0 0.0
    %2423 = vmatprep.subr.mxu0 0.0
    %2424 = vmatpush1.msra.mxu0 0.0
    %2425 = vmatprep.subr.mxu0 0.0
    %2426 = vmatpush1.msra.mxu0 0.0
    %2427 = vmatprep.subr.mxu0 0.0
    %2428 = vmatpush1.msra.mxu0 0.0
    %2429 = vmatprep.subr.mxu0 0.0
    %2430 = vmatpush1.msra.mxu0 0.0
    %2431 = vmatprep.subr.mxu0 0.0
    %2432 = vmatpush1.msra.mxu0 0.0
    %2433 = vmatprep.subr.mxu0 0.0
    %2434 = vmatpush1.msra.mxu0 0.0
    %2435 = vmatprep.subr.mxu0 0.0
    %2436 = vmatpush1.msra.mxu0 0.0
    %2437 = vmatprep.subr.mxu0 0.0
    %2438 = vmatpush1.msra.mxu0 0.0
    %2439 = vmatprep.subr.mxu0 0.0
    %2440 = vmatpush1.msra.mxu0 0.0
    %2441 = vmatprep.subr.mxu0 0.0
    %2442 = vmatpush1.msra.mxu0 0.0
    %2443 = vmatprep.subr.mxu0 0.0
    %2444 = vmatpush1.msra.mxu0 0.0
    %2445 = vmatprep.subr.mxu0 0.0
    %2446 = vmatpush1.msra.mxu0 0.0
    %2447 = vmatprep.subr.mxu0 0.0
    %2448 = vmatpush1.msra.mxu0 0.0
    %2449 = vmatprep.subr.mxu0 0.0
    %2450 = vmatpush1.msra.mxu0 0.0
    %2451 = vmatprep.subr.mxu0 0.0
    %2452 = vmatpush1.msra.mxu0 0.0
    %2453 = vmatprep.subr.mxu0 0.0
    %2454 = vmatpush1.msra.mxu0 0.0
    %2455 = vmatprep.subr.mxu0 0.0
    %2456 = vmatpush1.msra.mxu0 0.0
    %2457 = vmatprep.subr.mxu0 0.0
    %2458 = vmatpush1.msra.mxu0 0.0
    %2459 = vmatprep.subr.mxu0 0.0
    %2460 = vmatpush1.msra.mxu0 0.0
    %2461 = vmatprep.subr.mxu0 0.0
    %2462 = vmatpush1.msra.mxu0 0.0
    %2463 = vmatprep.subr.mxu0 0.0
    %2464 = vmatpush1.msra.mxu0 0.0
    %2465 = vmatprep.subr.mxu0 0.0
    %2466 = vmatpush1.msra.mxu0 0.0
    %2467 = vmatprep.subr.mxu0 0.0
    %2468 = vmatpush1.msra.mxu0 0.0
    %2469 = vmatprep.subr.mxu0 0.0
    %2470 = vmatpush1.msra.mxu0 0.0
    %2471 = vmatprep.mubr.f32.mxu0 0.0
    %2472 = vmatmul.mubr.f32.gmra.mrb[0].mxu0 %v2405
    %v2473 = vpop.f32.mrb[0].mxu0
    %v2474 = vadd.f32 0.0, %v2473
    %v2475 = vpop.f32.mrb[0].mxu0
    %2476 = vdwg.mxu0
    %2477 = vrot.lane.b32.xlu0 %v2121, 120
    %v2478 = vpop.permute.xlu0 %2477
    %2479 = vrot.lane.b32.xlu0 %v2131, 88
    %v2480 = vpop.permute.xlu0 %2479
    %v2481 = vsel %vm290, %v2478, 0
    %v2483 = vsel %vm290, %v2480, 0
    %2485 = vmatprep.subr.mxu0 0.0
    %2486 = vmatpush1.xpose.msra.mxu0 %v2483
    %2487 = vmatprep.subr.mxu0 0.0
    %2488 = vmatpush1.xpose.msra.mxu0 0.0
    %2489 = vmatprep.subr.mxu0 0.0
    %2490 = vmatpush1.xpose.msra.mxu0 0.0
    %2491 = vmatprep.subr.mxu0 0.0
    %2492 = vmatpush1.xpose.msra.mxu0 0.0
    %2493 = vmatprep.subr.mxu0 0.0
    %2494 = vmatpush1.xpose.msra.mxu0 0.0
    %2495 = vmatprep.subr.mxu0 0.0
    %2496 = vmatpush1.xpose.msra.mxu0 0.0
    %2497 = vmatprep.subr.mxu0 0.0
    %2498 = vmatpush1.xpose.msra.mxu0 0.0
    %2499 = vmatprep.subr.mxu0 0.0
    %2500 = vmatpush1.xpose.msra.mxu0 0.0
    %2501 = vmatprep.subr.mxu0 0.0
    %2502 = vmatpush1.xpose.msra.mxu0 0.0
    %2503 = vmatprep.subr.mxu0 0.0
    %2504 = vmatpush1.xpose.msra.mxu0 0.0
    %2505 = vmatprep.subr.mxu0 0.0
    %2506 = vmatpush1.xpose.msra.mxu0 0.0
    %2507 = vmatprep.subr.mxu0 0.0
    %2508 = vmatpush1.xpose.msra.mxu0 0.0
    %2509 = vmatprep.subr.mxu0 0.0
    %2510 = vmatpush1.xpose.msra.mxu0 0.0
    %2511 = vmatprep.subr.mxu0 0.0
    %2512 = vmatpush1.xpose.msra.mxu0 0.0
    %2513 = vmatprep.subr.mxu0 0.0
    %2514 = vmatpush1.xpose.msra.mxu0 0.0
    %2515 = vmatprep.subr.mxu0 0.0
    %2516 = vmatpush1.xpose.msra.mxu0 0.0
    %2517 = vmatprep.subr.mxu0 0.0
    %2518 = vmatpush1.xpose.msra.mxu0 0.0
    %2519 = vmatprep.subr.mxu0 0.0
    %2520 = vmatpush1.xpose.msra.mxu0 0.0
    %2521 = vmatprep.subr.mxu0 0.0
    %2522 = vmatpush1.xpose.msra.mxu0 0.0
    %2523 = vmatprep.subr.mxu0 0.0
    %2524 = vmatpush1.xpose.msra.mxu0 0.0
    %2525 = vmatprep.subr.mxu0 0.0
    %2526 = vmatpush1.xpose.msra.mxu0 0.0
    %2527 = vmatprep.subr.mxu0 0.0
    %2528 = vmatpush1.xpose.msra.mxu0 0.0
    %2529 = vmatprep.subr.mxu0 0.0
    %2530 = vmatpush1.xpose.msra.mxu0 0.0
    %2531 = vmatprep.subr.mxu0 0.0
    %2532 = vmatpush1.xpose.msra.mxu0 0.0
    %2533 = vmatprep.subr.mxu0 0.0
    %2534 = vmatpush1.xpose.msra.mxu0 0.0
    %2535 = vmatprep.subr.mxu0 0.0
    %2536 = vmatpush1.xpose.msra.mxu0 0.0
    %2537 = vmatprep.subr.mxu0 0.0
    %2538 = vmatpush1.xpose.msra.mxu0 0.0
    %2539 = vmatprep.subr.mxu0 0.0
    %2540 = vmatpush1.xpose.msra.mxu0 0.0
    %2541 = vmatprep.subr.mxu0 0.0
    %2542 = vmatpush1.xpose.msra.mxu0 0.0
    %2543 = vmatprep.subr.mxu0 0.0
    %2544 = vmatpush1.xpose.msra.mxu0 0.0
    %2545 = vmatprep.subr.mxu0 0.0
    %2546 = vmatpush1.xpose.msra.mxu0 0.0
    %2547 = vmatprep.subr.mxu0 0.0
    %2548 = vmatpush1.xpose.msra.mxu0 0.0
    %2549 = vmatprep.mubr.f32.mxu0 0.0
    %2550 = vmatmul.mubr.f32.gmra.mrb[0].mxu0 %v2481
    %v2551 = vpop.f32.mrb[0].mxu0
    %v2552 = vadd.f32 0.0, %v2551
    %v2553 = vpop.f32.mrb[0].mxu0
    %2554 = vdwg.mxu0
    %2555 = vrot.lane.b32.xlu0 %v2122, 120
    %v2556 = vpop.permute.xlu0 %2555
    %2557 = vrot.lane.b32.xlu0 %v2132, 88
    %v2558 = vpop.permute.xlu0 %2557
    %v2559 = vsel %vm290, %v2556, 0
    %v2561 = vsel %vm290, %v2558, 0
    %2563 = vmatprep.subr.mxu0 0.0
    %2564 = vmatpush1.xpose.msra.mxu0 %v2561
    %2565 = vmatprep.subr.mxu0 0.0
    %2566 = vmatpush1.xpose.msra.mxu0 0.0
    %2567 = vmatprep.subr.mxu0 0.0
    %2568 = vmatpush1.xpose.msra.mxu0 0.0
    %2569 = vmatprep.subr.mxu0 0.0
    %2570 = vmatpush1.xpose.msra.mxu0 0.0
    %2571 = vmatprep.subr.mxu0 0.0
    %2572 = vmatpush1.xpose.msra.mxu0 0.0
    %2573 = vmatprep.subr.mxu0 0.0
    %2574 = vmatpush1.xpose.msra.mxu0 0.0
    %2575 = vmatprep.subr.mxu0 0.0
    %2576 = vmatpush1.xpose.msra.mxu0 0.0
    %2577 = vmatprep.subr.mxu0 0.0
    %2578 = vmatpush1.xpose.msra.mxu0 0.0
    %2579 = vmatprep.subr.mxu0 0.0
    %2580 = vmatpush1.xpose.msra.mxu0 0.0
    %2581 = vmatprep.subr.mxu0 0.0
    %2582 = vmatpush1.xpose.msra.mxu0 0.0
    %2583 = vmatprep.subr.mxu0 0.0
    %2584 = vmatpush1.xpose.msra.mxu0 0.0
    %2585 = vmatprep.subr.mxu0 0.0
    %2586 = vmatpush1.xpose.msra.mxu0 0.0
    %2587 = vmatprep.subr.mxu0 0.0
    %2588 = vmatpush1.xpose.msra.mxu0 0.0
    %2589 = vmatprep.subr.mxu0 0.0
    %2590 = vmatpush1.xpose.msra.mxu0 0.0
    %2591 = vmatprep.subr.mxu0 0.0
    %2592 = vmatpush1.xpose.msra.mxu0 0.0
    %2593 = vmatprep.subr.mxu0 0.0
    %2594 = vmatpush1.xpose.msra.mxu0 0.0
    %2595 = vmatprep.subr.mxu0 0.0
    %2596 = vmatpush1.xpose.msra.mxu0 0.0
    %2597 = vmatprep.subr.mxu0 0.0
    %2598 = vmatpush1.xpose.msra.mxu0 0.0
    %2599 = vmatprep.subr.mxu0 0.0
    %2600 = vmatpush1.xpose.msra.mxu0 0.0
    %2601 = vmatprep.subr.mxu0 0.0
    %2602 = vmatpush1.xpose.msra.mxu0 0.0
    %2603 = vmatprep.subr.mxu0 0.0
    %2604 = vmatpush1.xpose.msra.mxu0 0.0
    %2605 = vmatprep.subr.mxu0 0.0
    %2606 = vmatpush1.xpose.msra.mxu0 0.0
    %2607 = vmatprep.subr.mxu0 0.0
    %2608 = vmatpush1.xpose.msra.mxu0 0.0
    %2609 = vmatprep.subr.mxu0 0.0
    %2610 = vmatpush1.xpose.msra.mxu0 0.0
    %2611 = vmatprep.subr.mxu0 0.0
    %2612 = vmatpush1.xpose.msra.mxu0 0.0
    %2613 = vmatprep.subr.mxu0 0.0
    %2614 = vmatpush1.xpose.msra.mxu0 0.0
    %2615 = vmatprep.subr.mxu0 0.0
    %2616 = vmatpush1.xpose.msra.mxu0 0.0
    %2617 = vmatprep.subr.mxu0 0.0
    %2618 = vmatpush1.xpose.msra.mxu0 0.0
    %2619 = vmatprep.subr.mxu0 0.0
    %2620 = vmatpush1.xpose.msra.mxu0 0.0
    %2621 = vmatprep.subr.mxu0 0.0
    %2622 = vmatpush1.xpose.msra.mxu0 0.0
    %2623 = vmatprep.subr.mxu0 0.0
    %2624 = vmatpush1.xpose.msra.mxu0 0.0
    %2625 = vmatprep.subr.mxu0 0.0
    %2626 = vmatpush1.xpose.msra.mxu0 0.0
    %2627 = vmatprep.mubr.f32.mxu0 0.0
    %2628 = vmatmul.mubr.f32.gmra.mrb[0].mxu0 %v2559
    %v2629 = vpop.f32.mrb[0].mxu0
    %v2630 = vadd.f32 0.0, %v2629
    %v2631 = vpop.f32.mrb[0].mxu0
    %2632 = vdwg.mxu0
    %v2633 = vmul.f32 %v2552, 0.35355338
    %v2634 = vmul.f32 %v2630, 0.35355338
    %v2635 = vsel %vm290, %v2633, -inf
    %2636 = vmax.xlane.f32.xlu0 %v2635
    %v2637 = vpop.xlane.xlu0 %2636
    %v2638 = vsel %vm290, %v2634, -inf
    %2639 = vmax.xlane.f32.xlu0 %v2638
    %v2640 = vpop.xlane.xlu0 %2639
    %v2641 = vsub.f32 %v2633, %v2637
    %v2642 = vsub.f32 %v2634, %v2640
    %v2643 = vmul.f32 %v2641, 1.442695
    %v2644 = vpow.pop %v2643
    %v2645 = vmul.f32 %v2642, 1.442695
    %v2646 = vpow.pop %v2645
    %v2647 = vsel %vm290, %v2644, 0.0
    %2648 = vadd.xlane.f32.xlu0 %v2647
    %v2649 = vpop.xlane.xlu0 %2648
    %v2650 = vsel %vm290, %v2646, 0.0
    %2651 = vadd.xlane.f32.xlu0 %v2650
    %v2652 = vpop.xlane.xlu0 %2651
    %v2653 = vrcp.pop %v2649
    %v2654 = vmul.f32 %v2644, %v2653
    %v2655 = vrcp.pop %v2652
    %v2656 = vmul.f32 %v2646, %v2655
    %2657 = vrot.lane.b32.xlu0 %v2141, 56
    %v2658 = vpop.permute.xlu0 %2657
    %v2661 = vsel %vm290, %v2654, 0
    %2663 = vmatprep.subr.mxu0 0.0
    %2664 = vmatpush1.msra.mxu0 %v2658
    %2665 = vmatprep.subr.mxu0 0.0
    %2666 = vmatpush1.msra.mxu0 0.0
    %2667 = vmatprep.subr.mxu0 0.0
    %2668 = vmatpush1.msra.mxu0 0.0
    %2669 = vmatprep.subr.mxu0 0.0
    %2670 = vmatpush1.msra.mxu0 0.0
    %2671 = vmatprep.subr.mxu0 0.0
    %2672 = vmatpush1.msra.mxu0 0.0
    %2673 = vmatprep.subr.mxu0 0.0
    %2674 = vmatpush1.msra.mxu0 0.0
    %2675 = vmatprep.subr.mxu0 0.0
    %2676 = vmatpush1.msra.mxu0 0.0
    %2677 = vmatprep.subr.mxu0 0.0
    %2678 = vmatpush1.msra.mxu0 0.0
    %2679 = vmatprep.subr.mxu0 0.0
    %2680 = vmatpush1.msra.mxu0 0.0
    %2681 = vmatprep.subr.mxu0 0.0
    %2682 = vmatpush1.msra.mxu0 0.0
    %2683 = vmatprep.subr.mxu0 0.0
    %2684 = vmatpush1.msra.mxu0 0.0
    %2685 = vmatprep.subr.mxu0 0.0
    %2686 = vmatpush1.msra.mxu0 0.0
    %2687 = vmatprep.subr.mxu0 0.0
    %2688 = vmatpush1.msra.mxu0 0.0
    %2689 = vmatprep.subr.mxu0 0.0
    %2690 = vmatpush1.msra.mxu0 0.0
    %2691 = vmatprep.subr.mxu0 0.0
    %2692 = vmatpush1.msra.mxu0 0.0
    %2693 = vmatprep.subr.mxu0 0.0
    %2694 = vmatpush1.msra.mxu0 0.0
    %2695 = vmatprep.subr.mxu0 0.0
    %2696 = vmatpush1.msra.mxu0 0.0
    %2697 = vmatprep.subr.mxu0 0.0
    %2698 = vmatpush1.msra.mxu0 0.0
    %2699 = vmatprep.subr.mxu0 0.0
    %2700 = vmatpush1.msra.mxu0 0.0
    %2701 = vmatprep.subr.mxu0 0.0
    %2702 = vmatpush1.msra.mxu0 0.0
    %2703 = vmatprep.subr.mxu0 0.0
    %2704 = vmatpush1.msra.mxu0 0.0
    %2705 = vmatprep.subr.mxu0 0.0
    %2706 = vmatpush1.msra.mxu0 0.0
    %2707 = vmatprep.subr.mxu0 0.0
    %2708 = vmatpush1.msra.mxu0 0.0
    %2709 = vmatprep.subr.mxu0 0.0
    %2710 = vmatpush1.msra.mxu0 0.0
    %2711 = vmatprep.subr.mxu0 0.0
    %2712 = vmatpush1.msra.mxu0 0.0
    %2713 = vmatprep.subr.mxu0 0.0
    %2714 = vmatpush1.msra.mxu0 0.0
    %2715 = vmatprep.subr.mxu0 0.0
    %2716 = vmatpush1.msra.mxu0 0.0
    %2717 = vmatprep.subr.mxu0 0.0
    %2718 = vmatpush1.msra.mxu0 0.0
    %2719 = vmatprep.subr.mxu0 0.0
    %2720 = vmatpush1.msra.mxu0 0.0
    %2721 = vmatprep.subr.mxu0 0.0
    %2722 = vmatpush1.msra.mxu0 0.0
    %2723 = vmatprep.subr.mxu0 0.0
    %2724 = vmatpush1.msra.mxu0 0.0
    %2725 = vmatprep.subr.mxu0 0.0
    %2726 = vmatpush1.msra.mxu0 0.0
    %2727 = vmatprep.mubr.f32.mxu0 0.0
    %2728 = vmatmul.mubr.f32.gmra.mrb[0].mxu0 %v2661
    %v2729 = vpop.f32.mrb[0].mxu0
    %v2730 = vadd.f32 0.0, %v2729
    %v2731 = vpop.f32.mrb[0].mxu0
    %2732 = vdwg.mxu0
    %2733 = vrot.lane.b32.xlu0 %v2142, 56
    %v2734 = vpop.permute.xlu0 %2733
    %v2737 = vsel %vm290, %v2656, 0
    %2739 = vmatprep.subr.mxu0 0.0
    %2740 = vmatpush1.msra.mxu0 %v2734
    %2741 = vmatprep.subr.mxu0 0.0
    %2742 = vmatpush1.msra.mxu0 0.0
    %2743 = vmatprep.subr.mxu0 0.0
    %2744 = vmatpush1.msra.mxu0 0.0
    %2745 = vmatprep.subr.mxu0 0.0
    %2746 = vmatpush1.msra.mxu0 0.0
    %2747 = vmatprep.subr.mxu0 0.0
    %2748 = vmatpush1.msra.mxu0 0.0
    %2749 = vmatprep.subr.mxu0 0.0
    %2750 = vmatpush1.msra.mxu0 0.0
    %2751 = vmatprep.subr.mxu0 0.0
    %2752 = vmatpush1.msra.mxu0 0.0
    %2753 = vmatprep.subr.mxu0 0.0
    %2754 = vmatpush1.msra.mxu0 0.0
    %2755 = vmatprep.subr.mxu0 0.0
    %2756 = vmatpush1.msra.mxu0 0.0
    %2757 = vmatprep.subr.mxu0 0.0
    %2758 = vmatpush1.msra.mxu0 0.0
    %2759 = vmatprep.subr.mxu0 0.0
    %2760 = vmatpush1.msra.mxu0 0.0
    %2761 = vmatprep.subr.mxu0 0.0
    %2762 = vmatpush1.msra.mxu0 0.0
    %2763 = vmatprep.subr.mxu0 0.0
    %2764 = vmatpush1.msra.mxu0 0.0
    %2765 = vmatprep.subr.mxu0 0.0
    %2766 = vmatpush1.msra.mxu0 0.0
    %2767 = vmatprep.subr.mxu0 0.0
    %2768 = vmatpush1.msra.mxu0 0.0
    %2769 = vmatprep.subr.mxu0 0.0
    %2770 = vmatpush1.msra.mxu0 0.0
    %2771 = vmatprep.subr.mxu0 0.0
    %2772 = vmatpush1.msra.mxu0 0.0
    %2773 = vmatprep.subr.mxu0 0.0
    %2774 = vmatpush1.msra.mxu0 0.0
    %2775 = vmatprep.subr.mxu0 0.0
    %2776 = vmatpush1.msra.mxu0 0.0
    %2777 = vmatprep.subr.mxu0 0.0
    %2778 = vmatpush1.msra.mxu0 0.0
    %2779 = vmatprep.subr.mxu0 0.0
    %2780 = vmatpush1.msra.mxu0 0.0
    %2781 = vmatprep.subr.mxu0 0.0
    %2782 = vmatpush1.msra.mxu0 0.0
    %2783 = vmatprep.subr.mxu0 0.0
    %2784 = vmatpush1.msra.mxu0 0.0
    %2785 = vmatprep.subr.mxu0 0.0
    %2786 = vmatpush1.msra.mxu0 0.0
    %2787 = vmatprep.subr.mxu0 0.0
    %2788 = vmatpush1.msra.mxu0 0.0
    %2789 = vmatprep.subr.mxu0 0.0
    %2790 = vmatpush1.msra.mxu0 0.0
    %2791 = vmatprep.subr.mxu0 0.0
    %2792 = vmatpush1.msra.mxu0 0.0
    %2793 = vmatprep.subr.mxu0 0.0
    %2794 = vmatpush1.msra.mxu0 0.0
    %2795 = vmatprep.subr.mxu0 0.0
    %2796 = vmatpush1.msra.mxu0 0.0
    %2797 = vmatprep.subr.mxu0 0.0
    %2798 = vmatpush1.msra.mxu0 0.0
    %2799 = vmatprep.subr.mxu0 0.0
    %2800 = vmatpush1.msra.mxu0 0.0
    %2801 = vmatprep.subr.mxu0 0.0
    %2802 = vmatpush1.msra.mxu0 0.0
    %2803 = vmatprep.mubr.f32.mxu0 0.0
    %2804 = vmatmul.mubr.f32.gmra.mrb[0].mxu0 %v2737
    %v2805 = vpop.f32.mrb[0].mxu0
    %v2806 = vadd.f32 0.0, %v2805
    %v2807 = vpop.f32.mrb[0].mxu0
    %2808 = vdwg.mxu0
    %2809 = vrot.lane.b32.xlu0 %v2121, 112
    %v2810 = vpop.permute.xlu0 %2809
    %2811 = vrot.lane.b32.xlu0 %v2131, 80
    %v2812 = vpop.permute.xlu0 %2811
    %v2813 = vsel %vm290, %v2810, 0
    %v2815 = vsel %vm290, %v2812, 0
    %2817 = vmatprep.subr.mxu0 0.0
    %2818 = vmatpush1.xpose.msra.mxu0 %v2815
    %2819 = vmatprep.subr.mxu0 0.0
    %2820 = vmatpush1.xpose.msra.mxu0 0.0
    %2821 = vmatprep.subr.mxu0 0.0
    %2822 = vmatpush1.xpose.msra.mxu0 0.0
    %2823 = vmatprep.subr.mxu0 0.0
    %2824 = vmatpush1.xpose.msra.mxu0 0.0
    %2825 = vmatprep.subr.mxu0 0.0
    %2826 = vmatpush1.xpose.msra.mxu0 0.0
    %2827 = vmatprep.subr.mxu0 0.0
    %2828 = vmatpush1.xpose.msra.mxu0 0.0
    %2829 = vmatprep.subr.mxu0 0.0
    %2830 = vmatpush1.xpose.msra.mxu0 0.0
    %2831 = vmatprep.subr.mxu0 0.0
    %2832 = vmatpush1.xpose.msra.mxu0 0.0
    %2833 = vmatprep.subr.mxu0 0.0
    %2834 = vmatpush1.xpose.msra.mxu0 0.0
    %2835 = vmatprep.subr.mxu0 0.0
    %2836 = vmatpush1.xpose.msra.mxu0 0.0
    %2837 = vmatprep.subr.mxu0 0.0
    %2838 = vmatpush1.xpose.msra.mxu0 0.0
    %2839 = vmatprep.subr.mxu0 0.0
    %2840 = vmatpush1.xpose.msra.mxu0 0.0
    %2841 = vmatprep.subr.mxu0 0.0
    %2842 = vmatpush1.xpose.msra.mxu0 0.0
    %2843 = vmatprep.subr.mxu0 0.0
    %2844 = vmatpush1.xpose.msra.mxu0 0.0
    %2845 = vmatprep.subr.mxu0 0.0
    %2846 = vmatpush1.xpose.msra.mxu0 0.0
    %2847 = vmatprep.subr.mxu0 0.0
    %2848 = vmatpush1.xpose.msra.mxu0 0.0
    %2849 = vmatprep.subr.mxu0 0.0
    %2850 = vmatpush1.xpose.msra.mxu0 0.0
    %2851 = vmatprep.subr.mxu0 0.0
    %2852 = vmatpush1.xpose.msra.mxu0 0.0
    %2853 = vmatprep.subr.mxu0 0.0
    %2854 = vmatpush1.xpose.msra.mxu0 0.0
    %2855 = vmatprep.subr.mxu0 0.0
    %2856 = vmatpush1.xpose.msra.mxu0 0.0
    %2857 = vmatprep.subr.mxu0 0.0
    %2858 = vmatpush1.xpose.msra.mxu0 0.0
    %2859 = vmatprep.subr.mxu0 0.0
    %2860 = vmatpush1.xpose.msra.mxu0 0.0
    %2861 = vmatprep.subr.mxu0 0.0
    %2862 = vmatpush1.xpose.msra.mxu0 0.0
    %2863 = vmatprep.subr.mxu0 0.0
    %2864 = vmatpush1.xpose.msra.mxu0 0.0
    %2865 = vmatprep.subr.mxu0 0.0
    %2866 = vmatpush1.xpose.msra.mxu0 0.0
    %2867 = vmatprep.subr.mxu0 0.0
    %2868 = vmatpush1.xpose.msra.mxu0 0.0
    %2869 = vmatprep.subr.mxu0 0.0
    %2870 = vmatpush1.xpose.msra.mxu0 0.0
    %2871 = vmatprep.subr.mxu0 0.0
    %2872 = vmatpush1.xpose.msra.mxu0 0.0
    %2873 = vmatprep.subr.mxu0 0.0
    %2874 = vmatpush1.xpose.msra.mxu0 0.0
    %2875 = vmatprep.subr.mxu0 0.0
    %2876 = vmatpush1.xpose.msra.mxu0 0.0
    %2877 = vmatprep.subr.mxu0 0.0
    %2878 = vmatpush1.xpose.msra.mxu0 0.0
    %2879 = vmatprep.subr.mxu0 0.0
    %2880 = vmatpush1.xpose.msra.mxu0 0.0
    %2881 = vmatprep.mubr.f32.mxu0 0.0
    %2882 = vmatmul.mubr.f32.gmra.mrb[0].mxu0 %v2813
    %v2883 = vpop.f32.mrb[0].mxu0
    %v2884 = vadd.f32 0.0, %v2883
    %v2885 = vpop.f32.mrb[0].mxu0
    %2886 = vdwg.mxu0
    %2887 = vrot.lane.b32.xlu0 %v2122, 112
    %v2888 = vpop.permute.xlu0 %2887
    %2889 = vrot.lane.b32.xlu0 %v2132, 80
    %v2890 = vpop.permute.xlu0 %2889
    %v2891 = vsel %vm290, %v2888, 0
    %v2893 = vsel %vm290, %v2890, 0
    %2895 = vmatprep.subr.mxu0 0.0
    %2896 = vmatpush1.xpose.msra.mxu0 %v2893
    %2897 = vmatprep.subr.mxu0 0.0
    %2898 = vmatpush1.xpose.msra.mxu0 0.0
    %2899 = vmatprep.subr.mxu0 0.0
    %2900 = vmatpush1.xpose.msra.mxu0 0.0
    %2901 = vmatprep.subr.mxu0 0.0
    %2902 = vmatpush1.xpose.msra.mxu0 0.0
    %2903 = vmatprep.subr.mxu0 0.0
    %2904 = vmatpush1.xpose.msra.mxu0 0.0
    %2905 = vmatprep.subr.mxu0 0.0
    %2906 = vmatpush1.xpose.msra.mxu0 0.0
    %2907 = vmatprep.subr.mxu0 0.0
    %2908 = vmatpush1.xpose.msra.mxu0 0.0
    %2909 = vmatprep.subr.mxu0 0.0
    %2910 = vmatpush1.xpose.msra.mxu0 0.0
    %2911 = vmatprep.subr.mxu0 0.0
    %2912 = vmatpush1.xpose.msra.mxu0 0.0
    %2913 = vmatprep.subr.mxu0 0.0
    %2914 = vmatpush1.xpose.msra.mxu0 0.0
    %2915 = vmatprep.subr.mxu0 0.0
    %2916 = vmatpush1.xpose.msra.mxu0 0.0
    %2917 = vmatprep.subr.mxu0 0.0
    %2918 = vmatpush1.xpose.msra.mxu0 0.0
    %2919 = vmatprep.subr.mxu0 0.0
    %2920 = vmatpush1.xpose.msra.mxu0 0.0
    %2921 = vmatprep.subr.mxu0 0.0
    %2922 = vmatpush1.xpose.msra.mxu0 0.0
    %2923 = vmatprep.subr.mxu0 0.0
    %2924 = vmatpush1.xpose.msra.mxu0 0.0
    %2925 = vmatprep.subr.mxu0 0.0
    %2926 = vmatpush1.xpose.msra.mxu0 0.0
    %2927 = vmatprep.subr.mxu0 0.0
    %2928 = vmatpush1.xpose.msra.mxu0 0.0
    %2929 = vmatprep.subr.mxu0 0.0
    %2930 = vmatpush1.xpose.msra.mxu0 0.0
    %2931 = vmatprep.subr.mxu0 0.0
    %2932 = vmatpush1.xpose.msra.mxu0 0.0
    %2933 = vmatprep.subr.mxu0 0.0
    %2934 = vmatpush1.xpose.msra.mxu0 0.0
    %2935 = vmatprep.subr.mxu0 0.0
    %2936 = vmatpush1.xpose.msra.mxu0 0.0
    %2937 = vmatprep.subr.mxu0 0.0
    %2938 = vmatpush1.xpose.msra.mxu0 0.0
    %2939 = vmatprep.subr.mxu0 0.0
    %2940 = vmatpush1.xpose.msra.mxu0 0.0
    %2941 = vmatprep.subr.mxu0 0.0
    %2942 = vmatpush1.xpose.msra.mxu0 0.0
    %2943 = vmatprep.subr.mxu0 0.0
    %2944 = vmatpush1.xpose.msra.mxu0 0.0
    %2945 = vmatprep.subr.mxu0 0.0
    %2946 = vmatpush1.xpose.msra.mxu0 0.0
    %2947 = vmatprep.subr.mxu0 0.0
    %2948 = vmatpush1.xpose.msra.mxu0 0.0
    %2949 = vmatprep.subr.mxu0 0.0
    %2950 = vmatpush1.xpose.msra.mxu0 0.0
    %2951 = vmatprep.subr.mxu0 0.0
    %2952 = vmatpush1.xpose.msra.mxu0 0.0
    %2953 = vmatprep.subr.mxu0 0.0
    %2954 = vmatpush1.xpose.msra.mxu0 0.0
    %2955 = vmatprep.subr.mxu0 0.0
    %2956 = vmatpush1.xpose.msra.mxu0 0.0
    %2957 = vmatprep.subr.mxu0 0.0
    %2958 = vmatpush1.xpose.msra.mxu0 0.0
    %2959 = vmatprep.mubr.f32.mxu0 0.0
    %2960 = vmatmul.mubr.f32.gmra.mrb[0].mxu0 %v2891
    %v2961 = vpop.f32.mrb[0].mxu0
    %v2962 = vadd.f32 0.0, %v2961
    %v2963 = vpop.f32.mrb[0].mxu0
    %2964 = vdwg.mxu0
    %v2965 = vmul.f32 %v2884, 0.35355338
    %v2966 = vmul.f32 %v2962, 0.35355338
    %v2967 = vsel %vm290, %v2965, -inf
    %2968 = vmax.xlane.f32.xlu0 %v2967
    %v2969 = vpop.xlane.xlu0 %2968
    %v2970 = vsel %vm290, %v2966, -inf
    %2971 = vmax.xlane.f32.xlu0 %v2970
    %v2972 = vpop.xlane.xlu0 %2971
    %v2973 = vsub.f32 %v2965, %v2969
    %v2974 = vsub.f32 %v2966, %v2972
    %v2975 = vmul.f32 %v2973, 1.442695
    %v2976 = vpow.pop %v2975
    %v2977 = vmul.f32 %v2974, 1.442695
    %v2978 = vpow.pop %v2977
    %v2979 = vsel %vm290, %v2976, 0.0
    %2980 = vadd.xlane.f32.xlu0 %v2979
    %v2981 = vpop.xlane.xlu0 %2980
    %v2982 = vsel %vm290, %v2978, 0.0
    %2983 = vadd.xlane.f32.xlu0 %v2982
    %v2984 = vpop.xlane.xlu0 %2983
    %v2985 = vrcp.pop %v2981
    %v2986 = vmul.f32 %v2976, %v2985
    %v2987 = vrcp.pop %v2984
    %v2988 = vmul.f32 %v2978, %v2987
    %2989 = vrot.lane.b32.xlu0 %v2141, 48
    %v2990 = vpop.permute.xlu0 %2989
    %v2993 = vsel %vm290, %v2986, 0
    %2995 = vmatprep.subr.mxu0 0.0
    %2996 = vmatpush1.msra.mxu0 %v2990
    %2997 = vmatprep.subr.mxu0 0.0
    %2998 = vmatpush1.msra.mxu0 0.0
    %2999 = vmatprep.subr.mxu0 0.0
    %3000 = vmatpush1.msra.mxu0 0.0
    %3001 = vmatprep.subr.mxu0 0.0
    %3002 = vmatpush1.msra.mxu0 0.0
    %3003 = vmatprep.subr.mxu0 0.0
    %3004 = vmatpush1.msra.mxu0 0.0
    %3005 = vmatprep.subr.mxu0 0.0
    %3006 = vmatpush1.msra.mxu0 0.0
    %3007 = vmatprep.subr.mxu0 0.0
    %3008 = vmatpush1.msra.mxu0 0.0
    %3009 = vmatprep.subr.mxu0 0.0
    %3010 = vmatpush1.msra.mxu0 0.0
    %3011 = vmatprep.subr.mxu0 0.0
    %3012 = vmatpush1.msra.mxu0 0.0
    %3013 = vmatprep.subr.mxu0 0.0
    %3014 = vmatpush1.msra.mxu0 0.0
    %3015 = vmatprep.subr.mxu0 0.0
    %3016 = vmatpush1.msra.mxu0 0.0
    %3017 = vmatprep.subr.mxu0 0.0
    %3018 = vmatpush1.msra.mxu0 0.0
    %3019 = vmatprep.subr.mxu0 0.0
    %3020 = vmatpush1.msra.mxu0 0.0
    %3021 = vmatprep.subr.mxu0 0.0
    %3022 = vmatpush1.msra.mxu0 0.0
    %3023 = vmatprep.subr.mxu0 0.0
    %3024 = vmatpush1.msra.mxu0 0.0
    %3025 = vmatprep.subr.mxu0 0.0
    %3026 = vmatpush1.msra.mxu0 0.0
    %3027 = vmatprep.subr.mxu0 0.0
    %3028 = vmatpush1.msra.mxu0 0.0
    %3029 = vmatprep.subr.mxu0 0.0
    %3030 = vmatpush1.msra.mxu0 0.0
    %3031 = vmatprep.subr.mxu0 0.0
    %3032 = vmatpush1.msra.mxu0 0.0
    %3033 = vmatprep.subr.mxu0 0.0
    %3034 = vmatpush1.msra.mxu0 0.0
    %3035 = vmatprep.subr.mxu0 0.0
    %3036 = vmatpush1.msra.mxu0 0.0
    %3037 = vmatprep.subr.mxu0 0.0
    %3038 = vmatpush1.msra.mxu0 0.0
    %3039 = vmatprep.subr.mxu0 0.0
    %3040 = vmatpush1.msra.mxu0 0.0
    %3041 = vmatprep.subr.mxu0 0.0
    %3042 = vmatpush1.msra.mxu0 0.0
    %3043 = vmatprep.subr.mxu0 0.0
    %3044 = vmatpush1.msra.mxu0 0.0
    %3045 = vmatprep.subr.mxu0 0.0
    %3046 = vmatpush1.msra.mxu0 0.0
    %3047 = vmatprep.subr.mxu0 0.0
    %3048 = vmatpush1.msra.mxu0 0.0
    %3049 = vmatprep.subr.mxu0 0.0
    %3050 = vmatpush1.msra.mxu0 0.0
    %3051 = vmatprep.subr.mxu0 0.0
    %3052 = vmatpush1.msra.mxu0 0.0
    %3053 = vmatprep.subr.mxu0 0.0
    %3054 = vmatpush1.msra.mxu0 0.0
    %3055 = vmatprep.subr.mxu0 0.0
    %3056 = vmatpush1.msra.mxu0 0.0
    %3057 = vmatprep.subr.mxu0 0.0
    %3058 = vmatpush1.msra.mxu0 0.0
    %3059 = vmatprep.mubr.f32.mxu0 0.0
    %3060 = vmatmul.mubr.f32.gmra.mrb[0].mxu0 %v2993
    %v3061 = vpop.f32.mrb[0].mxu0
    %v3062 = vadd.f32 0.0, %v3061
    %v3063 = vpop.f32.mrb[0].mxu0
    %3064 = vdwg.mxu0
    %3065 = vrot.lane.b32.xlu0 %v2142, 48
    %v3066 = vpop.permute.xlu0 %3065
    %v3069 = vsel %vm290, %v2988, 0
    %3071 = vmatprep.subr.mxu0 0.0
    %3072 = vmatpush1.msra.mxu0 %v3066
    %3073 = vmatprep.subr.mxu0 0.0
    %3074 = vmatpush1.msra.mxu0 0.0
    %3075 = vmatprep.subr.mxu0 0.0
    %3076 = vmatpush1.msra.mxu0 0.0
    %3077 = vmatprep.subr.mxu0 0.0
    %3078 = vmatpush1.msra.mxu0 0.0
    %3079 = vmatprep.subr.mxu0 0.0
    %3080 = vmatpush1.msra.mxu0 0.0
    %3081 = vmatprep.subr.mxu0 0.0
    %3082 = vmatpush1.msra.mxu0 0.0
    %3083 = vmatprep.subr.mxu0 0.0
    %3084 = vmatpush1.msra.mxu0 0.0
    %3085 = vmatprep.subr.mxu0 0.0
    %3086 = vmatpush1.msra.mxu0 0.0
    %3087 = vmatprep.subr.mxu0 0.0
    %3088 = vmatpush1.msra.mxu0 0.0
    %3089 = vmatprep.subr.mxu0 0.0
    %3090 = vmatpush1.msra.mxu0 0.0
    %3091 = vmatprep.subr.mxu0 0.0
    %3092 = vmatpush1.msra.mxu0 0.0
    %3093 = vmatprep.subr.mxu0 0.0
    %3094 = vmatpush1.msra.mxu0 0.0
    %3095 = vmatprep.subr.mxu0 0.0
    %3096 = vmatpush1.msra.mxu0 0.0
    %3097 = vmatprep.subr.mxu0 0.0
    %3098 = vmatpush1.msra.mxu0 0.0
    %3099 = vmatprep.subr.mxu0 0.0
    %3100 = vmatpush1.msra.mxu0 0.0
    %3101 = vmatprep.subr.mxu0 0.0
    %3102 = vmatpush1.msra.mxu0 0.0
    %3103 = vmatprep.subr.mxu0 0.0
    %3104 = vmatpush1.msra.mxu0 0.0
    %3105 = vmatprep.subr.mxu0 0.0
    %3106 = vmatpush1.msra.mxu0 0.0
    %3107 = vmatprep.subr.mxu0 0.0
    %3108 = vmatpush1.msra.mxu0 0.0
    %3109 = vmatprep.subr.mxu0 0.0
    %3110 = vmatpush1.msra.mxu0 0.0
    %3111 = vmatprep.subr.mxu0 0.0
    %3112 = vmatpush1.msra.mxu0 0.0
    %3113 = vmatprep.subr.mxu0 0.0
    %3114 = vmatpush1.msra.mxu0 0.0
    %3115 = vmatprep.subr.mxu0 0.0
    %3116 = vmatpush1.msra.mxu0 0.0
    %3117 = vmatprep.subr.mxu0 0.0
    %3118 = vmatpush1.msra.mxu0 0.0
    %3119 = vmatprep.subr.mxu0 0.0
    %3120 = vmatpush1.msra.mxu0 0.0
    %3121 = vmatprep.subr.mxu0 0.0
    %3122 = vmatpush1.msra.mxu0 0.0
    %3123 = vmatprep.subr.mxu0 0.0
    %3124 = vmatpush1.msra.mxu0 0.0
    %3125 = vmatprep.subr.mxu0 0.0
    %3126 = vmatpush1.msra.mxu0 0.0
    %3127 = vmatprep.subr.mxu0 0.0
    %3128 = vmatpush1.msra.mxu0 0.0
    %3129 = vmatprep.subr.mxu0 0.0
    %3130 = vmatpush1.msra.mxu0 0.0
    %3131 = vmatprep.subr.mxu0 0.0
    %3132 = vmatpush1.msra.mxu0 0.0
    %3133 = vmatprep.subr.mxu0 0.0
    %3134 = vmatpush1.msra.mxu0 0.0
    %3135 = vmatprep.mubr.f32.mxu0 0.0
    %3136 = vmatmul.mubr.f32.gmra.mrb[0].mxu0 %v3069
    %v3137 = vpop.f32.mrb[0].mxu0
    %v3138 = vadd.f32 0.0, %v3137
    %v3139 = vpop.f32.mrb[0].mxu0
    %3140 = vdwg.mxu0
    %3141 = vrot.lane.b32.xlu0 %v2121, 104
    %v3142 = vpop.permute.xlu0 %3141
    %3143 = vrot.lane.b32.xlu0 %v2131, 72
    %v3144 = vpop.permute.xlu0 %3143
    %v3145 = vsel %vm290, %v3142, 0
    %v3147 = vsel %vm290, %v3144, 0
    %3149 = vmatprep.subr.mxu0 0.0
    %3150 = vmatpush1.xpose.msra.mxu0 %v3147
    %3151 = vmatprep.subr.mxu0 0.0
    %3152 = vmatpush1.xpose.msra.mxu0 0.0
    %3153 = vmatprep.subr.mxu0 0.0
    %3154 = vmatpush1.xpose.msra.mxu0 0.0
    %3155 = vmatprep.subr.mxu0 0.0
    %3156 = vmatpush1.xpose.msra.mxu0 0.0
    %3157 = vmatprep.subr.mxu0 0.0
    %3158 = vmatpush1.xpose.msra.mxu0 0.0
    %3159 = vmatprep.subr.mxu0 0.0
    %3160 = vmatpush1.xpose.msra.mxu0 0.0
    %3161 = vmatprep.subr.mxu0 0.0
    %3162 = vmatpush1.xpose.msra.mxu0 0.0
    %3163 = vmatprep.subr.mxu0 0.0
    %3164 = vmatpush1.xpose.msra.mxu0 0.0
    %3165 = vmatprep.subr.mxu0 0.0
    %3166 = vmatpush1.xpose.msra.mxu0 0.0
    %3167 = vmatprep.subr.mxu0 0.0
    %3168 = vmatpush1.xpose.msra.mxu0 0.0
    %3169 = vmatprep.subr.mxu0 0.0
    %3170 = vmatpush1.xpose.msra.mxu0 0.0
    %3171 = vmatprep.subr.mxu0 0.0
    %3172 = vmatpush1.xpose.msra.mxu0 0.0
    %3173 = vmatprep.subr.mxu0 0.0
    %3174 = vmatpush1.xpose.msra.mxu0 0.0
    %3175 = vmatprep.subr.mxu0 0.0
    %3176 = vmatpush1.xpose.msra.mxu0 0.0
    %3177 = vmatprep.subr.mxu0 0.0
    %3178 = vmatpush1.xpose.msra.mxu0 0.0
    %3179 = vmatprep.subr.mxu0 0.0
    %3180 = vmatpush1.xpose.msra.mxu0 0.0
    %3181 = vmatprep.subr.mxu0 0.0
    %3182 = vmatpush1.xpose.msra.mxu0 0.0
    %3183 = vmatprep.subr.mxu0 0.0
    %3184 = vmatpush1.xpose.msra.mxu0 0.0
    %3185 = vmatprep.subr.mxu0 0.0
    %3186 = vmatpush1.xpose.msra.mxu0 0.0
    %3187 = vmatprep.subr.mxu0 0.0
    %3188 = vmatpush1.xpose.msra.mxu0 0.0
    %3189 = vmatprep.subr.mxu0 0.0
    %3190 = vmatpush1.xpose.msra.mxu0 0.0
    %3191 = vmatprep.subr.mxu0 0.0
    %3192 = vmatpush1.xpose.msra.mxu0 0.0
    %3193 = vmatprep.subr.mxu0 0.0
    %3194 = vmatpush1.xpose.msra.mxu0 0.0
    %3195 = vmatprep.subr.mxu0 0.0
    %3196 = vmatpush1.xpose.msra.mxu0 0.0
    %3197 = vmatprep.subr.mxu0 0.0
    %3198 = vmatpush1.xpose.msra.mxu0 0.0
    %3199 = vmatprep.subr.mxu0 0.0
    %3200 = vmatpush1.xpose.msra.mxu0 0.0
    %3201 = vmatprep.subr.mxu0 0.0
    %3202 = vmatpush1.xpose.msra.mxu0 0.0
    %3203 = vmatprep.subr.mxu0 0.0
    %3204 = vmatpush1.xpose.msra.mxu0 0.0
    %3205 = vmatprep.subr.mxu0 0.0
    %3206 = vmatpush1.xpose.msra.mxu0 0.0
    %3207 = vmatprep.subr.mxu0 0.0
    %3208 = vmatpush1.xpose.msra.mxu0 0.0
    %3209 = vmatprep.subr.mxu0 0.0
    %3210 = vmatpush1.xpose.msra.mxu0 0.0
    %3211 = vmatprep.subr.mxu0 0.0
    %3212 = vmatpush1.xpose.msra.mxu0 0.0
    %3213 = vmatprep.mubr.f32.mxu0 0.0
    %3214 = vmatmul.mubr.f32.gmra.mrb[0].mxu0 %v3145
    %v3215 = vpop.f32.mrb[0].mxu0
    %v3216 = vadd.f32 0.0, %v3215
    %v3217 = vpop.f32.mrb[0].mxu0
    %3218 = vdwg.mxu0
    %3219 = vrot.lane.b32.xlu0 %v2122, 104
    %v3220 = vpop.permute.xlu0 %3219
    %3221 = vrot.lane.b32.xlu0 %v2132, 72
    %v3222 = vpop.permute.xlu0 %3221
    %v3223 = vsel %vm290, %v3220, 0
    %v3225 = vsel %vm290, %v3222, 0
    %3227 = vmatprep.subr.mxu0 0.0
    %3228 = vmatpush1.xpose.msra.mxu0 %v3225
    %3229 = vmatprep.subr.mxu0 0.0
    %3230 = vmatpush1.xpose.msra.mxu0 0.0
    %3231 = vmatprep.subr.mxu0 0.0
    %3232 = vmatpush1.xpose.msra.mxu0 0.0
    %3233 = vmatprep.subr.mxu0 0.0
    %3234 = vmatpush1.xpose.msra.mxu0 0.0
    %3235 = vmatprep.subr.mxu0 0.0
    %3236 = vmatpush1.xpose.msra.mxu0 0.0
    %3237 = vmatprep.subr.mxu0 0.0
    %3238 = vmatpush1.xpose.msra.mxu0 0.0
    %3239 = vmatprep.subr.mxu0 0.0
    %3240 = vmatpush1.xpose.msra.mxu0 0.0
    %3241 = vmatprep.subr.mxu0 0.0
    %3242 = vmatpush1.xpose.msra.mxu0 0.0
    %3243 = vmatprep.subr.mxu0 0.0
    %3244 = vmatpush1.xpose.msra.mxu0 0.0
    %3245 = vmatprep.subr.mxu0 0.0
    %3246 = vmatpush1.xpose.msra.mxu0 0.0
    %3247 = vmatprep.subr.mxu0 0.0
    %3248 = vmatpush1.xpose.msra.mxu0 0.0
    %3249 = vmatprep.subr.mxu0 0.0
    %3250 = vmatpush1.xpose.msra.mxu0 0.0
    %3251 = vmatprep.subr.mxu0 0.0
    %3252 = vmatpush1.xpose.msra.mxu0 0.0
    %3253 = vmatprep.subr.mxu0 0.0
    %3254 = vmatpush1.xpose.msra.mxu0 0.0
    %3255 = vmatprep.subr.mxu0 0.0
    %3256 = vmatpush1.xpose.msra.mxu0 0.0
    %3257 = vmatprep.subr.mxu0 0.0
    %3258 = vmatpush1.xpose.msra.mxu0 0.0
    %3259 = vmatprep.subr.mxu0 0.0
    %3260 = vmatpush1.xpose.msra.mxu0 0.0
    %3261 = vmatprep.subr.mxu0 0.0
    %3262 = vmatpush1.xpose.msra.mxu0 0.0
    %3263 = vmatprep.subr.mxu0 0.0
    %3264 = vmatpush1.xpose.msra.mxu0 0.0
    %3265 = vmatprep.subr.mxu0 0.0
    %3266 = vmatpush1.xpose.msra.mxu0 0.0
    %3267 = vmatprep.subr.mxu0 0.0
    %3268 = vmatpush1.xpose.msra.mxu0 0.0
    %3269 = vmatprep.subr.mxu0 0.0
    %3270 = vmatpush1.xpose.msra.mxu0 0.0
    %3271 = vmatprep.subr.mxu0 0.0
    %3272 = vmatpush1.xpose.msra.mxu0 0.0
    %3273 = vmatprep.subr.mxu0 0.0
    %3274 = vmatpush1.xpose.msra.mxu0 0.0
    %3275 = vmatprep.subr.mxu0 0.0
    %3276 = vmatpush1.xpose.msra.mxu0 0.0
    %3277 = vmatprep.subr.mxu0 0.0
    %3278 = vmatpush1.xpose.msra.mxu0 0.0
    %3279 = vmatprep.subr.mxu0 0.0
    %3280 = vmatpush1.xpose.msra.mxu0 0.0
    %3281 = vmatprep.subr.mxu0 0.0
    %3282 = vmatpush1.xpose.msra.mxu0 0.0
    %3283 = vmatprep.subr.mxu0 0.0
    %3284 = vmatpush1.xpose.msra.mxu0 0.0
    %3285 = vmatprep.subr.mxu0 0.0
    %3286 = vmatpush1.xpose.msra.mxu0 0.0
    %3287 = vmatprep.subr.mxu0 0.0
    %3288 = vmatpush1.xpose.msra.mxu0 0.0
    %3289 = vmatprep.subr.mxu0 0.0
    %3290 = vmatpush1.xpose.msra.mxu0 0.0
    %3291 = vmatprep.mubr.f32.mxu0 0.0
    %3292 = vmatmul.mubr.f32.gmra.mrb[0].mxu0 %v3223
    %v3293 = vpop.f32.mrb[0].mxu0
    %v3294 = vadd.f32 0.0, %v3293
    %v3295 = vpop.f32.mrb[0].mxu0
    %3296 = vdwg.mxu0
    %v3297 = vmul.f32 %v3216, 0.35355338
    %v3298 = vmul.f32 %v3294, 0.35355338
    %v3299 = vsel %vm290, %v3297, -inf
    %3300 = vmax.xlane.f32.xlu0 %v3299
    %v3301 = vpop.xlane.xlu0 %3300
    %v3302 = vsel %vm290, %v3298, -inf
    %3303 = vmax.xlane.f32.xlu0 %v3302
    %v3304 = vpop.xlane.xlu0 %3303
    %v3305 = vsub.f32 %v3297, %v3301
    %v3306 = vsub.f32 %v3298, %v3304
    %v3307 = vmul.f32 %v3305, 1.442695
    %v3308 = vpow.pop %v3307
    %v3309 = vmul.f32 %v3306, 1.442695
    %v3310 = vpow.pop %v3309
    %v3311 = vsel %vm290, %v3308, 0.0
    %3312 = vadd.xlane.f32.xlu0 %v3311
    %v3313 = vpop.xlane.xlu0 %3312
    %v3314 = vsel %vm290, %v3310, 0.0
    %3315 = vadd.xlane.f32.xlu0 %v3314
    %v3316 = vpop.xlane.xlu0 %3315
    %v3317 = vrcp.pop %v3313
    %v3318 = vmul.f32 %v3308, %v3317
    %v3319 = vrcp.pop %v3316
    %v3320 = vmul.f32 %v3310, %v3319
    %3321 = vrot.lane.b32.xlu0 %v2141, 40
    %v3322 = vpop.permute.xlu0 %3321
    %v3325 = vsel %vm290, %v3318, 0
    %3327 = vmatprep.subr.mxu0 0.0
    %3328 = vmatpush1.msra.mxu0 %v3322
    %3329 = vmatprep.subr.mxu0 0.0
    %3330 = vmatpush1.msra.mxu0 0.0
    %3331 = vmatprep.subr.mxu0 0.0
    %3332 = vmatpush1.msra.mxu0 0.0
    %3333 = vmatprep.subr.mxu0 0.0
    %3334 = vmatpush1.msra.mxu0 0.0
    %3335 = vmatprep.subr.mxu0 0.0
    %3336 = vmatpush1.msra.mxu0 0.0
    %3337 = vmatprep.subr.mxu0 0.0
    %3338 = vmatpush1.msra.mxu0 0.0
    %3339 = vmatprep.subr.mxu0 0.0
    %3340 = vmatpush1.msra.mxu0 0.0
    %3341 = vmatprep.subr.mxu0 0.0
    %3342 = vmatpush1.msra.mxu0 0.0
    %3343 = vmatprep.subr.mxu0 0.0
    %3344 = vmatpush1.msra.mxu0 0.0
    %3345 = vmatprep.subr.mxu0 0.0
    %3346 = vmatpush1.msra.mxu0 0.0
    %3347 = vmatprep.subr.mxu0 0.0
    %3348 = vmatpush1.msra.mxu0 0.0
    %3349 = vmatprep.subr.mxu0 0.0
    %3350 = vmatpush1.msra.mxu0 0.0
    %3351 = vmatprep.subr.mxu0 0.0
    %3352 = vmatpush1.msra.mxu0 0.0
    %3353 = vmatprep.subr.mxu0 0.0
    %3354 = vmatpush1.msra.mxu0 0.0
    %3355 = vmatprep.subr.mxu0 0.0
    %3356 = vmatpush1.msra.mxu0 0.0
    %3357 = vmatprep.subr.mxu0 0.0
    %3358 = vmatpush1.msra.mxu0 0.0
    %3359 = vmatprep.subr.mxu0 0.0
    %3360 = vmatpush1.msra.mxu0 0.0
    %3361 = vmatprep.subr.mxu0 0.0
    %3362 = vmatpush1.msra.mxu0 0.0
    %3363 = vmatprep.subr.mxu0 0.0
    %3364 = vmatpush1.msra.mxu0 0.0
    %3365 = vmatprep.subr.mxu0 0.0
    %3366 = vmatpush1.msra.mxu0 0.0
    %3367 = vmatprep.subr.mxu0 0.0
    %3368 = vmatpush1.msra.mxu0 0.0
    %3369 = vmatprep.subr.mxu0 0.0
    %3370 = vmatpush1.msra.mxu0 0.0
    %3371 = vmatprep.subr.mxu0 0.0
    %3372 = vmatpush1.msra.mxu0 0.0
    %3373 = vmatprep.subr.mxu0 0.0
    %3374 = vmatpush1.msra.mxu0 0.0
    %3375 = vmatprep.subr.mxu0 0.0
    %3376 = vmatpush1.msra.mxu0 0.0
    %3377 = vmatprep.subr.mxu0 0.0
    %3378 = vmatpush1.msra.mxu0 0.0
    %3379 = vmatprep.subr.mxu0 0.0
    %3380 = vmatpush1.msra.mxu0 0.0
    %3381 = vmatprep.subr.mxu0 0.0
    %3382 = vmatpush1.msra.mxu0 0.0
    %3383 = vmatprep.subr.mxu0 0.0
    %3384 = vmatpush1.msra.mxu0 0.0
    %3385 = vmatprep.subr.mxu0 0.0
    %3386 = vmatpush1.msra.mxu0 0.0
    %3387 = vmatprep.subr.mxu0 0.0
    %3388 = vmatpush1.msra.mxu0 0.0
    %3389 = vmatprep.subr.mxu0 0.0
    %3390 = vmatpush1.msra.mxu0 0.0
    %3391 = vmatprep.mubr.f32.mxu0 0.0
    %3392 = vmatmul.mubr.f32.gmra.mrb[0].mxu0 %v3325
    %v3393 = vpop.f32.mrb[0].mxu0
    %v3394 = vadd.f32 0.0, %v3393
    %v3395 = vpop.f32.mrb[0].mxu0
    %3396 = vdwg.mxu0
    %3397 = vrot.lane.b32.xlu0 %v2142, 40
    %v3398 = vpop.permute.xlu0 %3397
    %v3401 = vsel %vm290, %v3320, 0
    %3403 = vmatprep.subr.mxu0 0.0
    %3404 = vmatpush1.msra.mxu0 %v3398
    %3405 = vmatprep.subr.mxu0 0.0
    %3406 = vmatpush1.msra.mxu0 0.0
    %3407 = vmatprep.subr.mxu0 0.0
    %3408 = vmatpush1.msra.mxu0 0.0
    %3409 = vmatprep.subr.mxu0 0.0
    %3410 = vmatpush1.msra.mxu0 0.0
    %3411 = vmatprep.subr.mxu0 0.0
    %3412 = vmatpush1.msra.mxu0 0.0
    %3413 = vmatprep.subr.mxu0 0.0
    %3414 = vmatpush1.msra.mxu0 0.0
    %3415 = vmatprep.subr.mxu0 0.0
    %3416 = vmatpush1.msra.mxu0 0.0
    %3417 = vmatprep.subr.mxu0 0.0
    %3418 = vmatpush1.msra.mxu0 0.0
    %3419 = vmatprep.subr.mxu0 0.0
    %3420 = vmatpush1.msra.mxu0 0.0
    %3421 = vmatprep.subr.mxu0 0.0
    %3422 = vmatpush1.msra.mxu0 0.0
    %3423 = vmatprep.subr.mxu0 0.0
    %3424 = vmatpush1.msra.mxu0 0.0
    %3425 = vmatprep.subr.mxu0 0.0
    %3426 = vmatpush1.msra.mxu0 0.0
    %3427 = vmatprep.subr.mxu0 0.0
    %3428 = vmatpush1.msra.mxu0 0.0
    %3429 = vmatprep.subr.mxu0 0.0
    %3430 = vmatpush1.msra.mxu0 0.0
    %3431 = vmatprep.subr.mxu0 0.0
    %3432 = vmatpush1.msra.mxu0 0.0
    %3433 = vmatprep.subr.mxu0 0.0
    %3434 = vmatpush1.msra.mxu0 0.0
    %3435 = vmatprep.subr.mxu0 0.0
    %3436 = vmatpush1.msra.mxu0 0.0
    %3437 = vmatprep.subr.mxu0 0.0
    %3438 = vmatpush1.msra.mxu0 0.0
    %3439 = vmatprep.subr.mxu0 0.0
    %3440 = vmatpush1.msra.mxu0 0.0
    %3441 = vmatprep.subr.mxu0 0.0
    %3442 = vmatpush1.msra.mxu0 0.0
    %3443 = vmatprep.subr.mxu0 0.0
    %3444 = vmatpush1.msra.mxu0 0.0
    %3445 = vmatprep.subr.mxu0 0.0
    %3446 = vmatpush1.msra.mxu0 0.0
    %3447 = vmatprep.subr.mxu0 0.0
    %3448 = vmatpush1.msra.mxu0 0.0
    %3449 = vmatprep.subr.mxu0 0.0
    %3450 = vmatpush1.msra.mxu0 0.0
    %3451 = vmatprep.subr.mxu0 0.0
    %3452 = vmatpush1.msra.mxu0 0.0
    %3453 = vmatprep.subr.mxu0 0.0
    %3454 = vmatpush1.msra.mxu0 0.0
    %3455 = vmatprep.subr.mxu0 0.0
    %3456 = vmatpush1.msra.mxu0 0.0
    %3457 = vmatprep.subr.mxu0 0.0
    %3458 = vmatpush1.msra.mxu0 0.0
    %3459 = vmatprep.subr.mxu0 0.0
    %3460 = vmatpush1.msra.mxu0 0.0
    %3461 = vmatprep.subr.mxu0 0.0
    %3462 = vmatpush1.msra.mxu0 0.0
    %3463 = vmatprep.subr.mxu0 0.0
    %3464 = vmatpush1.msra.mxu0 0.0
    %3465 = vmatprep.subr.mxu0 0.0
    %3466 = vmatpush1.msra.mxu0 0.0
    %3467 = vmatprep.mubr.f32.mxu0 0.0
    %3468 = vmatmul.mubr.f32.gmra.mrb[0].mxu0 %v3401
    %v3469 = vpop.f32.mrb[0].mxu0
    %v3470 = vadd.f32 0.0, %v3469
    %v3471 = vpop.f32.mrb[0].mxu0
    %3472 = vdwg.mxu0
    %3475 = vrot.lane.b32.xlu0 %v2730, 8
    %v3476 = vpop.permute.xlu0 %3475
    %3477 = vrot.lane.b32.xlu0 %v2806, 8
    %v3478 = vpop.permute.xlu0 %3477
    %3483 = vrot.lane.b32.xlu0 %v3062, 16
    %v3484 = vpop.permute.xlu0 %3483
    %3485 = vrot.lane.b32.xlu0 %v3138, 16
    %v3486 = vpop.permute.xlu0 %3485
    %3491 = vrot.lane.b32.xlu0 %v3394, 24
    %v3492 = vpop.permute.xlu0 %3491
    %3493 = vrot.lane.b32.xlu0 %v3470, 24
    %v3494 = vpop.permute.xlu0 %3493
    %v3497 = vsel %vm290, %v2397, %v3476
    %v3498 = vsel %vm290, %v2474, %v3478
    %v3499 = vsel %vm1644, %v3497, %v3484
    %v3500 = vsel %vm1644, %v3498, %v3486
    %v3501 = vsel %vm1647, %v3499, %v3492
    %v3502 = vsel %vm1647, %v3500, %v3494
    %s3503 = scalar_lea.vmem %s5, 32
    %v3504 = vld [vmem:[%s3503] sm:$0xff]
    %v3505 = vld [vmem:[%s3503 + $0x8] sm:$0xff]
    %v3506 = vld [vmem:[%s3503 + $0x10] sm:$0xff]
    %v3507 = vld [vmem:[%s3503 + $0x18] sm:$0xff]
    %v3509 = vsel %vm136, %v3501, 0
    %v3512 = vsel %vm136, %v3502, 0
    %3514 = vmatprep.subr.mxu0 0.0
    %3515 = vmatpush1.msra.mxu0 %v3504
    %3516 = vmatprep.subr.mxu0 0.0
    %3517 = vmatpush1.msra.mxu0 %v3505
    %3518 = vmatprep.subr.mxu0 0.0
    %3519 = vmatpush1.msra.mxu0 %v3506
    %3520 = vmatprep.subr.mxu0 0.0
    %3521 = vmatpush1.msra.mxu0 %v3507
    %3522 = vmatprep.subr.mxu0 0.0
    %3523 = vmatpush1.msra.mxu0 0.0
    %3524 = vmatprep.subr.mxu0 0.0
    %3525 = vmatpush1.msra.mxu0 0.0
    %3526 = vmatprep.subr.mxu0 0.0
    %3527 = vmatpush1.msra.mxu0 0.0
    %3528 = vmatprep.subr.mxu0 0.0
    %3529 = vmatpush1.msra.mxu0 0.0
    %3530 = vmatprep.subr.mxu0 0.0
    %3531 = vmatpush1.msra.mxu0 0.0
    %3532 = vmatprep.subr.mxu0 0.0
    %3533 = vmatpush1.msra.mxu0 0.0
    %3534 = vmatprep.subr.mxu0 0.0
    %3535 = vmatpush1.msra.mxu0 0.0
    %3536 = vmatprep.subr.mxu0 0.0
    %3537 = vmatpush1.msra.mxu0 0.0
    %3538 = vmatprep.subr.mxu0 0.0
    %3539 = vmatpush1.msra.mxu0 0.0
    %3540 = vmatprep.subr.mxu0 0.0
    %3541 = vmatpush1.msra.mxu0 0.0
    %3542 = vmatprep.subr.mxu0 0.0
    %3543 = vmatpush1.msra.mxu0 0.0
    %3544 = vmatprep.subr.mxu0 0.0
    %3545 = vmatpush1.msra.mxu0 0.0
    %3546 = vmatprep.subr.mxu0 0.0
    %3547 = vmatpush1.msra.mxu0 0.0
    %3548 = vmatprep.subr.mxu0 0.0
    %3549 = vmatpush1.msra.mxu0 0.0
    %3550 = vmatprep.subr.mxu0 0.0
    %3551 = vmatpush1.msra.mxu0 0.0
    %3552 = vmatprep.subr.mxu0 0.0
    %3553 = vmatpush1.msra.mxu0 0.0
    %3554 = vmatprep.subr.mxu0 0.0
    %3555 = vmatpush1.msra.mxu0 0.0
    %3556 = vmatprep.subr.mxu0 0.0
    %3557 = vmatpush1.msra.mxu0 0.0
    %3558 = vmatprep.subr.mxu0 0.0
    %3559 = vmatpush1.msra.mxu0 0.0
    %3560 = vmatprep.subr.mxu0 0.0
    %3561 = vmatpush1.msra.mxu0 0.0
    %3562 = vmatprep.subr.mxu0 0.0
    %3563 = vmatpush1.msra.mxu0 0.0
    %3564 = vmatprep.subr.mxu0 0.0
    %3565 = vmatpush1.msra.mxu0 0.0
    %3566 = vmatprep.subr.mxu0 0.0
    %3567 = vmatpush1.msra.mxu0 0.0
    %3568 = vmatprep.subr.mxu0 0.0
    %3569 = vmatpush1.msra.mxu0 0.0
    %3570 = vmatprep.subr.mxu0 0.0
    %3571 = vmatpush1.msra.mxu0 0.0
    %3572 = vmatprep.subr.mxu0 0.0
    %3573 = vmatpush1.msra.mxu0 0.0
    %3574 = vmatprep.subr.mxu0 0.0
    %3575 = vmatpush1.msra.mxu0 0.0
    %3576 = vmatprep.subr.mxu0 0.0
    %3577 = vmatpush1.msra.mxu0 0.0
    %3578 = vmatprep.mubr.f32.mxu0 0.0
    %3579 = vmatmul.mubr.f32.gmra.mrb[0].mxu0 %v3509
    %v3580 = vpop.f32.mrb[0].mxu0
    %v3581 = vadd.f32 0.0, %v3580
    %v3582 = vpop.f32.mrb[0].mxu0
    %3583 = vmatprep.mubr.f32.mxu0 0.0
    %3584 = vmatmul.mubr.f32.gmra.mrb[0].mxu0 %v3512
    %v3585 = vpop.f32.mrb[0].mxu0
    %v3586 = vadd.f32 0.0, %v3585
    %v3587 = vpop.f32.mrb[0].mxu0
    %3588 = vdwg.mxu0
    %v3589 = vadd.f32 %v1988, %v3581
    %v3590 = vadd.f32 %v1989, %v3586
    %v3591 = vlaneseq
    %v3592 = vshrl.u32 %v3591, 7
    %v3593 = vsub.s32 5, %v3592
    %v3594 = vrot.slane %v1991, %v3593
    %v3595 = vadd.f32 %v3589, %v3594
    %v3596 = vadd.f32 %v3590, %v3594
    %v3597 = vsel %vm136, %v3595, 0.0
    %3598 = vadd.xlane.f32.xlu0 %v3597
    %v3599 = vpop.xlane.xlu0 %3598
    %v3600 = vsel %vm136, %v3596, 0.0
    %3601 = vadd.xlane.f32.xlu0 %v3600
    %v3602 = vpop.xlane.xlu0 %3601
    %v3603 = vmul.f32 %v3599, %v143
    %v3604 = vmul.f32 %v3602, %v143
    %v3605 = vsub.f32 %v3595, %v3603
    %v3606 = vsub.f32 %v3596, %v3604
    %v3607 = vmul.f32 %v3605, %v3605
    %v3608 = vmul.f32 %v3606, %v3606
    %v3609 = vsel %vm136, %v3607, 0.0
    %3610 = vadd.xlane.f32.xlu0 %v3609
    %v3611 = vpop.xlane.xlu0 %3610
    %v3612 = vsel %vm136, %v3608, 0.0
    %3613 = vadd.xlane.f32.xlu0 %v3612
    %v3614 = vpop.xlane.xlu0 %3613
    %v3615 = vmul.f32 %v3611, %v143
    %v3616 = vmul.f32 %v3614, %v143
    %v3617 = vadd.f32 %v3615, 1e-05
    %v3618 = vadd.f32 %v3616, 1e-05
    %v3619 = vrsqrt.pop %v3617
    %v3620 = vrsqrt.pop %v3618
    %v3621 = vmul.f32 %v3605, %v3619
    %v3622 = vmul.f32 %v3606, %v3620
    %v3623 = vlaneseq
    %v3624 = vshrl.u32 %v3623, 7
    %v3625 = vsub.s32 6, %v3624
    %v3626 = vrot.slane %v1991, %v3625
    %v3627 = vmul.f32 %v3621, %v3626
    %v3628 = vmul.f32 %v3622, %v3626
    %v3629 = vlaneseq
    %v3630 = vshrl.u32 %v3629, 7
    %v3631 = vsub.s32 7, %v3630
    %v3632 = vrot.slane %v1991, %v3631
    %v3633 = vadd.f32 %v3627, %v3632
    %v3634 = vadd.f32 %v3628, %v3632
    %s3635 = scalar_lea.vmem %s6, 32
    %v3636 = vld [vmem:[%s3635] sm:$0xff]
    %v3637 = vld [vmem:[%s3635 + $0x8] sm:$0xff]
    %v3638 = vld [vmem:[%s3635 + $0x10] sm:$0xff]
    %v3639 = vld [vmem:[%s3635 + $0x18] sm:$0xff]
    %s3640 = scalar_lea.vmem %s7, 1
    %v3641 = vld [vmem:[%s3640] sm:$0x1]
    %v3643 = vlaneseq
    %v3644 = vshrl.u32 %v3643, 7
    %v3645 = vsub.s32 0, %v3644
    %v3646 = vrot.slane %v3641, %v3645
    %v3649 = vsel %vm136, %v3633, 0
    %v3652 = vsel %vm136, %v3634, 0
    %3654 = vmatprep.subr.mxu0 0.0
    %3655 = vmatpush1.msra.mxu0 %v3636
    %3656 = vmatprep.subr.mxu0 0.0
    %3657 = vmatpush1.msra.mxu0 %v3637
    %3658 = vmatprep.subr.mxu0 0.0
    %3659 = vmatpush1.msra.mxu0 %v3638
    %3660 = vmatprep.subr.mxu0 0.0
    %3661 = vmatpush1.msra.mxu0 %v3639
    %3662 = vmatprep.subr.mxu0 0.0
    %3663 = vmatpush1.msra.mxu0 0.0
    %3664 = vmatprep.subr.mxu0 0.0
    %3665 = vmatpush1.msra.mxu0 0.0
    %3666 = vmatprep.subr.mxu0 0.0
    %3667 = vmatpush1.msra.mxu0 0.0
    %3668 = vmatprep.subr.mxu0 0.0
    %3669 = vmatpush1.msra.mxu0 0.0
    %3670 = vmatprep.subr.mxu0 0.0
    %3671 = vmatpush1.msra.mxu0 0.0
    %3672 = vmatprep.subr.mxu0 0.0
    %3673 = vmatpush1.msra.mxu0 0.0
    %3674 = vmatprep.subr.mxu0 0.0
    %3675 = vmatpush1.msra.mxu0 0.0
    %3676 = vmatprep.subr.mxu0 0.0
    %3677 = vmatpush1.msra.mxu0 0.0
    %3678 = vmatprep.subr.mxu0 0.0
    %3679 = vmatpush1.msra.mxu0 0.0
    %3680 = vmatprep.subr.mxu0 0.0
    %3681 = vmatpush1.msra.mxu0 0.0
    %3682 = vmatprep.subr.mxu0 0.0
    %3683 = vmatpush1.msra.mxu0 0.0
    %3684 = vmatprep.subr.mxu0 0.0
    %3685 = vmatpush1.msra.mxu0 0.0
    %3686 = vmatprep.subr.mxu0 0.0
    %3687 = vmatpush1.msra.mxu0 0.0
    %3688 = vmatprep.subr.mxu0 0.0
    %3689 = vmatpush1.msra.mxu0 0.0
    %3690 = vmatprep.subr.mxu0 0.0
    %3691 = vmatpush1.msra.mxu0 0.0
    %3692 = vmatprep.subr.mxu0 0.0
    %3693 = vmatpush1.msra.mxu0 0.0
    %3694 = vmatprep.subr.mxu0 0.0
    %3695 = vmatpush1.msra.mxu0 0.0
    %3696 = vmatprep.subr.mxu0 0.0
    %3697 = vmatpush1.msra.mxu0 0.0
    %3698 = vmatprep.subr.mxu0 0.0
    %3699 = vmatpush1.msra.mxu0 0.0
    %3700 = vmatprep.subr.mxu0 0.0
    %3701 = vmatpush1.msra.mxu0 0.0
    %3702 = vmatprep.subr.mxu0 0.0
    %3703 = vmatpush1.msra.mxu0 0.0
    %3704 = vmatprep.subr.mxu0 0.0
    %3705 = vmatpush1.msra.mxu0 0.0
    %3706 = vmatprep.subr.mxu0 0.0
    %3707 = vmatpush1.msra.mxu0 0.0
    %3708 = vmatprep.subr.mxu0 0.0
    %3709 = vmatpush1.msra.mxu0 0.0
    %3710 = vmatprep.subr.mxu0 0.0
    %3711 = vmatpush1.msra.mxu0 0.0
    %3712 = vmatprep.subr.mxu0 0.0
    %3713 = vmatpush1.msra.mxu0 0.0
    %3714 = vmatprep.subr.mxu0 0.0
    %3715 = vmatpush1.msra.mxu0 0.0
    %3716 = vmatprep.subr.mxu0 0.0
    %3717 = vmatpush1.msra.mxu0 0.0
    %3718 = vmatprep.mubr.f32.mxu0 0.0
    %3719 = vmatmul.mubr.f32.gmra.mrb[0].mxu0 %v3649
    %v3720 = vpop.f32.mrb[0].mxu0
    %v3721 = vadd.f32 %v3646, %v3720
    %v3722 = vpop.f32.mrb[0].mxu0
    %3723 = vmatprep.mubr.f32.mxu0 0.0
    %3724 = vmatmul.mubr.f32.gmra.mrb[0].mxu0 %v3652
    %v3725 = vpop.f32.mrb[0].mxu0
    %v3726 = vadd.f32 %v3646, %v3725
    %v3727 = vpop.f32.mrb[0].mxu0
    %3728 = vdwg.mxu0
    %v3729 = vmul.f32 %v3721, %v3721
    %v3730 = vmul.f32 %v3726, %v3726
    %v3731 = vmul.f32 %v3721, %v3729
    %v3732 = vmul.f32 %v3726, %v3730
    %v3733 = vmul.f32 %v3731, 0.044715
    %v3734 = vmul.f32 %v3732, 0.044715
    %v3735 = vadd.f32 %v3721, %v3733
    %v3736 = vadd.f32 %v3726, %v3734
    %v3737 = vmul.f32 %v3735, 0.7978846
    %v3738 = vmul.f32 %v3736, 0.7978846
    %v3739 = vtanh.pop %v3737
    %v3740 = vtanh.pop %v3738
    %v3741 = vadd.f32 %v3739, 1.0
    %v3742 = vadd.f32 %v3740, 1.0
    %v3743 = vmul.f32 %v3741, 0.5
    %v3744 = vmul.f32 %v3742, 0.5
    %v3745 = vmul.f32 %v3721, %v3743
    %v3746 = vmul.f32 %v3726, %v3744
    %s3747 = scalar_lea.vmem %s8, 128
    %v3748 = vld [vmem:[%s3747] sm:$0xff]
    %v3749 = vld [vmem:[%s3747 + $0x8] sm:$0xff]
    %v3750 = vld [vmem:[%s3747 + $0x10] sm:$0xff]
    %v3751 = vld [vmem:[%s3747 + $0x18] sm:$0xff]
    %v3752 = vld [vmem:[%s3747 + $0x20] sm:$0xff]
    %v3753 = vld [vmem:[%s3747 + $0x28] sm:$0xff]
    %v3754 = vld [vmem:[%s3747 + $0x30] sm:$0xff]
    %v3755 = vld [vmem:[%s3747 + $0x38] sm:$0xff]
    %v3756 = vld [vmem:[%s3747 + $0x40] sm:$0xff]
    %v3757 = vld [vmem:[%s3747 + $0x48] sm:$0xff]
    %v3758 = vld [vmem:[%s3747 + $0x50] sm:$0xff]
    %v3759 = vld [vmem:[%s3747 + $0x58] sm:$0xff]
    %v3760 = vld [vmem:[%s3747 + $0x60] sm:$0xff]
    %v3761 = vld [vmem:[%s3747 + $0x68] sm:$0xff]
    %v3762 = vld [vmem:[%s3747 + $0x70] sm:$0xff]
    %v3763 = vld [vmem:[%s3747 + $0x78] sm:$0xff]
    %3764 = vmatprep.subr.mxu0 0.0
    %3765 = vmatpush1.msra.mxu0 %v3748
    %3766 = vmatprep.subr.mxu0 0.0
    %3767 = vmatpush1.msra.mxu0 %v3749
    %3768 = vmatprep.subr.mxu0 0.0
    %3769 = vmatpush1.msra.mxu0 %v3750
    %3770 = vmatprep.subr.mxu0 0.0
    %3771 = vmatpush1.msra.mxu0 %v3751
    %3772 = vmatprep.subr.mxu0 0.0
    %3773 = vmatpush1.msra.mxu0 %v3752
    %3774 = vmatprep.subr.mxu0 0.0
    %3775 = vmatpush1.msra.mxu0 %v3753
    %3776 = vmatprep.subr.mxu0 0.0
    %3777 = vmatpush1.msra.mxu0 %v3754
    %3778 = vmatprep.subr.mxu0 0.0
    %3779 = vmatpush1.msra.mxu0 %v3755
    %3780 = vmatprep.subr.mxu0 0.0
    %3781 = vmatpush1.msra.mxu0 %v3756
    %3782 = vmatprep.subr.mxu0 0.0
    %3783 = vmatpush1.msra.mxu0 %v3757
    %3784 = vmatprep.subr.mxu0 0.0
    %3785 = vmatpush1.msra.mxu0 %v3758
    %3786 = vmatprep.subr.mxu0 0.0
    %3787 = vmatpush1.msra.mxu0 %v3759
    %3788 = vmatprep.subr.mxu0 0.0
    %3789 = vmatpush1.msra.mxu0 %v3760
    %3790 = vmatprep.subr.mxu0 0.0
    %3791 = vmatpush1.msra.mxu0 %v3761
    %3792 = vmatprep.subr.mxu0 0.0
    %3793 = vmatpush1.msra.mxu0 %v3762
    %3794 = vmatprep.subr.mxu0 0.0
    %3795 = vmatpush1.msra.mxu0 %v3763
    %3796 = vmatprep.subr.mxu0 0.0
    %3797 = vmatpush1.msra.mxu0 0.0
    %3798 = vmatprep.subr.mxu0 0.0
    %3799 = vmatpush1.msra.mxu0 0.0
    %3800 = vmatprep.subr.mxu0 0.0
    %3801 = vmatpush1.msra.mxu0 0.0
    %3802 = vmatprep.subr.mxu0 0.0
    %3803 = vmatpush1.msra.mxu0 0.0
    %3804 = vmatprep.subr.mxu0 0.0
    %3805 = vmatpush1.msra.mxu0 0.0
    %3806 = vmatprep.subr.mxu0 0.0
    %3807 = vmatpush1.msra.mxu0 0.0
    %3808 = vmatprep.subr.mxu0 0.0
    %3809 = vmatpush1.msra.mxu0 0.0
    %3810 = vmatprep.subr.mxu0 0.0
    %3811 = vmatpush1.msra.mxu0 0.0
    %3812 = vmatprep.subr.mxu0 0.0
    %3813 = vmatpush1.msra.mxu0 0.0
    %3814 = vmatprep.subr.mxu0 0.0
    %3815 = vmatpush1.msra.mxu0 0.0
    %3816 = vmatprep.subr.mxu0 0.0
    %3817 = vmatpush1.msra.mxu0 0.0
    %3818 = vmatprep.subr.mxu0 0.0
    %3819 = vmatpush1.msra.mxu0 0.0
    %3820 = vmatprep.subr.mxu0 0.0
    %3821 = vmatpush1.msra.mxu0 0.0
    %3822 = vmatprep.subr.mxu0 0.0
    %3823 = vmatpush1.msra.mxu0 0.0
    %3824 = vmatprep.subr.mxu0 0.0
    %3825 = vmatpush1.msra.mxu0 0.0
    %3826 = vmatprep.subr.mxu0 0.0
    %3827 = vmatpush1.msra.mxu0 0.0
    %3828 = vmatprep.mubr.f32.mxu0 0.0
    %3829 = vmatmul.mubr.f32.gmra.mrb[0].mxu0 %v3745
    %v3830 = vpop.f32.mrb[0].mxu0
    %v3831 = vadd.f32 0.0, %v3830
    %v3832 = vpop.f32.mrb[0].mxu0
    %3833 = vmatprep.mubr.f32.mxu0 0.0
    %3834 = vmatmul.mubr.f32.gmra.mrb[0].mxu0 %v3746
    %v3835 = vpop.f32.mrb[0].mxu0
    %v3836 = vadd.f32 0.0, %v3835
    %v3837 = vpop.f32.mrb[0].mxu0
    %3838 = vdwg.mxu0
    %v3839 = vadd.f32 %v3595, %v3831
    %v3840 = vadd.f32 %v3596, %v3836
    %v3841 = vlaneseq
    %v3842 = vshrl.u32 %v3841, 7
    %v3843 = vsub.s32 0, %v3842
    %v3844 = vrot.slane %v1992, %v3843
    %v3845 = vadd.f32 %v3839, %v3844
    %v3846 = vadd.f32 %v3840, %v3844
    %v3847 = vld [vmem:[%s9] sm:$0x7]
    %v3848 = vsel %vm136, %v3845, 0.0
    %3849 = vadd.xlane.f32.xlu0 %v3848
    %v3850 = vpop.xlane.xlu0 %3849
    %v3851 = vsel %vm136, %v3846, 0.0
    %3852 = vadd.xlane.f32.xlu0 %v3851
    %v3853 = vpop.xlane.xlu0 %3852
    %v3854 = vmul.f32 %v3850, %v143
    %v3855 = vmul.f32 %v3853, %v143
    %v3856 = vsub.f32 %v3845, %v3854
    %v3857 = vsub.f32 %v3846, %v3855
    %v3858 = vmul.f32 %v3856, %v3856
    %v3859 = vmul.f32 %v3857, %v3857
    %v3860 = vsel %vm136, %v3858, 0.0
    %3861 = vadd.xlane.f32.xlu0 %v3860
    %v3862 = vpop.xlane.xlu0 %3861
    %v3863 = vsel %vm136, %v3859, 0.0
    %3864 = vadd.xlane.f32.xlu0 %v3863
    %v3865 = vpop.xlane.xlu0 %3864
    %v3866 = vmul.f32 %v3862, %v143
    %v3867 = vmul.f32 %v3865, %v143
    %v3868 = vadd.f32 %v3866, 1e-05
    %v3869 = vadd.f32 %v3867, 1e-05
    %v3870 = vrsqrt.pop %v3868
    %v3871 = vrsqrt.pop %v3869
    %v3872 = vmul.f32 %v3856, %v3870
    %v3873 = vmul.f32 %v3857, %v3871
    %v3874 = vlaneseq
    %v3875 = vshrl.u32 %v3874, 7
    %v3876 = vsub.s32 0, %v3875
    %v3877 = vrot.slane %v3847, %v3876
    %v3878 = vmul.f32 %v3872, %v3877
    %v3879 = vmul.f32 %v3873, %v3877
    %v3880 = vlaneseq
    %v3881 = vshrl.u32 %v3880, 7
    %v3882 = vsub.s32 1, %v3881
    %v3883 = vrot.slane %v3847, %v3882
    %v3884 = vadd.f32 %v3878, %v3883
    %v3885 = vadd.f32 %v3879, %v3883
    %v3886 = vlaneseq
    %v3887 = vshrl.u32 %v3886, 7
    %v3888 = vsub.s32 2, %v3887
    %v3889 = vrot.slane %v3847, %v3888
    %v3890 = vmul.f32 %v3884, %v3889
    %v3891 = vmul.f32 %v3885, %v3889
    %v3892 = vsel %vm136, %v3890, 0.0
    %3893 = vadd.xlane.f32.xlu0 %v3892
    %v3894 = vpop.xlane.xlu0 %3893
    %v3895 = vsel %vm136, %v3891, 0.0
    %3896 = vadd.xlane.f32.xlu0 %v3895
    %v3897 = vpop.xlane.xlu0 %3896
    %v3898 = vld [vmem:[#allocation2] sm:$0x1]
    %v3900 = vlaneseq
    %v3901 = vshrl.u32 %v3900, 7
    %v3902 = vsub.s32 0, %v3901
    %v3903 = vrot.slane %v3898, %v3902
    %v3905 = vadd.f32 %v3894, %v3903
    %v3906 = vadd.f32 %v3897, %v3903
    %vm3907 = vcmask 7168
    %v3908 = vsel %vm3907, %v3905, -inf
    %v3909 = vrot.slane %v3908, 4
    %v3910 = vmax.f32 %v3908, %v3909
    %v3911 = vrot.slane %v3910, 2
    %v3912 = vmax.f32 %v3910, %v3911
    %v3913 = vrot.slane %v3912, 1
    %v3914 = vmax.f32 %v3912, %v3913
    %v3915 = vsel %vm3907, %v3906, -inf
    %v3916 = vrot.slane %v3915, 4
    %v3917 = vmax.f32 %v3915, %v3916
    %v3918 = vrot.slane %v3917, 2
    %v3919 = vmax.f32 %v3917, %v3918
    %v3920 = vrot.slane %v3919, 1
    %v3921 = vmax.f32 %v3919, %v3920
    %v3922 = vsub.f32 %v3905, %v3914
    %v3923 = vsub.f32 %v3906, %v3921
    %v3924 = vmul.f32 %v3922, 1.442695
    %v3925 = vpow.pop %v3924
    %v3926 = vmul.f32 %v3923, 1.442695
    %v3927 = vpow.pop %v3926
    %v3928 = vsel %vm3907, %v3925, 0.0
    %v3929 = vrot.slane %v3928, 4
    %v3930 = vadd.f32 %v3928, %v3929
    %v3931 = vrot.slane %v3930, 2
    %v3932 = vadd.f32 %v3930, %v3931
    %v3933 = vrot.slane %v3932, 1
    %v3934 = vadd.f32 %v3932, %v3933
    %v3935 = vsel %vm3907, %v3927, 0.0
    %v3936 = vrot.slane %v3935, 4
    %v3937 = vadd.f32 %v3935, %v3936
    %v3938 = vrot.slane %v3937, 2
    %v3939 = vadd.f32 %v3937, %v3938
    %v3940 = vrot.slane %v3939, 1
    %v3941 = vadd.f32 %v3939, %v3940
    %v3942 = vrcp.pop %v3934
    %v3943 = vmul.f32 %v3925, %v3942
    %v3944 = vrcp.pop %v3941
    %v3945 = vmul.f32 %v3927, %v3944
    %3947 = vset.pattern.permute.xlu0 0
    %3948 = vperm.xlu0 %3947, %v3943
    %v3949 = vpop.permute.xlu0 %3948
    %3952 = vset.pattern.permute.xlu0 0
    %3953 = vperm.xlu0 %3952, %v3945
    %v3954 = vpop.permute.xlu0 %3953
    %v3956 = vmul.f32 %v3949, %v3884
    %v3957 = vmul.f32 %v3954, %v3885
    %v3958 = vsel %vm136, %v3956, 0.0
    %v3959 = vrot.slane %v3958, 4
    %v3960 = vadd.f32 %v3958, %v3959
    %v3961 = vrot.slane %v3960, 2
    %v3962 = vadd.f32 %v3960, %v3961
    %v3963 = vrot.slane %v3962, 1
    %v3964 = vadd.f32 %v3962, %v3963
    %v3965 = vsel %vm136, %v3957, 0.0
    %v3966 = vrot.slane %v3965, 4
    %v3967 = vadd.f32 %v3965, %v3966
    %v3968 = vrot.slane %v3967, 2
    %v3969 = vadd.f32 %v3967, %v3968
    %v3970 = vrot.slane %v3969, 1
    %v3971 = vadd.f32 %v3969, %v3970
    %v3972 = vld [vmem:[%s11] sm:$0xff]
    %v3973 = vld [vmem:[%s11 + $0x8] sm:$0xff]
    %v3974 = vld [vmem:[%s11 + $0x10] sm:$0xff]
    %v3975 = vld [vmem:[%s11 + $0x18] sm:$0xff]
    %vm3978 = vcmask 1041409
    %v3979 = vsel %vm3978, %v3971, %v3964
    %v3980 = vsel %vm136, %v3979, 0
    %3982 = vmatprep.subr.mxu0 0.0
    %3983 = vmatpush1.msra.mxu0 %v3972
    %3984 = vmatprep.subr.mxu0 0.0
    %3985 = vmatpush1.msra.mxu0 %v3973
    %3986 = vmatprep.subr.mxu0 0.0
    %3987 = vmatpush1.msra.mxu0 %v3974
    %3988 = vmatprep.subr.mxu0 0.0
    %3989 = vmatpush1.msra.mxu0 %v3975
    %3990 = vmatprep.subr.mxu0 0.0
    %3991 = vmatpush1.msra.mxu0 0.0
    %3992 = vmatprep.subr.mxu0 0.0
    %3993 = vmatpush1.msra.mxu0 0.0
    %3994 = vmatprep.subr.mxu0 0.0
    %3995 = vmatpush1.msra.mxu0 0.0
    %3996 = vmatprep.subr.mxu0 0.0
    %3997 = vmatpush1.msra.mxu0 0.0
    %3998 = vmatprep.subr.mxu0 0.0
    %3999 = vmatpush1.msra.mxu0 0.0
    %4000 = vmatprep.subr.mxu0 0.0
    %4001 = vmatpush1.msra.mxu0 0.0
    %4002 = vmatprep.subr.mxu0 0.0
    %4003 = vmatpush1.msra.mxu0 0.0
    %4004 = vmatprep.subr.mxu0 0.0
    %4005 = vmatpush1.msra.mxu0 0.0
    %4006 = vmatprep.subr.mxu0 0.0
    %4007 = vmatpush1.msra.mxu0 0.0
    %4008 = vmatprep.subr.mxu0 0.0
    %4009 = vmatpush1.msra.mxu0 0.0
    %4010 = vmatprep.subr.mxu0 0.0
    %4011 = vmatpush1.msra.mxu0 0.0
    %4012 = vmatprep.subr.mxu0 0.0
    %4013 = vmatpush1.msra.mxu0 0.0
    %4014 = vmatprep.subr.mxu0 0.0
    %4015 = vmatpush1.msra.mxu0 0.0
    %4016 = vmatprep.subr.mxu0 0.0
    %4017 = vmatpush1.msra.mxu0 0.0
    %4018 = vmatprep.subr.mxu0 0.0
    %4019 = vmatpush1.msra.mxu0 0.0
    %4020 = vmatprep.subr.mxu0 0.0
    %4021 = vmatpush1.msra.mxu0 0.0
    %4022 = vmatprep.subr.mxu0 0.0
    %4023 = vmatpush1.msra.mxu0 0.0
    %4024 = vmatprep.subr.mxu0 0.0
    %4025 = vmatpush1.msra.mxu0 0.0
    %4026 = vmatprep.subr.mxu0 0.0
    %4027 = vmatpush1.msra.mxu0 0.0
    %4028 = vmatprep.subr.mxu0 0.0
    %4029 = vmatpush1.msra.mxu0 0.0
    %4030 = vmatprep.subr.mxu0 0.0
    %4031 = vmatpush1.msra.mxu0 0.0
    %4032 = vmatprep.subr.mxu0 0.0
    %4033 = vmatpush1.msra.mxu0 0.0
    %4034 = vmatprep.subr.mxu0 0.0
    %4035 = vmatpush1.msra.mxu0 0.0
    %4036 = vmatprep.subr.mxu0 0.0
    %4037 = vmatpush1.msra.mxu0 0.0
    %4038 = vmatprep.subr.mxu0 0.0
    %4039 = vmatpush1.msra.mxu0 0.0
    %4040 = vmatprep.subr.mxu0 0.0
    %4041 = vmatpush1.msra.mxu0 0.0
    %4042 = vmatprep.subr.mxu0 0.0
    %4043 = vmatpush1.msra.mxu0 0.0
    %4044 = vmatprep.subr.mxu0 0.0
    %4045 = vmatpush1.msra.mxu0 0.0
    %4046 = vmatprep.mubr.f32.mxu0 0.0
    %4047 = vmatmul.mubr.f32.gmra.mrb[0].mxu0 %v3980
    %v4048 = vpop.f32.mrb[0].mxu0
    %v4049 = vadd.f32 0.0, %v4048
    %v4050 = vpop.f32.mrb[0].mxu0
    %4051 = vdwg.mxu0
    %vm4052 = vcmask 58368
    %v4053 = vsel %vm4052, %v4049, -inf
    %4054 = vmax.xlane.f32.xlu0 %v4053
    %v4055 = vpop.xlane.xlu0 %4054
    %v4056 = vsub.f32 %v4049, %v4055
    %v4057 = vmul.f32 %v4056, 1.442695
    %v4058 = vpow.pop %v4057
    %v4059 = vsel %vm4052, %v4058, 0.0
    %4060 = vadd.xlane.f32.xlu0 %v4059
    %v4061 = vpop.xlane.xlu0 %4060
    %v4062 = vlog2.pop %v4061
    %v4063 = vmul.f32 %v4062, 0.6931472
    %v4064 = vadd.f32 %v4063, %v4055
    %v4065 = vsub.f32 %v4049, %v4064
    %4066 = vst.msk [vmem:[#allocation3] sm:$0x3] %vm4052, %v4065
    // Predicated region
    $region50: #{seq_model_forward.1} parent=1 // pred_check
      _
    $region51: #{seq_model_forward.1} parent=1 // pred_check_branch
      %4068 = sbr.rel (0) target = $region53
    $region52: #{seq_model_forward.1} parent=1 // pred_region
      %s4070 = ssub.s32 32, 32
      %4071 = vsyncadd [#allocation4], %s4070
      %s4073 = sshll.u32 [#allocation3], 4
      %s4074 = int_to_ptr.vmem [resolvable:$true] %s4073
      %4076 = dma.vmem_to_hbm [thread:$0]  %s4074, 32, %s12, [#allocation4]
    $region53: #{seq_model_forward.1} parent=1 // pred_fallthru
      _
    // Predicated region
    $region54: #{seq_model_forward.1} parent=1 // pred_check
      _
    $region55: #{seq_model_forward.1} parent=1 // pred_check_branch
      %4078 = sbr.rel (0) target = $region57
    $region56: #{seq_model_forward.1} parent=1 // pred_region
      %4079 = dma.done [#allocation4], 32
    $region57: #{seq_model_forward.1} parent=1 // pred_fallthru
      _
    %4080 = vsyncpa [#allocation4], 1

</llo_original>
